<compile_context>
chip_gen: v7x
topology: tpu7x:2x2x1
jax: 0.10.0
libtpu: 0.0.40
codegen_flags: <defaults>
</compile_context>

<pallas_src>
import functools

import jax
import jax.numpy as jnp
from jax.experimental import pallas as pl
from jax.experimental.pallas import tpu as pltpu


def _convlstm_cell_kernel(comb_ref, cprev_ref, w_ref, b_ref, mask_ref,
                          h_ref, c_ref, *, H, W, pad, hidden):
    """One batch element per grid step.

    comb_ref : (1, L, Ctot)       row-padded, flattened [x ; h_prev], channels-last
                                  L = (H + 2*pad) * W + 2*pad
    cprev_ref: (1, H*W, Ch)
    w_ref    : (k*k, Ctot, 4*Ch)  conv weight, tap-major (tap = dy*k + dx)
    b_ref    : (1, 4*Ch)
    mask_ref : (k, H*W, 1)        horizontal-validity mask per dx tap
    h_ref    : (1, H*W, Ch)       h_next
    c_ref    : (1, H*W, Ch)       c_next
    """
    k = 2 * pad + 1
    HW = H * W

    # k x k conv == sum of k*k shifted matmuls; MXU output is lane-dense (4*hidden).
    acc = jnp.zeros((HW, 4 * hidden), dtype=jnp.float32)
    for dy in range(k):
        for dx in range(k):
            s = dy * W + dx                                        # static shift
            patch = comb_ref[0, s:s + HW, :].astype(jnp.float32)   # (HW, Ctot)
            if dx != pad:
                # zero pixels whose flattened read wrapped across an image row
                patch = patch * mask_ref[dx]
            acc = acc + jnp.dot(patch, w_ref[dy * k + dx],
                                preferred_element_type=jnp.float32)
    gates = acc + b_ref[...]                                       # (HW, 4*hidden)

    def sigmoid(z):  # explicit form: exp on EUP + cheap div
        return 1.0 / (1.0 + jnp.exp(-z))

    i_g = sigmoid(gates[:, 0 * hidden:1 * hidden])
    f_g = sigmoid(gates[:, 1 * hidden:2 * hidden])
    g_g = jnp.tanh(gates[:, 2 * hidden:3 * hidden])
    o_g = sigmoid(gates[:, 3 * hidden:4 * hidden])

    c_prev = cprev_ref[0].astype(jnp.float32)                      # (HW, hidden)
    c_next = f_g * c_prev + i_g * g_g
    h_next = o_g * jnp.tanh(c_next)

    h_ref[0] = h_next.astype(h_ref.dtype)
    c_ref[0] = c_next.astype(c_ref.dtype)


def conv_lstm_cell(x, h_prev, c_prev, weight, bias, *, kernel_size):
    """x:(B,Cin,H,W)  h_prev,c_prev:(B,Ch,H,W)  weight:(4Ch,Cin+Ch,k,k)  bias:(4Ch,)"""
    B, Cin, H, W = x.shape
    Ch = h_prev.shape[1]
    k = kernel_size
    pad = k // 2
    Ctot = Cin + Ch
    HW = H * W
    L = (H + 2 * pad) * W + 2 * pad

    # ---- layout glue (thin XLA ops on small tensors) ----
    combined = jnp.concatenate([x, h_prev], axis=1)                # (B,Ctot,H,W)
    comb = jnp.transpose(combined, (0, 2, 3, 1))                   # (B,H,W,Ctot)
    comb = jnp.pad(comb, ((0, 0), (pad, pad), (0, 0), (0, 0)))     # zero-pad rows
    comb = comb.reshape(B, (H + 2 * pad) * W, Ctot)
    comb = jnp.pad(comb, ((0, 0), (pad, pad), (0, 0)))             # (B, L, Ctot)

    c2 = jnp.transpose(c_prev, (0, 2, 3, 1)).reshape(B, HW, Ch)

    # (4Ch, Ctot, k, k) -> (k*k, Ctot, 4Ch); keep conv params in f32 end-to-end.
    w_all = jnp.transpose(weight, (2, 3, 1, 0)).reshape(k * k, Ctot, 4 * Ch)
    w_all = w_all.astype(jnp.float32)
    b2 = bias.astype(jnp.float32).reshape(1, 4 * Ch)

    # Pixel column x contributes to tap dx iff 0 <= x + dx - pad < W.
    xcol = jnp.arange(HW, dtype=jnp.int32) % W
    masks = jnp.stack(
        [((xcol >= pad - dx) & (xcol < W + pad - dx)).astype(jnp.float32)
         for dx in range(k)], axis=0).reshape(k, HW, 1)

    kern = functools.partial(_convlstm_cell_kernel, H=H, W=W, pad=pad, hidden=Ch)

    h2, c2n = pl.pallas_call(
        kern,
        out_shape=(jax.ShapeDtypeStruct((B, HW, Ch), x.dtype),
                   jax.ShapeDtypeStruct((B, HW, Ch), x.dtype)),
        grid_spec=pltpu.PrefetchScalarGridSpec(
            num_scalar_prefetch=0,
            grid=(B,),
            in_specs=[
                pl.BlockSpec((1, L, Ctot), lambda b: (b, 0, 0)),          # combined
                pl.BlockSpec((1, HW, Ch), lambda b: (b, 0, 0)),           # c_prev
                pl.BlockSpec((k * k, Ctot, 4 * Ch), lambda b: (0, 0, 0)),  # weights
                pl.BlockSpec((1, 4 * Ch), lambda b: (0, 0)),              # bias
                pl.BlockSpec((k, HW, 1), lambda b: (0, 0, 0)),            # masks
            ],
            out_specs=(
                pl.BlockSpec((1, HW, Ch), lambda b: (b, 0, 0)),           # h_next
                pl.BlockSpec((1, HW, Ch), lambda b: (b, 0, 0)),           # c_next
            ),
        ),
        compiler_params=pltpu.CompilerParams(
            dimension_semantics=("parallel",)),
    )(comb, c2, w_all, b2, masks)

    h_next = jnp.transpose(h2.reshape(B, H, W, Ch), (0, 3, 1, 2))
    c_next = jnp.transpose(c2n.reshape(B, H, W, Ch), (0, 3, 1, 2))
    return h_next, c_next


def _reference(x, h_prev, c_prev, weight, bias, *, kernel_size):
    """Pure-JAX mirror of the PyTorch ConvLSTMCell.forward."""
    Ch = h_prev.shape[1]
    pad = kernel_size // 2
    combined = jnp.concatenate([x, h_prev], axis=1)
    gates = jax.lax.conv_general_dilated(
        combined, weight, window_strides=(1, 1),
        padding=((pad, pad), (pad, pad)),
        dimension_numbers=("NCHW", "OIHW", "NCHW"),
        precision=jax.lax.Precision.HIGHEST,
    ) + bias[None, :, None, None]
    i_g = jax.nn.sigmoid(gates[:, 0 * Ch:1 * Ch])
    f_g = jax.nn.sigmoid(gates[:, 1 * Ch:2 * Ch])
    g_g = jnp.tanh(gates[:, 2 * Ch:3 * Ch])
    o_g = jax.nn.sigmoid(gates[:, 3 * Ch:4 * Ch])
    c_next = f_g * c_prev + i_g * g_g
    h_next = o_g * jnp.tanh(c_next)
    return h_next, c_next


if __name__ == "__main__":
    key = jax.random.PRNGKey(0)
    kx, kh, kc, kw, kb = jax.random.split(key, 5)

    B, Cin, Ch, H, W, K = 2, 4, 32, 16, 16, 3
    Ctot = Cin + Ch
    fan_in = Ctot * K * K
    bound = 1.0 / (fan_in ** 0.5)

    x = jax.random.normal(kx, (B, Cin, H, W), jnp.float32)
    h_prev = jax.random.normal(kh, (B, Ch, H, W), jnp.float32)
    c_prev = jax.random.normal(kc, (B, Ch, H, W), jnp.float32)
    weight = jax.random.uniform(kw, (4 * Ch, Ctot, K, K), jnp.float32, -bound, bound)
    bias = jax.random.uniform(kb, (4 * Ch,), jnp.float32, -bound, bound)

    # Round values to bf16-representable f32 (dtype stays f32) so the comparison
    # is insensitive to the MXU's f32 matmul precision policy.
    rb = lambda a: a.astype(jnp.bfloat16).astype(jnp.float32)
    x, h_prev, c_prev, weight, bias = map(rb, (x, h_prev, c_prev, weight, bias))

    h_next, c_next = conv_lstm_cell(x, h_prev, c_prev, weight, bias, kernel_size=K)
    jax.block_until_ready((h_next, c_next))

    h_ref, c_ref = _reference(x, h_prev, c_prev, weight, bias, kernel_size=K)
    assert h_next.shape == (B, Ch, H, W) and c_next.shape == (B, Ch, H, W)
    assert jnp.allclose(h_next, h_ref, atol=1e-3, rtol=1e-3)
    assert jnp.allclose(c_next, c_ref, atol=1e-3, rtol=1e-3)

    print("KERNEL_OK")
</pallas_src>

<mosaic_0001>
module attributes {stable_mosaic.version = 11 : i64} {
  func.func @_convlstm_cell_kernel(%arg0: i32, %arg1: memref<1x290x36xf32, #tpu.memory_space<vmem>>, %arg2: memref<1x256x32xf32, #tpu.memory_space<vmem>>, %arg3: memref<9x36x128xf32, #tpu.memory_space<vmem>>, %arg4: memref<1x128xf32, #tpu.memory_space<vmem>>, %arg5: memref<3x256x1xf32, #tpu.memory_space<vmem>>, %arg6: memref<1x256x32xf32, #tpu.memory_space<vmem>>, %arg7: memref<1x256x32xf32, #tpu.memory_space<vmem>>) attributes {dimension_semantics = [#tpu.dimension_semantics<parallel>], iteration_bounds = array<i64: 2>, scalar_prefetch = 0 : i64, scratch_operands = 0 : i64, tpu.core_type = #tpu.core_type<tc>, window_params = [{transform_indices = @transform_0, window_bounds = array<i64: 1, 290, 36>}, {transform_indices = @transform_1, window_bounds = array<i64: 1, 256, 32>}, {pipeline_mode = #tpu.pipeline_mode<synchronous>, transform_indices = @transform_2, window_bounds = array<i64: 9, 36, 128>}, {pipeline_mode = #tpu.pipeline_mode<synchronous>, transform_indices = @transform_3, window_bounds = array<i64: 1, 128>}, {pipeline_mode = #tpu.pipeline_mode<synchronous>, transform_indices = @transform_4, window_bounds = array<i64: 3, 256, 1>}, {transform_indices = @transform_5, window_bounds = array<i64: 1, 256, 32>}, {transform_indices = @transform_6, window_bounds = array<i64: 1, 256, 32>}]} {
    %cst = arith.constant 0.000000e+00 : f32
    %0 = vector.broadcast %cst : f32 to vector<256x128xf32>
    %c0 = arith.constant 0 : index
    %c0_0 = arith.constant 0 : index
    %c0_1 = arith.constant 0 : index
    %1 = vector.load %arg1[%c0, %c0_0, %c0_1] : memref<1x290x36xf32, #tpu.memory_space<vmem>>, vector<1x256x36xf32>
    %2 = vector.shape_cast %1 : vector<1x256x36xf32> to vector<256x36xf32>
    %c0_2 = arith.constant 0 : index
    %c0_3 = arith.constant 0 : index
    %c0_4 = arith.constant 0 : index
    %3 = vector.load %arg5[%c0_2, %c0_3, %c0_4] : memref<3x256x1xf32, #tpu.memory_space<vmem>>, vector<1x256x1xf32>
    %4 = vector.shape_cast %3 : vector<1x256x1xf32> to vector<256x1xf32>
    %5 = vector.broadcast %4 : vector<256x1xf32> to vector<256x36xf32>
    %6 = arith.mulf %2, %5 : vector<256x36xf32>
    %c0_5 = arith.constant 0 : index
    %c0_6 = arith.constant 0 : index
    %c0_7 = arith.constant 0 : index
    %7 = vector.load %arg3[%c0_5, %c0_6, %c0_7] : memref<9x36x128xf32, #tpu.memory_space<vmem>>, vector<1x36x128xf32>
    %8 = vector.shape_cast %7 : vector<1x36x128xf32> to vector<36x128xf32>
    %cst_8 = arith.constant dense<0.000000e+00> : vector<256x128xf32>
    %9 = tpu.matmul %6, %8, %cst_8 {dimension_numbers = #tpu.dot_dimension_numbers<[1], [0], [0], [1], [0, 0, 1, 1], [], []>} : vector<256x36xf32>, vector<36x128xf32>, vector<256x128xf32> -> vector<256x128xf32>
    %10 = arith.addf %0, %9 : vector<256x128xf32>
    %c0_9 = arith.constant 0 : index
    %c1 = arith.constant 1 : index
    %c0_10 = arith.constant 0 : index
    %11 = vector.load %arg1[%c0_9, %c1, %c0_10] : memref<1x290x36xf32, #tpu.memory_space<vmem>>, vector<1x256x36xf32>
    %12 = vector.shape_cast %11 : vector<1x256x36xf32> to vector<256x36xf32>
    %c1_11 = arith.constant 1 : index
    %c0_12 = arith.constant 0 : index
    %c0_13 = arith.constant 0 : index
    %13 = vector.load %arg3[%c1_11, %c0_12, %c0_13] : memref<9x36x128xf32, #tpu.memory_space<vmem>>, vector<1x36x128xf32>
    %14 = vector.shape_cast %13 : vector<1x36x128xf32> to vector<36x128xf32>
    %cst_14 = arith.constant dense<0.000000e+00> : vector<256x128xf32>
    %15 = tpu.matmul %12, %14, %cst_14 {dimension_numbers = #tpu.dot_dimension_numbers<[1], [0], [0], [1], [0, 0, 1, 1], [], []>} : vector<256x36xf32>, vector<36x128xf32>, vector<256x128xf32> -> vector<256x128xf32>
    %16 = arith.addf %10, %15 : vector<256x128xf32>
    %c0_15 = arith.constant 0 : index
    %c2 = arith.constant 2 : index
    %c0_16 = arith.constant 0 : index
    %17 = vector.load %arg1[%c0_15, %c2, %c0_16] : memref<1x290x36xf32, #tpu.memory_space<vmem>>, vector<1x256x36xf32>
    %18 = vector.shape_cast %17 : vector<1x256x36xf32> to vector<256x36xf32>
    %c2_17 = arith.constant 2 : index
    %c0_18 = arith.constant 0 : index
    %c0_19 = arith.constant 0 : index
    %19 = vector.load %arg5[%c2_17, %c0_18, %c0_19] : memref<3x256x1xf32, #tpu.memory_space<vmem>>, vector<1x256x1xf32>
    %20 = vector.shape_cast %19 : vector<1x256x1xf32> to vector<256x1xf32>
    %21 = vector.broadcast %20 : vector<256x1xf32> to vector<256x36xf32>
    %22 = arith.mulf %18, %21 : vector<256x36xf32>
    %c2_20 = arith.constant 2 : index
    %c0_21 = arith.constant 0 : index
    %c0_22 = arith.constant 0 : index
    %23 = vector.load %arg3[%c2_20, %c0_21, %c0_22] : memref<9x36x128xf32, #tpu.memory_space<vmem>>, vector<1x36x128xf32>
    %24 = vector.shape_cast %23 : vector<1x36x128xf32> to vector<36x128xf32>
    %cst_23 = arith.constant dense<0.000000e+00> : vector<256x128xf32>
    %25 = tpu.matmul %22, %24, %cst_23 {dimension_numbers = #tpu.dot_dimension_numbers<[1], [0], [0], [1], [0, 0, 1, 1], [], []>} : vector<256x36xf32>, vector<36x128xf32>, vector<256x128xf32> -> vector<256x128xf32>
    %26 = arith.addf %16, %25 : vector<256x128xf32>
    %c0_24 = arith.constant 0 : index
    %c16 = arith.constant 16 : index
    %c0_25 = arith.constant 0 : index
    %27 = vector.load %arg1[%c0_24, %c16, %c0_25] : memref<1x290x36xf32, #tpu.memory_space<vmem>>, vector<1x256x36xf32>
    %28 = vector.shape_cast %27 : vector<1x256x36xf32> to vector<256x36xf32>
    %c0_26 = arith.constant 0 : index
    %c0_27 = arith.constant 0 : index
    %c0_28 = arith.constant 0 : index
    %29 = vector.load %arg5[%c0_26, %c0_27, %c0_28] : memref<3x256x1xf32, #tpu.memory_space<vmem>>, vector<1x256x1xf32>
    %30 = vector.shape_cast %29 : vector<1x256x1xf32> to vector<256x1xf32>
    %31 = vector.broadcast %30 : vector<256x1xf32> to vector<256x36xf32>
    %32 = arith.mulf %28, %31 : vector<256x36xf32>
    %c3 = arith.constant 3 : index
    %c0_29 = arith.constant 0 : index
    %c0_30 = arith.constant 0 : index
    %33 = vector.load %arg3[%c3, %c0_29, %c0_30] : memref<9x36x128xf32, #tpu.memory_space<vmem>>, vector<1x36x128xf32>
    %34 = vector.shape_cast %33 : vector<1x36x128xf32> to vector<36x128xf32>
    %cst_31 = arith.constant dense<0.000000e+00> : vector<256x128xf32>
    %35 = tpu.matmul %32, %34, %cst_31 {dimension_numbers = #tpu.dot_dimension_numbers<[1], [0], [0], [1], [0, 0, 1, 1], [], []>} : vector<256x36xf32>, vector<36x128xf32>, vector<256x128xf32> -> vector<256x128xf32>
    %36 = arith.addf %26, %35 : vector<256x128xf32>
    %c0_32 = arith.constant 0 : index
    %c17 = arith.constant 17 : index
    %c0_33 = arith.constant 0 : index
    %37 = vector.load %arg1[%c0_32, %c17, %c0_33] : memref<1x290x36xf32, #tpu.memory_space<vmem>>, vector<1x256x36xf32>
    %38 = vector.shape_cast %37 : vector<1x256x36xf32> to vector<256x36xf32>
    %c4 = arith.constant 4 : index
    %c0_34 = arith.constant 0 : index
    %c0_35 = arith.constant 0 : index
    %39 = vector.load %arg3[%c4, %c0_34, %c0_35] : memref<9x36x128xf32, #tpu.memory_space<vmem>>, vector<1x36x128xf32>
    %40 = vector.shape_cast %39 : vector<1x36x128xf32> to vector<36x128xf32>
    %cst_36 = arith.constant dense<0.000000e+00> : vector<256x128xf32>
    %41 = tpu.matmul %38, %40, %cst_36 {dimension_numbers = #tpu.dot_dimension_numbers<[1], [0], [0], [1], [0, 0, 1, 1], [], []>} : vector<256x36xf32>, vector<36x128xf32>, vector<256x128xf32> -> vector<256x128xf32>
    %42 = arith.addf %36, %41 : vector<256x128xf32>
    %c0_37 = arith.constant 0 : index
    %c18 = arith.constant 18 : index
    %c0_38 = arith.constant 0 : index
    %43 = vector.load %arg1[%c0_37, %c18, %c0_38] : memref<1x290x36xf32, #tpu.memory_space<vmem>>, vector<1x256x36xf32>
    %44 = vector.shape_cast %43 : vector<1x256x36xf32> to vector<256x36xf32>
    %c2_39 = arith.constant 2 : index
    %c0_40 = arith.constant 0 : index
    %c0_41 = arith.constant 0 : index
    %45 = vector.load %arg5[%c2_39, %c0_40, %c0_41] : memref<3x256x1xf32, #tpu.memory_space<vmem>>, vector<1x256x1xf32>
    %46 = vector.shape_cast %45 : vector<1x256x1xf32> to vector<256x1xf32>
    %47 = vector.broadcast %46 : vector<256x1xf32> to vector<256x36xf32>
    %48 = arith.mulf %44, %47 : vector<256x36xf32>
    %c5 = arith.constant 5 : index
    %c0_42 = arith.constant 0 : index
    %c0_43 = arith.constant 0 : index
    %49 = vector.load %arg3[%c5, %c0_42, %c0_43] : memref<9x36x128xf32, #tpu.memory_space<vmem>>, vector<1x36x128xf32>
    %50 = vector.shape_cast %49 : vector<1x36x128xf32> to vector<36x128xf32>
    %cst_44 = arith.constant dense<0.000000e+00> : vector<256x128xf32>
    %51 = tpu.matmul %48, %50, %cst_44 {dimension_numbers = #tpu.dot_dimension_numbers<[1], [0], [0], [1], [0, 0, 1, 1], [], []>} : vector<256x36xf32>, vector<36x128xf32>, vector<256x128xf32> -> vector<256x128xf32>
    %52 = arith.addf %42, %51 : vector<256x128xf32>
    %c0_45 = arith.constant 0 : index
    %c32 = arith.constant 32 : index
    %c0_46 = arith.constant 0 : index
    %53 = vector.load %arg1[%c0_45, %c32, %c0_46] : memref<1x290x36xf32, #tpu.memory_space<vmem>>, vector<1x256x36xf32>
    %54 = vector.shape_cast %53 : vector<1x256x36xf32> to vector<256x36xf32>
    %c0_47 = arith.constant 0 : index
    %c0_48 = arith.constant 0 : index
    %c0_49 = arith.constant 0 : index
    %55 = vector.load %arg5[%c0_47, %c0_48, %c0_49] : memref<3x256x1xf32, #tpu.memory_space<vmem>>, vector<1x256x1xf32>
    %56 = vector.shape_cast %55 : vector<1x256x1xf32> to vector<256x1xf32>
    %57 = vector.broadcast %56 : vector<256x1xf32> to vector<256x36xf32>
    %58 = arith.mulf %54, %57 : vector<256x36xf32>
    %c6 = arith.constant 6 : index
    %c0_50 = arith.constant 0 : index
    %c0_51 = arith.constant 0 : index
    %59 = vector.load %arg3[%c6, %c0_50, %c0_51] : memref<9x36x128xf32, #tpu.memory_space<vmem>>, vector<1x36x128xf32>
    %60 = vector.shape_cast %59 : vector<1x36x128xf32> to vector<36x128xf32>
    %cst_52 = arith.constant dense<0.000000e+00> : vector<256x128xf32>
    %61 = tpu.matmul %58, %60, %cst_52 {dimension_numbers = #tpu.dot_dimension_numbers<[1], [0], [0], [1], [0, 0, 1, 1], [], []>} : vector<256x36xf32>, vector<36x128xf32>, vector<256x128xf32> -> vector<256x128xf32>
    %62 = arith.addf %52, %61 : vector<256x128xf32>
    %c0_53 = arith.constant 0 : index
    %c33 = arith.constant 33 : index
    %c0_54 = arith.constant 0 : index
    %63 = vector.load %arg1[%c0_53, %c33, %c0_54] : memref<1x290x36xf32, #tpu.memory_space<vmem>>, vector<1x256x36xf32>
    %64 = vector.shape_cast %63 : vector<1x256x36xf32> to vector<256x36xf32>
    %c7 = arith.constant 7 : index
    %c0_55 = arith.constant 0 : index
    %c0_56 = arith.constant 0 : index
    %65 = vector.load %arg3[%c7, %c0_55, %c0_56] : memref<9x36x128xf32, #tpu.memory_space<vmem>>, vector<1x36x128xf32>
    %66 = vector.shape_cast %65 : vector<1x36x128xf32> to vector<36x128xf32>
    %cst_57 = arith.constant dense<0.000000e+00> : vector<256x128xf32>
    %67 = tpu.matmul %64, %66, %cst_57 {dimension_numbers = #tpu.dot_dimension_numbers<[1], [0], [0], [1], [0, 0, 1, 1], [], []>} : vector<256x36xf32>, vector<36x128xf32>, vector<256x128xf32> -> vector<256x128xf32>
    %68 = arith.addf %62, %67 : vector<256x128xf32>
    %c0_58 = arith.constant 0 : index
    %c34 = arith.constant 34 : index
    %c0_59 = arith.constant 0 : index
    %69 = vector.load %arg1[%c0_58, %c34, %c0_59] : memref<1x290x36xf32, #tpu.memory_space<vmem>>, vector<1x256x36xf32>
    %70 = vector.shape_cast %69 : vector<1x256x36xf32> to vector<256x36xf32>
    %c2_60 = arith.constant 2 : index
    %c0_61 = arith.constant 0 : index
    %c0_62 = arith.constant 0 : index
    %71 = vector.load %arg5[%c2_60, %c0_61, %c0_62] : memref<3x256x1xf32, #tpu.memory_space<vmem>>, vector<1x256x1xf32>
    %72 = vector.shape_cast %71 : vector<1x256x1xf32> to vector<256x1xf32>
    %73 = vector.broadcast %72 : vector<256x1xf32> to vector<256x36xf32>
    %74 = arith.mulf %70, %73 : vector<256x36xf32>
    %c8 = arith.constant 8 : index
    %c0_63 = arith.constant 0 : index
    %c0_64 = arith.constant 0 : index
    %75 = vector.load %arg3[%c8, %c0_63, %c0_64] : memref<9x36x128xf32, #tpu.memory_space<vmem>>, vector<1x36x128xf32>
    %76 = vector.shape_cast %75 : vector<1x36x128xf32> to vector<36x128xf32>
    %cst_65 = arith.constant dense<0.000000e+00> : vector<256x128xf32>
    %77 = tpu.matmul %74, %76, %cst_65 {dimension_numbers = #tpu.dot_dimension_numbers<[1], [0], [0], [1], [0, 0, 1, 1], [], []>} : vector<256x36xf32>, vector<36x128xf32>, vector<256x128xf32> -> vector<256x128xf32>
    %78 = arith.addf %68, %77 : vector<256x128xf32>
    %c0_66 = arith.constant 0 : index
    %c0_67 = arith.constant 0 : index
    %79 = vector.load %arg4[%c0_66, %c0_67] : memref<1x128xf32, #tpu.memory_space<vmem>>, vector<1x128xf32>
    %80 = vector.broadcast %79 : vector<1x128xf32> to vector<256x128xf32>
    %81 = arith.addf %78, %80 : vector<256x128xf32>
    %82 = vector.extract_strided_slice %81 {offsets = [0, 0], sizes = [256, 32], strides = [1, 1]} : vector<256x128xf32> to vector<256x32xf32>
    %cst_68 = arith.constant 0.000000e+00 : f32
    %83 = vector.broadcast %cst_68 : f32 to vector<256x32xf32>
    %84 = arith.subf %83, %82 : vector<256x32xf32>
    %85 = math.exp %84 : vector<256x32xf32>
    %cst_69 = arith.constant 1.000000e+00 : f32
    %86 = vector.broadcast %cst_69 : f32 to vector<256x32xf32>
    %87 = arith.addf %86, %85 : vector<256x32xf32>
    %cst_70 = arith.constant 1.000000e+00 : f32
    %88 = vector.broadcast %cst_70 : f32 to vector<256x32xf32>
    %89 = arith.divf %88, %87 : vector<256x32xf32>
    %90 = vector.extract_strided_slice %81 {offsets = [0, 32], sizes = [256, 32], strides = [1, 1]} : vector<256x128xf32> to vector<256x32xf32>
    %cst_71 = arith.constant 0.000000e+00 : f32
    %91 = vector.broadcast %cst_71 : f32 to vector<256x32xf32>
    %92 = arith.subf %91, %90 : vector<256x32xf32>
    %93 = math.exp %92 : vector<256x32xf32>
    %cst_72 = arith.constant 1.000000e+00 : f32
    %94 = vector.broadcast %cst_72 : f32 to vector<256x32xf32>
    %95 = arith.addf %94, %93 : vector<256x32xf32>
    %cst_73 = arith.constant 1.000000e+00 : f32
    %96 = vector.broadcast %cst_73 : f32 to vector<256x32xf32>
    %97 = arith.divf %96, %95 : vector<256x32xf32>
    %98 = vector.extract_strided_slice %81 {offsets = [0, 64], sizes = [256, 32], strides = [1, 1]} : vector<256x128xf32> to vector<256x32xf32>
    %99 = math.tanh %98 : vector<256x32xf32>
    %100 = vector.extract_strided_slice %81 {offsets = [0, 96], sizes = [256, 32], strides = [1, 1]} : vector<256x128xf32> to vector<256x32xf32>
    %cst_74 = arith.constant 0.000000e+00 : f32
    %101 = vector.broadcast %cst_74 : f32 to vector<256x32xf32>
    %102 = arith.subf %101, %100 : vector<256x32xf32>
    %103 = math.exp %102 : vector<256x32xf32>
    %cst_75 = arith.constant 1.000000e+00 : f32
    %104 = vector.broadcast %cst_75 : f32 to vector<256x32xf32>
    %105 = arith.addf %104, %103 : vector<256x32xf32>
    %cst_76 = arith.constant 1.000000e+00 : f32
    %106 = vector.broadcast %cst_76 : f32 to vector<256x32xf32>
    %107 = arith.divf %106, %105 : vector<256x32xf32>
    %c0_77 = arith.constant 0 : index
    %c0_78 = arith.constant 0 : index
    %c0_79 = arith.constant 0 : index
    %108 = vector.load %arg2[%c0_77, %c0_78, %c0_79] : memref<1x256x32xf32, #tpu.memory_space<vmem>>, vector<1x256x32xf32>
    %109 = vector.shape_cast %108 : vector<1x256x32xf32> to vector<256x32xf32>
    %110 = arith.mulf %97, %109 : vector<256x32xf32>
    %111 = arith.mulf %89, %99 : vector<256x32xf32>
    %112 = arith.addf %110, %111 : vector<256x32xf32>
    %113 = math.tanh %112 : vector<256x32xf32>
    %114 = arith.mulf %107, %113 : vector<256x32xf32>
    %c0_80 = arith.constant 0 : index
    %c0_81 = arith.constant 0 : index
    %c0_82 = arith.constant 0 : index
    %115 = vector.load %arg6[%c0_80, %c0_81, %c0_82] : memref<1x256x32xf32, #tpu.memory_space<vmem>>, vector<1x256x32xf32>
    %116 = vector.shape_cast %115 : vector<1x256x32xf32> to vector<256x32xf32>
    %117 = vector.shape_cast %114 : vector<256x32xf32> to vector<1x256x32xf32>
    tpu.vector_store %arg6[%c0_80, %c0_81, %c0_82], %117 {strides = array<i32>} : memref<1x256x32xf32, #tpu.memory_space<vmem>>, vector<1x256x32xf32>,
    %c0_83 = arith.constant 0 : index
    %c0_84 = arith.constant 0 : index
    %c0_85 = arith.constant 0 : index
    %118 = vector.load %arg7[%c0_83, %c0_84, %c0_85] : memref<1x256x32xf32, #tpu.memory_space<vmem>>, vector<1x256x32xf32>
    %119 = vector.shape_cast %118 : vector<1x256x32xf32> to vector<256x32xf32>
    %120 = vector.shape_cast %112 : vector<256x32xf32> to vector<1x256x32xf32>
    tpu.vector_store %arg7[%c0_83, %c0_84, %c0_85], %120 {strides = array<i32>} : memref<1x256x32xf32, #tpu.memory_space<vmem>>, vector<1x256x32xf32>,
    return
  }
  func.func @transform_0(%arg0: i32) -> (i32, i32, i32) {
    %c0_i32 = arith.constant 0 : i32
    %c0_i32_0 = arith.constant 0 : i32
    %c0_i32_1 = arith.constant 0 : i32
    return %arg0, %c0_i32, %c0_i32_0 : i32, i32, i32
  }
  func.func @transform_1(%arg0: i32) -> (i32, i32, i32) {
    %c0_i32 = arith.constant 0 : i32
    %c0_i32_0 = arith.constant 0 : i32
    %c0_i32_1 = arith.constant 0 : i32
    return %arg0, %c0_i32, %c0_i32_0 : i32, i32, i32
  }
  func.func @transform_2(%arg0: i32) -> (i32, i32, i32) {
    %c0_i32 = arith.constant 0 : i32
    %c0_i32_0 = arith.constant 0 : i32
    %c0_i32_1 = arith.constant 0 : i32
    %c0_i32_2 = arith.constant 0 : i32
    return %c0_i32, %c0_i32_0, %c0_i32_1 : i32, i32, i32
  }
  func.func @transform_3(%arg0: i32) -> (i32, i32) {
    %c0_i32 = arith.constant 0 : i32
    %c0_i32_0 = arith.constant 0 : i32
    %c0_i32_1 = arith.constant 0 : i32
    return %c0_i32, %c0_i32_0 : i32, i32
  }
  func.func @transform_4(%arg0: i32) -> (i32, i32, i32) {
    %c0_i32 = arith.constant 0 : i32
    %c0_i32_0 = arith.constant 0 : i32
    %c0_i32_1 = arith.constant 0 : i32
    %c0_i32_2 = arith.constant 0 : i32
    return %c0_i32, %c0_i32_0, %c0_i32_1 : i32, i32, i32
  }
  func.func @transform_5(%arg0: i32) -> (i32, i32, i32) {
    %c0_i32 = arith.constant 0 : i32
    %c0_i32_0 = arith.constant 0 : i32
    %c0_i32_1 = arith.constant 0 : i32
    return %arg0, %c0_i32, %c0_i32_0 : i32, i32, i32
  }
  func.func @transform_6(%arg0: i32) -> (i32, i32, i32) {
    %c0_i32 = arith.constant 0 : i32
    %c0_i32_0 = arith.constant 0 : i32
    %c0_i32_1 = arith.constant 0 : i32
    return %arg0, %c0_i32, %c0_i32_0 : i32, i32, i32
  }
}

</mosaic_0001>

<llo_original>
// kernel: tpu_custom_call.1
$region0: #{tpu_custom_call.1}
  #allocation0 [shape = 'u32[]', space=smem, size = 0x4, offset = 0x4, fixed_abs, tag = 'smem constant byte address 0x4 - core index']
  #allocation1 [shape = 'u32[144,128]{1,0:T(1,128)}', space=vmem, size = 0x12000, scoped, tag = 'internal scratch']
  %s0 = inlined_call_operand.vmem [shape: f32[2,290,36], index: 0, kind: input, shape index: {}]
  %s1 = inlined_call_operand.vmem [shape: f32[2,256,32], index: 1, kind: input, shape index: {}]
  %s2 = inlined_call_operand.vmem [shape: f32[9,36,128], index: 2, kind: input, shape index: {}]
  %s3 = inlined_call_operand.vmem [shape: f32[1,128], index: 3, kind: input, shape index: {}]
  %s4 = inlined_call_operand.vmem [shape: f32[3,256,1], index: 4, kind: input, shape index: {}]
  %s5 = inlined_call_operand.vmem [shape: f32[2,256,32], index: 5, kind: output, shape index: {0}]
  %s6 = inlined_call_operand.vmem [shape: f32[2,256,32], index: 6, kind: output, shape index: {1}]
  %7 = xla_tuple %s5, %s6
  %s8 = sld [smem:[#allocation0]]
  $region61: #{tpu_custom_call.1} parent=0
    _
  %s10 = ssub.s32 1, %s8
  %s11 = scalar_select 0, %s10, %s8
  loop: start=0, step=1, limit=4
  $region2: #{tpu_custom_call.1} parent=0 // loop_pre_header
    _
  $region3: #{tpu_custom_call.1} parent=0 // loop_header
    %s13 = sphi 0, %s17
    %p14 = scmp.ge.s32.totalorder %s13, 4
    %s23 = sphi 0, %s25
    %s26 = sphi 0, %s23
    %s27 = sphi 0, %s26
    %s43 = sphi 0, %s27
    %s49 = sphi 0, %s51
    %s52 = sphi 0, %s49
    %s53 = sphi 0, %s52
    %s69 = sphi 0, %s53
    %s73 = sphi 0, %s73
    %s75 = sphi 0, %s73
    %s76 = sphi 0, %s75
    %s90 = sphi 0, %s76
    %s94 = sphi 0, %s94
    %s96 = sphi 0, %s94
    %s97 = sphi 0, %s96
    %s111 = sphi 0, %s97
    %s115 = sphi 0, %s115
    %s117 = sphi 0, %s115
    %s118 = sphi 0, %s117
    %s132 = sphi 0, %s118
    %s138 = sphi 0, %s140
    %s141 = sphi 0, %s138
    %s142 = sphi 0, %s141
    %s158 = sphi 0, %s142
    %s164 = sphi 0, %s166
    %s167 = sphi 0, %s164
    %s168 = sphi 0, %s167
    %s184 = sphi 0, %s168
  $region4: #{tpu_custom_call.1} parent=0 // loop_header_branch
    %16 = sbr.rel (%p14) target = $region8
  $region5: #{tpu_custom_call.1} parent=0 // loop_body
    %s18 = ssub.s32 %s13, 1
    %s19 = ssub.s32 %s13, 2
    %s20 = sadd.s32 %s13, 1
    %s21 = ssub.s32 %s13, %s20
    %p22 = scmp.eq.s32.totalorder %s21, 0
    %s24 = sadd.s32 %s23, 1
    %s25 = scalar_select %p22, %s23, %s24
    %p28 = pneg %p22
    %p29 = scmp.eq.s32.totalorder %s13, 1
    %p30 = por %p28, %p29
    %p31 = scmp.ne.s32.totalorder %s23, %s26
    %p32 = scmp.eq.s32.totalorder %s13, 0
    %p33 = por %p31, %p32
    %p34 = scmp.ne.s32.totalorder %s23, %s26
    %p35 = scmp.eq.s32.totalorder %s18, 1
    %p36 = por %p34, %p35
    %p37 = scmp.ne.s32.totalorder %s26, %s27
    %p38 = scmp.eq.s32.totalorder %s18, 0
    %p39 = por %p37, %p38
    %p40 = scmp.ne.s32.totalorder %s26, %s27
    %p41 = scmp.eq.s32.totalorder %s19, 1
    %p42 = por %p40, %p41
    %p44 = scmp.ne.s32.totalorder %s27, %s43
    %p45 = scmp.eq.s32.totalorder %s19, 0
    %p46 = por %p44, %p45
    %s47 = ssub.s32 %s13, %s20
    %p48 = scmp.eq.s32.totalorder %s47, 0
    %s50 = sadd.s32 %s49, 1
    %s51 = scalar_select %p48, %s49, %s50
    %p54 = pneg %p48
    %p55 = scmp.eq.s32.totalorder %s13, 1
    %p56 = por %p54, %p55
    %p57 = scmp.ne.s32.totalorder %s49, %s52
    %p58 = scmp.eq.s32.totalorder %s13, 0
    %p59 = por %p57, %p58
    %p60 = scmp.ne.s32.totalorder %s49, %s52
    %p61 = scmp.eq.s32.totalorder %s18, 1
    %p62 = por %p60, %p61
    %p63 = scmp.ne.s32.totalorder %s52, %s53
    %p64 = scmp.eq.s32.totalorder %s18, 0
    %p65 = por %p63, %p64
    %p66 = scmp.ne.s32.totalorder %s52, %s53
    %p67 = scmp.eq.s32.totalorder %s19, 1
    %p68 = por %p66, %p67
    %p70 = scmp.ne.s32.totalorder %s53, %s69
    %p71 = scmp.eq.s32.totalorder %s19, 0
    %p72 = por %p70, %p71
    %s74 = sadd.s32 %s73, 1
    %p77 = scmp.eq.s32.totalorder %s13, 1
    %p78 = scmp.ne.s32.totalorder %s73, %s75
    %p79 = scmp.eq.s32.totalorder %s13, 0
    %p80 = por %p78, %p79
    %p81 = scmp.ne.s32.totalorder %s73, %s75
    %p82 = scmp.eq.s32.totalorder %s18, 1
    %p83 = por %p81, %p82
    %p84 = scmp.ne.s32.totalorder %s75, %s76
    %p85 = scmp.eq.s32.totalorder %s18, 0
    %p86 = por %p84, %p85
    %p87 = scmp.ne.s32.totalorder %s75, %s76
    %p88 = scmp.eq.s32.totalorder %s19, 1
    %p89 = por %p87, %p88
    %p91 = scmp.ne.s32.totalorder %s76, %s90
    %p92 = scmp.eq.s32.totalorder %s19, 0
    %p93 = por %p91, %p92
    %s95 = sadd.s32 %s94, 1
    %p98 = scmp.eq.s32.totalorder %s13, 1
    %p99 = scmp.ne.s32.totalorder %s94, %s96
    %p100 = scmp.eq.s32.totalorder %s13, 0
    %p101 = por %p99, %p100
    %p102 = scmp.ne.s32.totalorder %s94, %s96
    %p103 = scmp.eq.s32.totalorder %s18, 1
    %p104 = por %p102, %p103
    %p105 = scmp.ne.s32.totalorder %s96, %s97
    %p106 = scmp.eq.s32.totalorder %s18, 0
    %p107 = por %p105, %p106
    %p108 = scmp.ne.s32.totalorder %s96, %s97
    %p109 = scmp.eq.s32.totalorder %s19, 1
    %p110 = por %p108, %p109
    %p112 = scmp.ne.s32.totalorder %s97, %s111
    %p113 = scmp.eq.s32.totalorder %s19, 0
    %p114 = por %p112, %p113
    %s116 = sadd.s32 %s115, 1
    %p119 = scmp.eq.s32.totalorder %s13, 1
    %p120 = scmp.ne.s32.totalorder %s115, %s117
    %p121 = scmp.eq.s32.totalorder %s13, 0
    %p122 = por %p120, %p121
    %p123 = scmp.ne.s32.totalorder %s115, %s117
    %p124 = scmp.eq.s32.totalorder %s18, 1
    %p125 = por %p123, %p124
    %p126 = scmp.ne.s32.totalorder %s117, %s118
    %p127 = scmp.eq.s32.totalorder %s18, 0
    %p128 = por %p126, %p127
    %p129 = scmp.ne.s32.totalorder %s117, %s118
    %p130 = scmp.eq.s32.totalorder %s19, 1
    %p131 = por %p129, %p130
    %p133 = scmp.ne.s32.totalorder %s118, %s132
    %p134 = scmp.eq.s32.totalorder %s19, 0
    %p135 = por %p133, %p134
    %s136 = ssub.s32 %s13, %s20
    %p137 = scmp.eq.s32.totalorder %s136, 0
    %s139 = sadd.s32 %s138, 1
    %s140 = scalar_select %p137, %s138, %s139
    %p143 = pneg %p137
    %p144 = scmp.eq.s32.totalorder %s13, 1
    %p145 = por %p143, %p144
    %p146 = scmp.ne.s32.totalorder %s138, %s141
    %p147 = scmp.eq.s32.totalorder %s13, 0
    %p148 = por %p146, %p147
    %p149 = scmp.ne.s32.totalorder %s138, %s141
    %p150 = scmp.eq.s32.totalorder %s18, 1
    %p151 = por %p149, %p150
    %p152 = scmp.ne.s32.totalorder %s141, %s142
    %p153 = scmp.eq.s32.totalorder %s18, 0
    %p154 = por %p152, %p153
    %p155 = scmp.ne.s32.totalorder %s141, %s142
    %p156 = scmp.eq.s32.totalorder %s19, 1
    %p157 = por %p155, %p156
    %p159 = scmp.ne.s32.totalorder %s142, %s158
    %p160 = scmp.eq.s32.totalorder %s19, 0
    %p161 = por %p159, %p160
    %s162 = ssub.s32 %s13, %s20
    %p163 = scmp.eq.s32.totalorder %s162, 0
    %s165 = sadd.s32 %s164, 1
    %s166 = scalar_select %p163, %s164, %s165
    %p169 = pneg %p163
    %p170 = scmp.eq.s32.totalorder %s13, 1
    %p171 = por %p169, %p170
    %p172 = scmp.ne.s32.totalorder %s164, %s167
    %p173 = scmp.eq.s32.totalorder %s13, 0
    %p174 = por %p172, %p173
    %p175 = scmp.ne.s32.totalorder %s164, %s167
    %p176 = scmp.eq.s32.totalorder %s18, 1
    %p177 = por %p175, %p176
    %p178 = scmp.ne.s32.totalorder %s167, %s168
    %p179 = scmp.eq.s32.totalorder %s18, 0
    %p180 = por %p178, %p179
    %p181 = scmp.ne.s32.totalorder %s167, %s168
    %p182 = scmp.eq.s32.totalorder %s19, 1
    %p183 = por %p181, %p182
    %p185 = scmp.ne.s32.totalorder %s168, %s184
    %p186 = scmp.eq.s32.totalorder %s19, 0
    %p187 = por %p185, %p186
    %p188 = scmp.le.s32.totalorder 1, %s13
    %p189 = scmp.lt.s32.totalorder %s13, 3
    %p190 = pnand %p188, %p189
    %p191 = pneg %p190
    // Predicated region
    $region9: #{tpu_custom_call.1} parent=5 // pred_check
      _
    $region10: #{tpu_custom_call.1} parent=5 // pred_check_branch
      %193 = sbr.rel (%p190) target = $region12
    $region11: #{tpu_custom_call.1} parent=5 // pred_region
      %s194 = ssub.s32 %s13, 1
      // Predicated region
      $region13: #{tpu_custom_call.1} parent=11 // pred_check
        %p195 = pneg %p86
      $region14: #{tpu_custom_call.1} parent=11 // pred_check_branch
        %197 = sbr.rel (%p195) target = $region16
      $region15: #{tpu_custom_call.1} parent=11 // pred_region
        _
      $region16: #{tpu_custom_call.1} parent=11 // pred_fallthru
        _
      // Predicated region
      $region17: #{tpu_custom_call.1} parent=11 // pred_check
        %p198 = pneg %p107
      $region18: #{tpu_custom_call.1} parent=11 // pred_check_branch
        %200 = sbr.rel (%p198) target = $region20
      $region19: #{tpu_custom_call.1} parent=11 // pred_region
        _
      $region20: #{tpu_custom_call.1} parent=11 // pred_fallthru
        _
      // Predicated region
      $region21: #{tpu_custom_call.1} parent=11 // pred_check
        %p201 = pneg %p128
      $region22: #{tpu_custom_call.1} parent=11 // pred_check_branch
        %203 = sbr.rel (%p201) target = $region24
      $region23: #{tpu_custom_call.1} parent=11 // pred_region
        _
      $region24: #{tpu_custom_call.1} parent=11 // pred_fallthru
        _
    $region12: #{tpu_custom_call.1} parent=5 // pred_fallthru
      _
    %p204 = scmp.lt.s32.totalorder %s13, 2
    // Predicated region
    $region25: #{tpu_custom_call.1} parent=5 // pred_check
      %p205 = pneg %p204
    $region26: #{tpu_custom_call.1} parent=5 // pred_check_branch
      %207 = sbr.rel (%p205) target = $region28
    $region27: #{tpu_custom_call.1} parent=5 // pred_region
      // Predicated region
      $region29: #{tpu_custom_call.1} parent=27 // pred_check
        %p208 = pneg %p33
      $region30: #{tpu_custom_call.1} parent=27 // pred_check_branch
        %210 = sbr.rel (%p208) target = $region32
      $region31: #{tpu_custom_call.1} parent=27 // pred_region
        %p211 = scmp.lt.s32.totalorder %s13, 1
        %s212 = scalar_select %p211, %s13, 1
        %s213 = smul.addr %s212, 37
        %s214 = smul.addr %s213, 8
        %s215 = scalar_lea.vmem %s0, %s214
      $region32: #{tpu_custom_call.1} parent=27 // pred_fallthru
        _
      // Predicated region
      $region33: #{tpu_custom_call.1} parent=27 // pred_check
        %p216 = pneg %p59
      $region34: #{tpu_custom_call.1} parent=27 // pred_check_branch
        %218 = sbr.rel (%p216) target = $region36
      $region35: #{tpu_custom_call.1} parent=27 // pred_region
        %p219 = scmp.lt.s32.totalorder %s13, 1
        %s220 = scalar_select %p219, %s13, 1
        %s221 = smul.addr %s220, 32
        %s222 = smul.addr %s221, 8
        %s223 = scalar_lea.vmem %s1, %s222
      $region36: #{tpu_custom_call.1} parent=27 // pred_fallthru
        _
    $region28: #{tpu_custom_call.1} parent=5 // pred_fallthru
      _
    %p224 = scmp.le.s32.totalorder 1, %s13
    %p225 = scmp.lt.s32.totalorder %s13, 3
    %p226 = pnand %p224, %p225
    %p227 = pneg %p226
    // Predicated region
    $region37: #{tpu_custom_call.1} parent=5 // pred_check
      _
    $region38: #{tpu_custom_call.1} parent=5 // pred_check_branch
      %229 = sbr.rel (%p226) target = $region40
    $region39: #{tpu_custom_call.1} parent=5 // pred_region
      %s230 = ssub.s32 %s13, 1
      %p231 = scmp.lt.s32.totalorder %s18, 1
      %s232 = scalar_select %p231, %s18, 1
      %s233 = smul.addr %s232, 37
      %s234 = smul.addr %s233, 8
      %s235 = scalar_lea.vmem %s0, %s234
      %p236 = pneg %p39
      %p237 = pneg %p36
      %p238 = scmp.lt.s32.totalorder %s18, 1
      %s239 = scalar_select %p238, %s18, 1
      %s240 = smul.addr %s239, 32
      %s241 = smul.addr %s240, 8
      %s242 = scalar_lea.vmem %s1, %s241
      %p243 = pneg %p65
      %p244 = pneg %p62
      %p245 = pneg %p86
      %p246 = pneg %p83
      %p247 = pneg %p107
      %p248 = pneg %p104
      %p249 = pneg %p128
      %p250 = pneg %p125
      %p251 = pneg %p154
      %p252 = pneg %p151
      %p253 = scmp.lt.s32.totalorder %s18, 1
      %s254 = scalar_select %p253, %s18, 1
      %s255 = smul.addr %s254, 32
      %s256 = smul.addr %s255, 8
      %s257 = scalar_lea.vmem %s5, %s256
      %p258 = pneg %p180
      %p259 = pneg %p177
      %p260 = scmp.lt.s32.totalorder %s18, 1
      %s261 = scalar_select %p260, %s18, 1
      %s262 = smul.addr %s261, 32
      %s263 = smul.addr %s262, 8
      %s264 = scalar_lea.vmem %s6, %s263
      %p265 = scmp.lt.s32.totalorder %s18, 1
      %s266 = scalar_select %p265, %s18, 1
      %s267 = smul.addr %s266, 37
      %s268 = smul.addr %s267, 8
      %s269 = scalar_lea.vmem %s0, %s268
      %p270 = scmp.lt.s32.totalorder %s18, 1
      %s271 = scalar_select %p270, %s18, 1
      %s272 = smul.addr %s271, 32
      %s273 = smul.addr %s272, 8
      %s274 = scalar_lea.vmem %s1, %s273
      %p275 = scmp.lt.s32.totalorder %s18, 1
      %s276 = scalar_select %p275, %s18, 1
      %s277 = smul.addr %s276, 32
      %s278 = smul.addr %s277, 8
      %s279 = scalar_lea.vmem %s5, %s278
      %p280 = scmp.lt.s32.totalorder %s18, 1
      %s281 = scalar_select %p280, %s18, 1
      %s282 = smul.addr %s281, 32
      %s283 = smul.addr %s282, 8
      %s284 = scalar_lea.vmem %s6, %s283
      %v285 = vld [vmem:[%s269] sm:$0xff]
      %v286 = vld [vmem:[%s269 + $0x8] sm:$0xff]
      %v287 = vld [vmem:[%s269 + $0x10] sm:$0xff]
      %v288 = vld [vmem:[%s269 + $0x18] sm:$0xff]
      %v289 = vld [vmem:[%s269 + $0x20] sm:$0xff]
      %v290 = vld [vmem:[%s269 + $0x28] sm:$0xff]
      %v291 = vld [vmem:[%s269 + $0x30] sm:$0xff]
      %v292 = vld [vmem:[%s269 + $0x38] sm:$0xff]
      %v293 = vld [vmem:[%s269 + $0x40] sm:$0xff]
      %v294 = vld [vmem:[%s269 + $0x48] sm:$0xff]
      %v295 = vld [vmem:[%s269 + $0x50] sm:$0xff]
      %v296 = vld [vmem:[%s269 + $0x58] sm:$0xff]
      %v297 = vld [vmem:[%s269 + $0x60] sm:$0xff]
      %v298 = vld [vmem:[%s269 + $0x68] sm:$0xff]
      %v299 = vld [vmem:[%s269 + $0x70] sm:$0xff]
      %v300 = vld [vmem:[%s269 + $0x78] sm:$0xff]
      %v301 = vld [vmem:[%s269 + $0x80] sm:$0xff]
      %v302 = vld [vmem:[%s269 + $0x88] sm:$0xff]
      %v303 = vld [vmem:[%s269 + $0x90] sm:$0xff]
      %v304 = vld [vmem:[%s269 + $0x98] sm:$0xff]
      %v305 = vld [vmem:[%s269 + $0xa0] sm:$0xff]
      %v306 = vld [vmem:[%s269 + $0xa8] sm:$0xff]
      %v307 = vld [vmem:[%s269 + $0xb0] sm:$0xff]
      %v308 = vld [vmem:[%s269 + $0xb8] sm:$0xff]
      %v309 = vld [vmem:[%s269 + $0xc0] sm:$0xff]
      %v310 = vld [vmem:[%s269 + $0xc8] sm:$0xff]
      %v311 = vld [vmem:[%s269 + $0xd0] sm:$0xff]
      %v312 = vld [vmem:[%s269 + $0xd8] sm:$0xff]
      %v313 = vld [vmem:[%s269 + $0xe0] sm:$0xff]
      %v314 = vld [vmem:[%s269 + $0xe8] sm:$0xff]
      %v315 = vld [vmem:[%s269 + $0xf0] sm:$0xff]
      %v316 = vld [vmem:[%s269 + $0xf8] sm:$0xff]
      %v317 = vld [vmem:[%s4] sm:$0xff]
      %v318 = vld [vmem:[%s4 + $0x8] sm:$0xff]
      %v319 = vld [vmem:[%s4 + $0x10] sm:$0xff]
      %v320 = vld [vmem:[%s4 + $0x18] sm:$0xff]
      %v321 = vld [vmem:[%s4 + $0x20] sm:$0xff]
      %v322 = vld [vmem:[%s4 + $0x28] sm:$0xff]
      %v323 = vld [vmem:[%s4 + $0x30] sm:$0xff]
      %v324 = vld [vmem:[%s4 + $0x38] sm:$0xff]
      %v325 = vld [vmem:[%s4 + $0x40] sm:$0xff]
      %v326 = vld [vmem:[%s4 + $0x48] sm:$0xff]
      %v327 = vld [vmem:[%s4 + $0x50] sm:$0xff]
      %v328 = vld [vmem:[%s4 + $0x58] sm:$0xff]
      %v329 = vld [vmem:[%s4 + $0x60] sm:$0xff]
      %v330 = vld [vmem:[%s4 + $0x68] sm:$0xff]
      %v331 = vld [vmem:[%s4 + $0x70] sm:$0xff]
      %v332 = vld [vmem:[%s4 + $0x78] sm:$0xff]
      %v333 = vld [vmem:[%s4 + $0x80] sm:$0xff]
      %v334 = vld [vmem:[%s4 + $0x88] sm:$0xff]
      %v335 = vld [vmem:[%s4 + $0x90] sm:$0xff]
      %v336 = vld [vmem:[%s4 + $0x98] sm:$0xff]
      %v337 = vld [vmem:[%s4 + $0xa0] sm:$0xff]
      %v338 = vld [vmem:[%s4 + $0xa8] sm:$0xff]
      %v339 = vld [vmem:[%s4 + $0xb0] sm:$0xff]
      %v340 = vld [vmem:[%s4 + $0xb8] sm:$0xff]
      %v341 = vld [vmem:[%s4 + $0xc0] sm:$0xff]
      %v342 = vld [vmem:[%s4 + $0xc8] sm:$0xff]
      %v343 = vld [vmem:[%s4 + $0xd0] sm:$0xff]
      %v344 = vld [vmem:[%s4 + $0xd8] sm:$0xff]
      %v345 = vld [vmem:[%s4 + $0xe0] sm:$0xff]
      %v346 = vld [vmem:[%s4 + $0xe8] sm:$0xff]
      %v347 = vld [vmem:[%s4 + $0xf0] sm:$0xff]
      %v348 = vld [vmem:[%s4 + $0xf8] sm:$0xff]
      %350 = vset.pattern.permute.xlu0 0
      %351 = vperm.xlu0 %350, %v317
      %v352 = vpop.permute.xlu0 %351
      %355 = vset.pattern.permute.xlu0 0
      %356 = vperm.xlu0 %355, %v318
      %v357 = vpop.permute.xlu0 %356
      %360 = vset.pattern.permute.xlu0 0
      %361 = vperm.xlu0 %360, %v319
      %v362 = vpop.permute.xlu0 %361
      %365 = vset.pattern.permute.xlu0 0
      %366 = vperm.xlu0 %365, %v320
      %v367 = vpop.permute.xlu0 %366
      %370 = vset.pattern.permute.xlu0 0
      %371 = vperm.xlu0 %370, %v321
      %v372 = vpop.permute.xlu0 %371
      %375 = vset.pattern.permute.xlu0 0
      %376 = vperm.xlu0 %375, %v322
      %v377 = vpop.permute.xlu0 %376
      %380 = vset.pattern.permute.xlu0 0
      %381 = vperm.xlu0 %380, %v323
      %v382 = vpop.permute.xlu0 %381
      %385 = vset.pattern.permute.xlu0 0
      %386 = vperm.xlu0 %385, %v324
      %v387 = vpop.permute.xlu0 %386
      %390 = vset.pattern.permute.xlu0 0
      %391 = vperm.xlu0 %390, %v325
      %v392 = vpop.permute.xlu0 %391
      %395 = vset.pattern.permute.xlu0 0
      %396 = vperm.xlu0 %395, %v326
      %v397 = vpop.permute.xlu0 %396
      %400 = vset.pattern.permute.xlu0 0
      %401 = vperm.xlu0 %400, %v327
      %v402 = vpop.permute.xlu0 %401
      %405 = vset.pattern.permute.xlu0 0
      %406 = vperm.xlu0 %405, %v328
      %v407 = vpop.permute.xlu0 %406
      %410 = vset.pattern.permute.xlu0 0
      %411 = vperm.xlu0 %410, %v329
      %v412 = vpop.permute.xlu0 %411
      %415 = vset.pattern.permute.xlu0 0
      %416 = vperm.xlu0 %415, %v330
      %v417 = vpop.permute.xlu0 %416
      %420 = vset.pattern.permute.xlu0 0
      %421 = vperm.xlu0 %420, %v331
      %v422 = vpop.permute.xlu0 %421
      %425 = vset.pattern.permute.xlu0 0
      %426 = vperm.xlu0 %425, %v332
      %v427 = vpop.permute.xlu0 %426
      %430 = vset.pattern.permute.xlu0 0
      %431 = vperm.xlu0 %430, %v333
      %v432 = vpop.permute.xlu0 %431
      %435 = vset.pattern.permute.xlu0 0
      %436 = vperm.xlu0 %435, %v334
      %v437 = vpop.permute.xlu0 %436
      %440 = vset.pattern.permute.xlu0 0
      %441 = vperm.xlu0 %440, %v335
      %v442 = vpop.permute.xlu0 %441
      %445 = vset.pattern.permute.xlu0 0
      %446 = vperm.xlu0 %445, %v336
      %v447 = vpop.permute.xlu0 %446
      %450 = vset.pattern.permute.xlu0 0
      %451 = vperm.xlu0 %450, %v337
      %v452 = vpop.permute.xlu0 %451
      %455 = vset.pattern.permute.xlu0 0
      %456 = vperm.xlu0 %455, %v338
      %v457 = vpop.permute.xlu0 %456
      %460 = vset.pattern.permute.xlu0 0
      %461 = vperm.xlu0 %460, %v339
      %v462 = vpop.permute.xlu0 %461
      %465 = vset.pattern.permute.xlu0 0
      %466 = vperm.xlu0 %465, %v340
      %v467 = vpop.permute.xlu0 %466
      %470 = vset.pattern.permute.xlu0 0
      %471 = vperm.xlu0 %470, %v341
      %v472 = vpop.permute.xlu0 %471
      %475 = vset.pattern.permute.xlu0 0
      %476 = vperm.xlu0 %475, %v342
      %v477 = vpop.permute.xlu0 %476
      %480 = vset.pattern.permute.xlu0 0
      %481 = vperm.xlu0 %480, %v343
      %v482 = vpop.permute.xlu0 %481
      %485 = vset.pattern.permute.xlu0 0
      %486 = vperm.xlu0 %485, %v344
      %v487 = vpop.permute.xlu0 %486
      %490 = vset.pattern.permute.xlu0 0
      %491 = vperm.xlu0 %490, %v345
      %v492 = vpop.permute.xlu0 %491
      %495 = vset.pattern.permute.xlu0 0
      %496 = vperm.xlu0 %495, %v346
      %v497 = vpop.permute.xlu0 %496
      %500 = vset.pattern.permute.xlu0 0
      %501 = vperm.xlu0 %500, %v347
      %v502 = vpop.permute.xlu0 %501
      %505 = vset.pattern.permute.xlu0 0
      %506 = vperm.xlu0 %505, %v348
      %v507 = vpop.permute.xlu0 %506
      %v509 = vmul.f32 %v285, %v352
      %v510 = vmul.f32 %v286, %v357
      %v511 = vmul.f32 %v287, %v362
      %v512 = vmul.f32 %v288, %v367
      %v513 = vmul.f32 %v289, %v372
      %v514 = vmul.f32 %v290, %v377
      %v515 = vmul.f32 %v291, %v382
      %v516 = vmul.f32 %v292, %v387
      %v517 = vmul.f32 %v293, %v392
      %v518 = vmul.f32 %v294, %v397
      %v519 = vmul.f32 %v295, %v402
      %v520 = vmul.f32 %v296, %v407
      %v521 = vmul.f32 %v297, %v412
      %v522 = vmul.f32 %v298, %v417
      %v523 = vmul.f32 %v299, %v422
      %v524 = vmul.f32 %v300, %v427
      %v525 = vmul.f32 %v301, %v432
      %v526 = vmul.f32 %v302, %v437
      %v527 = vmul.f32 %v303, %v442
      %v528 = vmul.f32 %v304, %v447
      %v529 = vmul.f32 %v305, %v452
      %v530 = vmul.f32 %v306, %v457
      %v531 = vmul.f32 %v307, %v462
      %v532 = vmul.f32 %v308, %v467
      %v533 = vmul.f32 %v309, %v472
      %v534 = vmul.f32 %v310, %v477
      %v535 = vmul.f32 %v311, %v482
      %v536 = vmul.f32 %v312, %v487
      %v537 = vmul.f32 %v313, %v492
      %v538 = vmul.f32 %v314, %v497
      %v539 = vmul.f32 %v315, %v502
      %v540 = vmul.f32 %v316, %v507
      %v541 = vld [vmem:[%s2] sm:$0xff]
      %v542 = vld [vmem:[%s2 + $0x8] sm:$0xff]
      %v543 = vld [vmem:[%s2 + $0x10] sm:$0xff]
      %v544 = vld [vmem:[%s2 + $0x18] sm:$0xff]
      %v545 = vld [vmem:[%s2 + $0x20] sm:$0xf]
      %v546 = vld [vmem:[%s269 + $0x1] sm:$0xff]
      %v547 = vld [vmem:[%s269 + $0x9] sm:$0xff]
      %v548 = vld [vmem:[%s269 + $0x11] sm:$0xff]
      %v549 = vld [vmem:[%s269 + $0x19] sm:$0xff]
      %v550 = vld [vmem:[%s269 + $0x21] sm:$0xff]
      %v551 = vld [vmem:[%s269 + $0x29] sm:$0xff]
      %v552 = vld [vmem:[%s269 + $0x31] sm:$0xff]
      %v553 = vld [vmem:[%s269 + $0x39] sm:$0xff]
      %v554 = vld [vmem:[%s269 + $0x41] sm:$0xff]
      %v555 = vld [vmem:[%s269 + $0x49] sm:$0xff]
      %v556 = vld [vmem:[%s269 + $0x51] sm:$0xff]
      %v557 = vld [vmem:[%s269 + $0x59] sm:$0xff]
      %v558 = vld [vmem:[%s269 + $0x61] sm:$0xff]
      %v559 = vld [vmem:[%s269 + $0x69] sm:$0xff]
      %v560 = vld [vmem:[%s269 + $0x71] sm:$0xff]
      %v561 = vld [vmem:[%s269 + $0x79] sm:$0xff]
      %v562 = vld [vmem:[%s269 + $0x81] sm:$0xff]
      %v563 = vld [vmem:[%s269 + $0x89] sm:$0xff]
      %v564 = vld [vmem:[%s269 + $0x91] sm:$0xff]
      %v565 = vld [vmem:[%s269 + $0x99] sm:$0xff]
      %v566 = vld [vmem:[%s269 + $0xa1] sm:$0xff]
      %v567 = vld [vmem:[%s269 + $0xa9] sm:$0xff]
      %v568 = vld [vmem:[%s269 + $0xb1] sm:$0xff]
      %v569 = vld [vmem:[%s269 + $0xb9] sm:$0xff]
      %v570 = vld [vmem:[%s269 + $0xc1] sm:$0xff]
      %v571 = vld [vmem:[%s269 + $0xc9] sm:$0xff]
      %v572 = vld [vmem:[%s269 + $0xd1] sm:$0xff]
      %v573 = vld [vmem:[%s269 + $0xd9] sm:$0xff]
      %v574 = vld [vmem:[%s269 + $0xe1] sm:$0xff]
      %v575 = vld [vmem:[%s269 + $0xe9] sm:$0xff]
      %v576 = vld [vmem:[%s269 + $0xf1] sm:$0xff]
      %v577 = vld [vmem:[%s269 + $0xf9] sm:$0xff]
      %s578 = scalar_lea.vmem %s2, 40
      %v579 = vld [vmem:[%s578] sm:$0xff]
      %v580 = vld [vmem:[%s578 + $0x8] sm:$0xff]
      %v581 = vld [vmem:[%s578 + $0x10] sm:$0xff]
      %v582 = vld [vmem:[%s578 + $0x18] sm:$0xff]
      %v583 = vld [vmem:[%s578 + $0x20] sm:$0xf]
      %vm584 = vcmask 293888
      %v586 = vsel %vm584, %v546, 0
      %v589 = vsel %vm584, %v547, 0
      %v592 = vsel %vm584, %v548, 0
      %v595 = vsel %vm584, %v549, 0
      %v598 = vsel %vm584, %v550, 0
      %v601 = vsel %vm584, %v551, 0
      %v604 = vsel %vm584, %v552, 0
      %v607 = vsel %vm584, %v553, 0
      %v610 = vsel %vm584, %v554, 0
      %v613 = vsel %vm584, %v555, 0
      %v616 = vsel %vm584, %v556, 0
      %v619 = vsel %vm584, %v557, 0
      %v622 = vsel %vm584, %v558, 0
      %v625 = vsel %vm584, %v559, 0
      %v628 = vsel %vm584, %v560, 0
      %v631 = vsel %vm584, %v561, 0
      %v634 = vsel %vm584, %v562, 0
      %v637 = vsel %vm584, %v563, 0
      %v640 = vsel %vm584, %v564, 0
      %v643 = vsel %vm584, %v565, 0
      %v646 = vsel %vm584, %v566, 0
      %v649 = vsel %vm584, %v567, 0
      %v652 = vsel %vm584, %v568, 0
      %v655 = vsel %vm584, %v569, 0
      %v658 = vsel %vm584, %v570, 0
      %v661 = vsel %vm584, %v571, 0
      %v664 = vsel %vm584, %v572, 0
      %v667 = vsel %vm584, %v573, 0
      %v670 = vsel %vm584, %v574, 0
      %v673 = vsel %vm584, %v575, 0
      %v676 = vsel %vm584, %v576, 0
      %v679 = vsel %vm584, %v577, 0
      %vm681 = vcmask 1043456
      %v683 = vsel %vm681, %v583, 0
      %685 = vmatprep.subr.mxu0 0.0
      %686 = vmatpush1.msra.mxu0 %v579
      %687 = vmatprep.subr.mxu0 0.0
      %688 = vmatpush1.msra.mxu0 %v580
      %689 = vmatprep.subr.mxu0 0.0
      %690 = vmatpush1.msra.mxu0 %v581
      %691 = vmatprep.subr.mxu0 0.0
      %692 = vmatpush1.msra.mxu0 %v582
      %693 = vmatprep.subr.mxu0 0.0
      %694 = vmatpush1.msra.mxu0 %v683
      %695 = vmatprep.subr.mxu0 0.0
      %696 = vmatpush1.msra.mxu0 0.0
      %697 = vmatprep.subr.mxu0 0.0
      %698 = vmatpush1.msra.mxu0 0.0
      %699 = vmatprep.subr.mxu0 0.0
      %700 = vmatpush1.msra.mxu0 0.0
      %701 = vmatprep.subr.mxu0 0.0
      %702 = vmatpush1.msra.mxu0 0.0
      %703 = vmatprep.subr.mxu0 0.0
      %704 = vmatpush1.msra.mxu0 0.0
      %705 = vmatprep.subr.mxu0 0.0
      %706 = vmatpush1.msra.mxu0 0.0
      %707 = vmatprep.subr.mxu0 0.0
      %708 = vmatpush1.msra.mxu0 0.0
      %709 = vmatprep.subr.mxu0 0.0
      %710 = vmatpush1.msra.mxu0 0.0
      %711 = vmatprep.subr.mxu0 0.0
      %712 = vmatpush1.msra.mxu0 0.0
      %713 = vmatprep.subr.mxu0 0.0
      %714 = vmatpush1.msra.mxu0 0.0
      %715 = vmatprep.subr.mxu0 0.0
      %716 = vmatpush1.msra.mxu0 0.0
      %717 = vmatprep.subr.mxu0 0.0
      %718 = vmatpush1.msra.mxu0 0.0
      %719 = vmatprep.subr.mxu0 0.0
      %720 = vmatpush1.msra.mxu0 0.0
      %721 = vmatprep.subr.mxu0 0.0
      %722 = vmatpush1.msra.mxu0 0.0
      %723 = vmatprep.subr.mxu0 0.0
      %724 = vmatpush1.msra.mxu0 0.0
      %725 = vmatprep.subr.mxu0 0.0
      %726 = vmatpush1.msra.mxu0 0.0
      %727 = vmatprep.subr.mxu0 0.0
      %728 = vmatpush1.msra.mxu0 0.0
      %729 = vmatprep.subr.mxu0 0.0
      %730 = vmatpush1.msra.mxu0 0.0
      %731 = vmatprep.subr.mxu0 0.0
      %732 = vmatpush1.msra.mxu0 0.0
      %733 = vmatprep.subr.mxu0 0.0
      %734 = vmatpush1.msra.mxu0 0.0
      %735 = vmatprep.subr.mxu0 0.0
      %736 = vmatpush1.msra.mxu0 0.0
      %737 = vmatprep.subr.mxu0 0.0
      %738 = vmatpush1.msra.mxu0 0.0
      %739 = vmatprep.subr.mxu0 0.0
      %740 = vmatpush1.msra.mxu0 0.0
      %741 = vmatprep.subr.mxu0 0.0
      %742 = vmatpush1.msra.mxu0 0.0
      %743 = vmatprep.subr.mxu0 0.0
      %744 = vmatpush1.msra.mxu0 0.0
      %745 = vmatprep.subr.mxu0 0.0
      %746 = vmatpush1.msra.mxu0 0.0
      %747 = vmatprep.subr.mxu0 0.0
      %748 = vmatpush1.msra.mxu0 0.0
      %749 = vmatprep.mubr.f32.mxu0 0.0
      %750 = vmatmul.mubr.f32.gmra.mrb[0].mxu0 %v586
      %v751 = vpop.f32.mrb[0].mxu0
      %v752 = vadd.f32 0.0, %v751
      %v753 = vpop.f32.mrb[0].mxu0
      %754 = vmatprep.mubr.f32.mxu0 0.0
      %755 = vmatmul.mubr.f32.gmra.mrb[0].mxu0 %v589
      %v756 = vpop.f32.mrb[0].mxu0
      %v757 = vadd.f32 0.0, %v756
      %v758 = vpop.f32.mrb[0].mxu0
      %759 = vmatprep.mubr.f32.mxu0 0.0
      %760 = vmatmul.mubr.f32.gmra.mrb[0].mxu0 %v592
      %v761 = vpop.f32.mrb[0].mxu0
      %v762 = vadd.f32 0.0, %v761
      %v763 = vpop.f32.mrb[0].mxu0
      %764 = vmatprep.mubr.f32.mxu0 0.0
      %765 = vmatmul.mubr.f32.gmra.mrb[0].mxu0 %v595
      %v766 = vpop.f32.mrb[0].mxu0
      %v767 = vadd.f32 0.0, %v766
      %v768 = vpop.f32.mrb[0].mxu0
      %769 = vmatprep.mubr.f32.mxu0 0.0
      %770 = vmatmul.mubr.f32.gmra.mrb[0].mxu0 %v598
      %v771 = vpop.f32.mrb[0].mxu0
      %v772 = vadd.f32 0.0, %v771
      %v773 = vpop.f32.mrb[0].mxu0
      %774 = vmatprep.mubr.f32.mxu0 0.0
      %775 = vmatmul.mubr.f32.gmra.mrb[0].mxu0 %v601
      %v776 = vpop.f32.mrb[0].mxu0
      %v777 = vadd.f32 0.0, %v776
      %v778 = vpop.f32.mrb[0].mxu0
      %779 = vmatprep.mubr.f32.mxu0 0.0
      %780 = vmatmul.mubr.f32.gmra.mrb[0].mxu0 %v604
      %v781 = vpop.f32.mrb[0].mxu0
      %v782 = vadd.f32 0.0, %v781
      %v783 = vpop.f32.mrb[0].mxu0
      %784 = vmatprep.mubr.f32.mxu0 0.0
      %785 = vmatmul.mubr.f32.gmra.mrb[0].mxu0 %v607
      %v786 = vpop.f32.mrb[0].mxu0
      %v787 = vadd.f32 0.0, %v786
      %v788 = vpop.f32.mrb[0].mxu0
      %789 = vmatprep.mubr.f32.mxu0 0.0
      %790 = vmatmul.mubr.f32.gmra.mrb[0].mxu0 %v610
      %v791 = vpop.f32.mrb[0].mxu0
      %v792 = vadd.f32 0.0, %v791
      %v793 = vpop.f32.mrb[0].mxu0
      %794 = vmatprep.mubr.f32.mxu0 0.0
      %795 = vmatmul.mubr.f32.gmra.mrb[0].mxu0 %v613
      %v796 = vpop.f32.mrb[0].mxu0
      %v797 = vadd.f32 0.0, %v796
      %v798 = vpop.f32.mrb[0].mxu0
      %799 = vmatprep.mubr.f32.mxu0 0.0
      %800 = vmatmul.mubr.f32.gmra.mrb[0].mxu0 %v616
      %v801 = vpop.f32.mrb[0].mxu0
      %v802 = vadd.f32 0.0, %v801
      %v803 = vpop.f32.mrb[0].mxu0
      %804 = vmatprep.mubr.f32.mxu0 0.0
      %805 = vmatmul.mubr.f32.gmra.mrb[0].mxu0 %v619
      %v806 = vpop.f32.mrb[0].mxu0
      %v807 = vadd.f32 0.0, %v806
      %v808 = vpop.f32.mrb[0].mxu0
      %809 = vmatprep.mubr.f32.mxu0 0.0
      %810 = vmatmul.mubr.f32.gmra.mrb[0].mxu0 %v622
      %v811 = vpop.f32.mrb[0].mxu0
      %v812 = vadd.f32 0.0, %v811
      %v813 = vpop.f32.mrb[0].mxu0
      %814 = vmatprep.mubr.f32.mxu0 0.0
      %815 = vmatmul.mubr.f32.gmra.mrb[0].mxu0 %v625
      %v816 = vpop.f32.mrb[0].mxu0
      %v817 = vadd.f32 0.0, %v816
      %v818 = vpop.f32.mrb[0].mxu0
      %819 = vmatprep.mubr.f32.mxu0 0.0
      %820 = vmatmul.mubr.f32.gmra.mrb[0].mxu0 %v628
      %v821 = vpop.f32.mrb[0].mxu0
      %v822 = vadd.f32 0.0, %v821
      %v823 = vpop.f32.mrb[0].mxu0
      %824 = vmatprep.mubr.f32.mxu0 0.0
      %825 = vmatmul.mubr.f32.gmra.mrb[0].mxu0 %v631
      %v826 = vpop.f32.mrb[0].mxu0
      %v827 = vadd.f32 0.0, %v826
      %v828 = vpop.f32.mrb[0].mxu0
      %829 = vmatprep.mubr.f32.mxu0 0.0
      %830 = vmatmul.mubr.f32.gmra.mrb[0].mxu0 %v634
      %v831 = vpop.f32.mrb[0].mxu0
      %v832 = vadd.f32 0.0, %v831
      %v833 = vpop.f32.mrb[0].mxu0
      %834 = vmatprep.mubr.f32.mxu0 0.0
      %835 = vmatmul.mubr.f32.gmra.mrb[0].mxu0 %v637
      %v836 = vpop.f32.mrb[0].mxu0
      %v837 = vadd.f32 0.0, %v836
      %v838 = vpop.f32.mrb[0].mxu0
      %839 = vmatprep.mubr.f32.mxu0 0.0
      %840 = vmatmul.mubr.f32.gmra.mrb[0].mxu0 %v640
      %v841 = vpop.f32.mrb[0].mxu0
      %v842 = vadd.f32 0.0, %v841
      %v843 = vpop.f32.mrb[0].mxu0
      %844 = vmatprep.mubr.f32.mxu0 0.0
      %845 = vmatmul.mubr.f32.gmra.mrb[0].mxu0 %v643
      %v846 = vpop.f32.mrb[0].mxu0
      %v847 = vadd.f32 0.0, %v846
      %v848 = vpop.f32.mrb[0].mxu0
      %849 = vmatprep.mubr.f32.mxu0 0.0
      %850 = vmatmul.mubr.f32.gmra.mrb[0].mxu0 %v646
      %v851 = vpop.f32.mrb[0].mxu0
      %v852 = vadd.f32 0.0, %v851
      %v853 = vpop.f32.mrb[0].mxu0
      %854 = vmatprep.mubr.f32.mxu0 0.0
      %855 = vmatmul.mubr.f32.gmra.mrb[0].mxu0 %v649
      %v856 = vpop.f32.mrb[0].mxu0
      %v857 = vadd.f32 0.0, %v856
      %v858 = vpop.f32.mrb[0].mxu0
      %859 = vmatprep.mubr.f32.mxu0 0.0
      %860 = vmatmul.mubr.f32.gmra.mrb[0].mxu0 %v652
      %v861 = vpop.f32.mrb[0].mxu0
      %v862 = vadd.f32 0.0, %v861
      %v863 = vpop.f32.mrb[0].mxu0
      %864 = vmatprep.mubr.f32.mxu0 0.0
      %865 = vmatmul.mubr.f32.gmra.mrb[0].mxu0 %v655
      %v866 = vpop.f32.mrb[0].mxu0
      %v867 = vadd.f32 0.0, %v866
      %v868 = vpop.f32.mrb[0].mxu0
      %869 = vmatprep.mubr.f32.mxu0 0.0
      %870 = vmatmul.mubr.f32.gmra.mrb[0].mxu0 %v658
      %v871 = vpop.f32.mrb[0].mxu0
      %v872 = vadd.f32 0.0, %v871
      %v873 = vpop.f32.mrb[0].mxu0
      %874 = vmatprep.mubr.f32.mxu0 0.0
      %875 = vmatmul.mubr.f32.gmra.mrb[0].mxu0 %v661
      %v876 = vpop.f32.mrb[0].mxu0
      %v877 = vadd.f32 0.0, %v876
      %v878 = vpop.f32.mrb[0].mxu0
      %879 = vmatprep.mubr.f32.mxu0 0.0
      %880 = vmatmul.mubr.f32.gmra.mrb[0].mxu0 %v664
      %v881 = vpop.f32.mrb[0].mxu0
      %v882 = vadd.f32 0.0, %v881
      %v883 = vpop.f32.mrb[0].mxu0
      %884 = vmatprep.mubr.f32.mxu0 0.0
      %885 = vmatmul.mubr.f32.gmra.mrb[0].mxu0 %v667
      %v886 = vpop.f32.mrb[0].mxu0
      %v887 = vadd.f32 0.0, %v886
      %v888 = vpop.f32.mrb[0].mxu0
      %889 = vmatprep.mubr.f32.mxu0 0.0
      %890 = vmatmul.mubr.f32.gmra.mrb[0].mxu0 %v670
      %v891 = vpop.f32.mrb[0].mxu0
      %v892 = vadd.f32 0.0, %v891
      %v893 = vpop.f32.mrb[0].mxu0
      %894 = vmatprep.mubr.f32.mxu0 0.0
      %895 = vmatmul.mubr.f32.gmra.mrb[0].mxu0 %v673
      %v896 = vpop.f32.mrb[0].mxu0
      %v897 = vadd.f32 0.0, %v896
      %v898 = vpop.f32.mrb[0].mxu0
      %899 = vmatprep.mubr.f32.mxu0 0.0
      %900 = vmatmul.mubr.f32.gmra.mrb[0].mxu0 %v676
      %v901 = vpop.f32.mrb[0].mxu0
      %v902 = vadd.f32 0.0, %v901
      %v903 = vpop.f32.mrb[0].mxu0
      %904 = vmatprep.mubr.f32.mxu0 0.0
      %905 = vmatmul.mubr.f32.gmra.mrb[0].mxu0 %v679
      %v906 = vpop.f32.mrb[0].mxu0
      %v907 = vadd.f32 0.0, %v906
      %v908 = vpop.f32.mrb[0].mxu0
      %909 = vdwg.mxu0
      %v911 = vsel %vm584, %v509, 0
      %v914 = vsel %vm584, %v510, 0
      %v917 = vsel %vm584, %v511, 0
      %v920 = vsel %vm584, %v512, 0
      %v923 = vsel %vm584, %v513, 0
      %v926 = vsel %vm584, %v514, 0
      %v929 = vsel %vm584, %v515, 0
      %v932 = vsel %vm584, %v516, 0
      %v935 = vsel %vm584, %v517, 0
      %v938 = vsel %vm584, %v518, 0
      %v941 = vsel %vm584, %v519, 0
      %v944 = vsel %vm584, %v520, 0
      %v947 = vsel %vm584, %v521, 0
      %v950 = vsel %vm584, %v522, 0
      %v953 = vsel %vm584, %v523, 0
      %v956 = vsel %vm584, %v524, 0
      %v959 = vsel %vm584, %v525, 0
      %v962 = vsel %vm584, %v526, 0
      %v965 = vsel %vm584, %v527, 0
      %v968 = vsel %vm584, %v528, 0
      %v971 = vsel %vm584, %v529, 0
      %v974 = vsel %vm584, %v530, 0
      %v977 = vsel %vm584, %v531, 0
      %v980 = vsel %vm584, %v532, 0
      %v983 = vsel %vm584, %v533, 0
      %v986 = vsel %vm584, %v534, 0
      %v989 = vsel %vm584, %v535, 0
      %v992 = vsel %vm584, %v536, 0
      %v995 = vsel %vm584, %v537, 0
      %v998 = vsel %vm584, %v538, 0
      %v1001 = vsel %vm584, %v539, 0
      %v1004 = vsel %vm584, %v540, 0
      %v1007 = vsel %vm681, %v545, 0
      %1009 = vmatprep.subr.mxu0 0.0
      %1010 = vmatpush1.msra.mxu0 %v541
      %1011 = vmatprep.subr.mxu0 0.0
      %1012 = vmatpush1.msra.mxu0 %v542
      %1013 = vmatprep.subr.mxu0 0.0
      %1014 = vmatpush1.msra.mxu0 %v543
      %1015 = vmatprep.subr.mxu0 0.0
      %1016 = vmatpush1.msra.mxu0 %v544
      %1017 = vmatprep.subr.mxu0 0.0
      %1018 = vmatpush1.msra.mxu0 %v1007
      %1019 = vmatprep.subr.mxu0 0.0
      %1020 = vmatpush1.msra.mxu0 0.0
      %1021 = vmatprep.subr.mxu0 0.0
      %1022 = vmatpush1.msra.mxu0 0.0
      %1023 = vmatprep.subr.mxu0 0.0
      %1024 = vmatpush1.msra.mxu0 0.0
      %1025 = vmatprep.subr.mxu0 0.0
      %1026 = vmatpush1.msra.mxu0 0.0
      %1027 = vmatprep.subr.mxu0 0.0
      %1028 = vmatpush1.msra.mxu0 0.0
      %1029 = vmatprep.subr.mxu0 0.0
      %1030 = vmatpush1.msra.mxu0 0.0
      %1031 = vmatprep.subr.mxu0 0.0
      %1032 = vmatpush1.msra.mxu0 0.0
      %1033 = vmatprep.subr.mxu0 0.0
      %1034 = vmatpush1.msra.mxu0 0.0
      %1035 = vmatprep.subr.mxu0 0.0
      %1036 = vmatpush1.msra.mxu0 0.0
      %1037 = vmatprep.subr.mxu0 0.0
      %1038 = vmatpush1.msra.mxu0 0.0
      %1039 = vmatprep.subr.mxu0 0.0
      %1040 = vmatpush1.msra.mxu0 0.0
      %1041 = vmatprep.subr.mxu0 0.0
      %1042 = vmatpush1.msra.mxu0 0.0
      %1043 = vmatprep.subr.mxu0 0.0
      %1044 = vmatpush1.msra.mxu0 0.0
      %1045 = vmatprep.subr.mxu0 0.0
      %1046 = vmatpush1.msra.mxu0 0.0
      %1047 = vmatprep.subr.mxu0 0.0
      %1048 = vmatpush1.msra.mxu0 0.0
      %1049 = vmatprep.subr.mxu0 0.0
      %1050 = vmatpush1.msra.mxu0 0.0
      %1051 = vmatprep.subr.mxu0 0.0
      %1052 = vmatpush1.msra.mxu0 0.0
      %1053 = vmatprep.subr.mxu0 0.0
      %1054 = vmatpush1.msra.mxu0 0.0
      %1055 = vmatprep.subr.mxu0 0.0
      %1056 = vmatpush1.msra.mxu0 0.0
      %1057 = vmatprep.subr.mxu0 0.0
      %1058 = vmatpush1.msra.mxu0 0.0
      %1059 = vmatprep.subr.mxu0 0.0
      %1060 = vmatpush1.msra.mxu0 0.0
      %1061 = vmatprep.subr.mxu0 0.0
      %1062 = vmatpush1.msra.mxu0 0.0
      %1063 = vmatprep.subr.mxu0 0.0
      %1064 = vmatpush1.msra.mxu0 0.0
      %1065 = vmatprep.subr.mxu0 0.0
      %1066 = vmatpush1.msra.mxu0 0.0
      %1067 = vmatprep.subr.mxu0 0.0
      %1068 = vmatpush1.msra.mxu0 0.0
      %1069 = vmatprep.subr.mxu0 0.0
      %1070 = vmatpush1.msra.mxu0 0.0
      %1071 = vmatprep.subr.mxu0 0.0
      %1072 = vmatpush1.msra.mxu0 0.0
      %1073 = vmatprep.mubr.f32.mxu0 0.0
      %1074 = vmatmul.mubr.f32.gmra.mrb[0].mxu0 %v911
      %v1075 = vpop.f32.mrb[0].mxu0
      %v1076 = vadd.f32 %v752, %v1075
      %v1077 = vpop.f32.mrb[0].mxu0
      %1078 = vmatprep.mubr.f32.mxu0 0.0
      %1079 = vmatmul.mubr.f32.gmra.mrb[0].mxu0 %v914
      %v1080 = vpop.f32.mrb[0].mxu0
      %v1081 = vadd.f32 %v757, %v1080
      %v1082 = vpop.f32.mrb[0].mxu0
      %1083 = vmatprep.mubr.f32.mxu0 0.0
      %1084 = vmatmul.mubr.f32.gmra.mrb[0].mxu0 %v917
      %v1085 = vpop.f32.mrb[0].mxu0
      %v1086 = vadd.f32 %v762, %v1085
      %v1087 = vpop.f32.mrb[0].mxu0
      %1088 = vmatprep.mubr.f32.mxu0 0.0
      %1089 = vmatmul.mubr.f32.gmra.mrb[0].mxu0 %v920
      %v1090 = vpop.f32.mrb[0].mxu0
      %v1091 = vadd.f32 %v767, %v1090
      %v1092 = vpop.f32.mrb[0].mxu0
      %1093 = vmatprep.mubr.f32.mxu0 0.0
      %1094 = vmatmul.mubr.f32.gmra.mrb[0].mxu0 %v923
      %v1095 = vpop.f32.mrb[0].mxu0
      %v1096 = vadd.f32 %v772, %v1095
      %v1097 = vpop.f32.mrb[0].mxu0
      %1098 = vmatprep.mubr.f32.mxu0 0.0
      %1099 = vmatmul.mubr.f32.gmra.mrb[0].mxu0 %v926
      %v1100 = vpop.f32.mrb[0].mxu0
      %v1101 = vadd.f32 %v777, %v1100
      %v1102 = vpop.f32.mrb[0].mxu0
      %1103 = vmatprep.mubr.f32.mxu0 0.0
      %1104 = vmatmul.mubr.f32.gmra.mrb[0].mxu0 %v929
      %v1105 = vpop.f32.mrb[0].mxu0
      %v1106 = vadd.f32 %v782, %v1105
      %v1107 = vpop.f32.mrb[0].mxu0
      %1108 = vmatprep.mubr.f32.mxu0 0.0
      %1109 = vmatmul.mubr.f32.gmra.mrb[0].mxu0 %v932
      %v1110 = vpop.f32.mrb[0].mxu0
      %v1111 = vadd.f32 %v787, %v1110
      %v1112 = vpop.f32.mrb[0].mxu0
      %1113 = vmatprep.mubr.f32.mxu0 0.0
      %1114 = vmatmul.mubr.f32.gmra.mrb[0].mxu0 %v935
      %v1115 = vpop.f32.mrb[0].mxu0
      %v1116 = vadd.f32 %v792, %v1115
      %v1117 = vpop.f32.mrb[0].mxu0
      %1118 = vmatprep.mubr.f32.mxu0 0.0
      %1119 = vmatmul.mubr.f32.gmra.mrb[0].mxu0 %v938
      %v1120 = vpop.f32.mrb[0].mxu0
      %v1121 = vadd.f32 %v797, %v1120
      %v1122 = vpop.f32.mrb[0].mxu0
      %1123 = vmatprep.mubr.f32.mxu0 0.0
      %1124 = vmatmul.mubr.f32.gmra.mrb[0].mxu0 %v941
      %v1125 = vpop.f32.mrb[0].mxu0
      %v1126 = vadd.f32 %v802, %v1125
      %v1127 = vpop.f32.mrb[0].mxu0
      %1128 = vmatprep.mubr.f32.mxu0 0.0
      %1129 = vmatmul.mubr.f32.gmra.mrb[0].mxu0 %v944
      %v1130 = vpop.f32.mrb[0].mxu0
      %v1131 = vadd.f32 %v807, %v1130
      %v1132 = vpop.f32.mrb[0].mxu0
      %1133 = vmatprep.mubr.f32.mxu0 0.0
      %1134 = vmatmul.mubr.f32.gmra.mrb[0].mxu0 %v947
      %v1135 = vpop.f32.mrb[0].mxu0
      %v1136 = vadd.f32 %v812, %v1135
      %v1137 = vpop.f32.mrb[0].mxu0
      %1138 = vmatprep.mubr.f32.mxu0 0.0
      %1139 = vmatmul.mubr.f32.gmra.mrb[0].mxu0 %v950
      %v1140 = vpop.f32.mrb[0].mxu0
      %v1141 = vadd.f32 %v817, %v1140
      %v1142 = vpop.f32.mrb[0].mxu0
      %1143 = vmatprep.mubr.f32.mxu0 0.0
      %1144 = vmatmul.mubr.f32.gmra.mrb[0].mxu0 %v953
      %v1145 = vpop.f32.mrb[0].mxu0
      %v1146 = vadd.f32 %v822, %v1145
      %v1147 = vpop.f32.mrb[0].mxu0
      %1148 = vmatprep.mubr.f32.mxu0 0.0
      %1149 = vmatmul.mubr.f32.gmra.mrb[0].mxu0 %v956
      %v1150 = vpop.f32.mrb[0].mxu0
      %v1151 = vadd.f32 %v827, %v1150
      %v1152 = vpop.f32.mrb[0].mxu0
      %1153 = vmatprep.mubr.f32.mxu0 0.0
      %1154 = vmatmul.mubr.f32.gmra.mrb[0].mxu0 %v959
      %v1155 = vpop.f32.mrb[0].mxu0
      %v1156 = vadd.f32 %v832, %v1155
      %v1157 = vpop.f32.mrb[0].mxu0
      %1158 = vmatprep.mubr.f32.mxu0 0.0
      %1159 = vmatmul.mubr.f32.gmra.mrb[0].mxu0 %v962
      %v1160 = vpop.f32.mrb[0].mxu0
      %v1161 = vadd.f32 %v837, %v1160
      %v1162 = vpop.f32.mrb[0].mxu0
      %1163 = vmatprep.mubr.f32.mxu0 0.0
      %1164 = vmatmul.mubr.f32.gmra.mrb[0].mxu0 %v965
      %v1165 = vpop.f32.mrb[0].mxu0
      %v1166 = vadd.f32 %v842, %v1165
      %v1167 = vpop.f32.mrb[0].mxu0
      %1168 = vmatprep.mubr.f32.mxu0 0.0
      %1169 = vmatmul.mubr.f32.gmra.mrb[0].mxu0 %v968
      %v1170 = vpop.f32.mrb[0].mxu0
      %v1171 = vadd.f32 %v847, %v1170
      %v1172 = vpop.f32.mrb[0].mxu0
      %1173 = vmatprep.mubr.f32.mxu0 0.0
      %1174 = vmatmul.mubr.f32.gmra.mrb[0].mxu0 %v971
      %v1175 = vpop.f32.mrb[0].mxu0
      %v1176 = vadd.f32 %v852, %v1175
      %v1177 = vpop.f32.mrb[0].mxu0
      %1178 = vmatprep.mubr.f32.mxu0 0.0
      %1179 = vmatmul.mubr.f32.gmra.mrb[0].mxu0 %v974
      %v1180 = vpop.f32.mrb[0].mxu0
      %v1181 = vadd.f32 %v857, %v1180
      %v1182 = vpop.f32.mrb[0].mxu0
      %1183 = vmatprep.mubr.f32.mxu0 0.0
      %1184 = vmatmul.mubr.f32.gmra.mrb[0].mxu0 %v977
      %v1185 = vpop.f32.mrb[0].mxu0
      %v1186 = vadd.f32 %v862, %v1185
      %v1187 = vpop.f32.mrb[0].mxu0
      %1188 = vmatprep.mubr.f32.mxu0 0.0
      %1189 = vmatmul.mubr.f32.gmra.mrb[0].mxu0 %v980
      %v1190 = vpop.f32.mrb[0].mxu0
      %v1191 = vadd.f32 %v867, %v1190
      %v1192 = vpop.f32.mrb[0].mxu0
      %1193 = vmatprep.mubr.f32.mxu0 0.0
      %1194 = vmatmul.mubr.f32.gmra.mrb[0].mxu0 %v983
      %v1195 = vpop.f32.mrb[0].mxu0
      %v1196 = vadd.f32 %v872, %v1195
      %v1197 = vpop.f32.mrb[0].mxu0
      %1198 = vmatprep.mubr.f32.mxu0 0.0
      %1199 = vmatmul.mubr.f32.gmra.mrb[0].mxu0 %v986
      %v1200 = vpop.f32.mrb[0].mxu0
      %v1201 = vadd.f32 %v877, %v1200
      %v1202 = vpop.f32.mrb[0].mxu0
      %1203 = vmatprep.mubr.f32.mxu0 0.0
      %1204 = vmatmul.mubr.f32.gmra.mrb[0].mxu0 %v989
      %v1205 = vpop.f32.mrb[0].mxu0
      %v1206 = vadd.f32 %v882, %v1205
      %v1207 = vpop.f32.mrb[0].mxu0
      %1208 = vmatprep.mubr.f32.mxu0 0.0
      %1209 = vmatmul.mubr.f32.gmra.mrb[0].mxu0 %v992
      %v1210 = vpop.f32.mrb[0].mxu0
      %v1211 = vadd.f32 %v887, %v1210
      %v1212 = vpop.f32.mrb[0].mxu0
      %1213 = vmatprep.mubr.f32.mxu0 0.0
      %1214 = vmatmul.mubr.f32.gmra.mrb[0].mxu0 %v995
      %v1215 = vpop.f32.mrb[0].mxu0
      %v1216 = vadd.f32 %v892, %v1215
      %v1217 = vpop.f32.mrb[0].mxu0
      %1218 = vmatprep.mubr.f32.mxu0 0.0
      %1219 = vmatmul.mubr.f32.gmra.mrb[0].mxu0 %v998
      %v1220 = vpop.f32.mrb[0].mxu0
      %v1221 = vadd.f32 %v897, %v1220
      %v1222 = vpop.f32.mrb[0].mxu0
      %1223 = vmatprep.mubr.f32.mxu0 0.0
      %1224 = vmatmul.mubr.f32.gmra.mrb[0].mxu0 %v1001
      %v1225 = vpop.f32.mrb[0].mxu0
      %v1226 = vadd.f32 %v902, %v1225
      %v1227 = vpop.f32.mrb[0].mxu0
      %1228 = vmatprep.mubr.f32.mxu0 0.0
      %1229 = vmatmul.mubr.f32.gmra.mrb[0].mxu0 %v1004
      %v1230 = vpop.f32.mrb[0].mxu0
      %v1231 = vadd.f32 %v907, %v1230
      %v1232 = vpop.f32.mrb[0].mxu0
      %1233 = vdwg.mxu0
      %v1234 = vld [vmem:[%s269 + $0x2] sm:$0xff]
      %v1235 = vld [vmem:[%s269 + $0xa] sm:$0xff]
      %v1236 = vld [vmem:[%s269 + $0x12] sm:$0xff]
      %v1237 = vld [vmem:[%s269 + $0x1a] sm:$0xff]
      %v1238 = vld [vmem:[%s269 + $0x22] sm:$0xff]
      %v1239 = vld [vmem:[%s269 + $0x2a] sm:$0xff]
      %v1240 = vld [vmem:[%s269 + $0x32] sm:$0xff]
      %v1241 = vld [vmem:[%s269 + $0x3a] sm:$0xff]
      %v1242 = vld [vmem:[%s269 + $0x42] sm:$0xff]
      %v1243 = vld [vmem:[%s269 + $0x4a] sm:$0xff]
      %v1244 = vld [vmem:[%s269 + $0x52] sm:$0xff]
      %v1245 = vld [vmem:[%s269 + $0x5a] sm:$0xff]
      %v1246 = vld [vmem:[%s269 + $0x62] sm:$0xff]
      %v1247 = vld [vmem:[%s269 + $0x6a] sm:$0xff]
      %v1248 = vld [vmem:[%s269 + $0x72] sm:$0xff]
      %v1249 = vld [vmem:[%s269 + $0x7a] sm:$0xff]
      %v1250 = vld [vmem:[%s269 + $0x82] sm:$0xff]
      %v1251 = vld [vmem:[%s269 + $0x8a] sm:$0xff]
      %v1252 = vld [vmem:[%s269 + $0x92] sm:$0xff]
      %v1253 = vld [vmem:[%s269 + $0x9a] sm:$0xff]
      %v1254 = vld [vmem:[%s269 + $0xa2] sm:$0xff]
      %v1255 = vld [vmem:[%s269 + $0xaa] sm:$0xff]
      %v1256 = vld [vmem:[%s269 + $0xb2] sm:$0xff]
      %v1257 = vld [vmem:[%s269 + $0xba] sm:$0xff]
      %v1258 = vld [vmem:[%s269 + $0xc2] sm:$0xff]
      %v1259 = vld [vmem:[%s269 + $0xca] sm:$0xff]
      %v1260 = vld [vmem:[%s269 + $0xd2] sm:$0xff]
      %v1261 = vld [vmem:[%s269 + $0xda] sm:$0xff]
      %v1262 = vld [vmem:[%s269 + $0xe2] sm:$0xff]
      %v1263 = vld [vmem:[%s269 + $0xea] sm:$0xff]
      %v1264 = vld [vmem:[%s269 + $0xf2] sm:$0xff]
      %v1265 = vld [vmem:[%s269 + $0xfa] sm:$0xff]
      %s1266 = scalar_lea.vmem %s4, 512
      %v1267 = vld [vmem:[%s1266] sm:$0xff]
      %v1268 = vld [vmem:[%s1266 + $0x8] sm:$0xff]
      %v1269 = vld [vmem:[%s1266 + $0x10] sm:$0xff]
      %v1270 = vld [vmem:[%s1266 + $0x18] sm:$0xff]
      %v1271 = vld [vmem:[%s1266 + $0x20] sm:$0xff]
      %v1272 = vld [vmem:[%s1266 + $0x28] sm:$0xff]
      %v1273 = vld [vmem:[%s1266 + $0x30] sm:$0xff]
      %v1274 = vld [vmem:[%s1266 + $0x38] sm:$0xff]
      %v1275 = vld [vmem:[%s1266 + $0x40] sm:$0xff]
      %v1276 = vld [vmem:[%s1266 + $0x48] sm:$0xff]
      %v1277 = vld [vmem:[%s1266 + $0x50] sm:$0xff]
      %v1278 = vld [vmem:[%s1266 + $0x58] sm:$0xff]
      %v1279 = vld [vmem:[%s1266 + $0x60] sm:$0xff]
      %v1280 = vld [vmem:[%s1266 + $0x68] sm:$0xff]
      %v1281 = vld [vmem:[%s1266 + $0x70] sm:$0xff]
      %v1282 = vld [vmem:[%s1266 + $0x78] sm:$0xff]
      %v1283 = vld [vmem:[%s1266 + $0x80] sm:$0xff]
      %v1284 = vld [vmem:[%s1266 + $0x88] sm:$0xff]
      %v1285 = vld [vmem:[%s1266 + $0x90] sm:$0xff]
      %v1286 = vld [vmem:[%s1266 + $0x98] sm:$0xff]
      %v1287 = vld [vmem:[%s1266 + $0xa0] sm:$0xff]
      %v1288 = vld [vmem:[%s1266 + $0xa8] sm:$0xff]
      %v1289 = vld [vmem:[%s1266 + $0xb0] sm:$0xff]
      %v1290 = vld [vmem:[%s1266 + $0xb8] sm:$0xff]
      %v1291 = vld [vmem:[%s1266 + $0xc0] sm:$0xff]
      %v1292 = vld [vmem:[%s1266 + $0xc8] sm:$0xff]
      %v1293 = vld [vmem:[%s1266 + $0xd0] sm:$0xff]
      %v1294 = vld [vmem:[%s1266 + $0xd8] sm:$0xff]
      %v1295 = vld [vmem:[%s1266 + $0xe0] sm:$0xff]
      %v1296 = vld [vmem:[%s1266 + $0xe8] sm:$0xff]
      %v1297 = vld [vmem:[%s1266 + $0xf0] sm:$0xff]
      %v1298 = vld [vmem:[%s1266 + $0xf8] sm:$0xff]
      %1300 = vset.pattern.permute.xlu0 0
      %1301 = vperm.xlu0 %1300, %v1267
      %v1302 = vpop.permute.xlu0 %1301
      %1305 = vset.pattern.permute.xlu0 0
      %1306 = vperm.xlu0 %1305, %v1268
      %v1307 = vpop.permute.xlu0 %1306
      %1310 = vset.pattern.permute.xlu0 0
      %1311 = vperm.xlu0 %1310, %v1269
      %v1312 = vpop.permute.xlu0 %1311
      %1315 = vset.pattern.permute.xlu0 0
      %1316 = vperm.xlu0 %1315, %v1270
      %v1317 = vpop.permute.xlu0 %1316
      %1320 = vset.pattern.permute.xlu0 0
      %1321 = vperm.xlu0 %1320, %v1271
      %v1322 = vpop.permute.xlu0 %1321
      %1325 = vset.pattern.permute.xlu0 0
      %1326 = vperm.xlu0 %1325, %v1272
      %v1327 = vpop.permute.xlu0 %1326
      %1330 = vset.pattern.permute.xlu0 0
      %1331 = vperm.xlu0 %1330, %v1273
      %v1332 = vpop.permute.xlu0 %1331
      %1335 = vset.pattern.permute.xlu0 0
      %1336 = vperm.xlu0 %1335, %v1274
      %v1337 = vpop.permute.xlu0 %1336
      %1340 = vset.pattern.permute.xlu0 0
      %1341 = vperm.xlu0 %1340, %v1275
      %v1342 = vpop.permute.xlu0 %1341
      %1345 = vset.pattern.permute.xlu0 0
      %1346 = vperm.xlu0 %1345, %v1276
      %v1347 = vpop.permute.xlu0 %1346
      %1350 = vset.pattern.permute.xlu0 0
      %1351 = vperm.xlu0 %1350, %v1277
      %v1352 = vpop.permute.xlu0 %1351
      %1355 = vset.pattern.permute.xlu0 0
      %1356 = vperm.xlu0 %1355, %v1278
      %v1357 = vpop.permute.xlu0 %1356
      %1360 = vset.pattern.permute.xlu0 0
      %1361 = vperm.xlu0 %1360, %v1279
      %v1362 = vpop.permute.xlu0 %1361
      %1365 = vset.pattern.permute.xlu0 0
      %1366 = vperm.xlu0 %1365, %v1280
      %v1367 = vpop.permute.xlu0 %1366
      %1370 = vset.pattern.permute.xlu0 0
      %1371 = vperm.xlu0 %1370, %v1281
      %v1372 = vpop.permute.xlu0 %1371
      %1375 = vset.pattern.permute.xlu0 0
      %1376 = vperm.xlu0 %1375, %v1282
      %v1377 = vpop.permute.xlu0 %1376
      %1380 = vset.pattern.permute.xlu0 0
      %1381 = vperm.xlu0 %1380, %v1283
      %v1382 = vpop.permute.xlu0 %1381
      %1385 = vset.pattern.permute.xlu0 0
      %1386 = vperm.xlu0 %1385, %v1284
      %v1387 = vpop.permute.xlu0 %1386
      %1390 = vset.pattern.permute.xlu0 0
      %1391 = vperm.xlu0 %1390, %v1285
      %v1392 = vpop.permute.xlu0 %1391
      %1395 = vset.pattern.permute.xlu0 0
      %1396 = vperm.xlu0 %1395, %v1286
      %v1397 = vpop.permute.xlu0 %1396
      %1400 = vset.pattern.permute.xlu0 0
      %1401 = vperm.xlu0 %1400, %v1287
      %v1402 = vpop.permute.xlu0 %1401
      %1405 = vset.pattern.permute.xlu0 0
      %1406 = vperm.xlu0 %1405, %v1288
      %v1407 = vpop.permute.xlu0 %1406
      %1410 = vset.pattern.permute.xlu0 0
      %1411 = vperm.xlu0 %1410, %v1289
      %v1412 = vpop.permute.xlu0 %1411
      %1415 = vset.pattern.permute.xlu0 0
      %1416 = vperm.xlu0 %1415, %v1290
      %v1417 = vpop.permute.xlu0 %1416
      %1420 = vset.pattern.permute.xlu0 0
      %1421 = vperm.xlu0 %1420, %v1291
      %v1422 = vpop.permute.xlu0 %1421
      %1425 = vset.pattern.permute.xlu0 0
      %1426 = vperm.xlu0 %1425, %v1292
      %v1427 = vpop.permute.xlu0 %1426
      %1430 = vset.pattern.permute.xlu0 0
      %1431 = vperm.xlu0 %1430, %v1293
      %v1432 = vpop.permute.xlu0 %1431
      %1435 = vset.pattern.permute.xlu0 0
      %1436 = vperm.xlu0 %1435, %v1294
      %v1437 = vpop.permute.xlu0 %1436
      %1440 = vset.pattern.permute.xlu0 0
      %1441 = vperm.xlu0 %1440, %v1295
      %v1442 = vpop.permute.xlu0 %1441
      %1445 = vset.pattern.permute.xlu0 0
      %1446 = vperm.xlu0 %1445, %v1296
      %v1447 = vpop.permute.xlu0 %1446
      %1450 = vset.pattern.permute.xlu0 0
      %1451 = vperm.xlu0 %1450, %v1297
      %v1452 = vpop.permute.xlu0 %1451
      %1455 = vset.pattern.permute.xlu0 0
      %1456 = vperm.xlu0 %1455, %v1298
      %v1457 = vpop.permute.xlu0 %1456
      %v1459 = vmul.f32 %v1234, %v1302
      %v1460 = vmul.f32 %v1235, %v1307
      %v1461 = vmul.f32 %v1236, %v1312
      %v1462 = vmul.f32 %v1237, %v1317
      %v1463 = vmul.f32 %v1238, %v1322
      %v1464 = vmul.f32 %v1239, %v1327
      %v1465 = vmul.f32 %v1240, %v1332
      %v1466 = vmul.f32 %v1241, %v1337
      %v1467 = vmul.f32 %v1242, %v1342
      %v1468 = vmul.f32 %v1243, %v1347
      %v1469 = vmul.f32 %v1244, %v1352
      %v1470 = vmul.f32 %v1245, %v1357
      %v1471 = vmul.f32 %v1246, %v1362
      %v1472 = vmul.f32 %v1247, %v1367
      %v1473 = vmul.f32 %v1248, %v1372
      %v1474 = vmul.f32 %v1249, %v1377
      %v1475 = vmul.f32 %v1250, %v1382
      %v1476 = vmul.f32 %v1251, %v1387
      %v1477 = vmul.f32 %v1252, %v1392
      %v1478 = vmul.f32 %v1253, %v1397
      %v1479 = vmul.f32 %v1254, %v1402
      %v1480 = vmul.f32 %v1255, %v1407
      %v1481 = vmul.f32 %v1256, %v1412
      %v1482 = vmul.f32 %v1257, %v1417
      %v1483 = vmul.f32 %v1258, %v1422
      %v1484 = vmul.f32 %v1259, %v1427
      %v1485 = vmul.f32 %v1260, %v1432
      %v1486 = vmul.f32 %v1261, %v1437
      %v1487 = vmul.f32 %v1262, %v1442
      %v1488 = vmul.f32 %v1263, %v1447
      %v1489 = vmul.f32 %v1264, %v1452
      %v1490 = vmul.f32 %v1265, %v1457
      %s1491 = scalar_lea.vmem %s2, 80
      %v1492 = vld [vmem:[%s1491] sm:$0xff]
      %v1493 = vld [vmem:[%s1491 + $0x8] sm:$0xff]
      %v1494 = vld [vmem:[%s1491 + $0x10] sm:$0xff]
      %v1495 = vld [vmem:[%s1491 + $0x18] sm:$0xff]
      %v1496 = vld [vmem:[%s1491 + $0x20] sm:$0xf]
      %v1498 = vsel %vm584, %v1459, 0
      %v1501 = vsel %vm584, %v1460, 0
      %v1504 = vsel %vm584, %v1461, 0
      %v1507 = vsel %vm584, %v1462, 0
      %v1510 = vsel %vm584, %v1463, 0
      %v1513 = vsel %vm584, %v1464, 0
      %v1516 = vsel %vm584, %v1465, 0
      %v1519 = vsel %vm584, %v1466, 0
      %v1522 = vsel %vm584, %v1467, 0
      %v1525 = vsel %vm584, %v1468, 0
      %v1528 = vsel %vm584, %v1469, 0
      %v1531 = vsel %vm584, %v1470, 0
      %v1534 = vsel %vm584, %v1471, 0
      %v1537 = vsel %vm584, %v1472, 0
      %v1540 = vsel %vm584, %v1473, 0
      %v1543 = vsel %vm584, %v1474, 0
      %v1546 = vsel %vm584, %v1475, 0
      %v1549 = vsel %vm584, %v1476, 0
      %v1552 = vsel %vm584, %v1477, 0
      %v1555 = vsel %vm584, %v1478, 0
      %v1558 = vsel %vm584, %v1479, 0
      %v1561 = vsel %vm584, %v1480, 0
      %v1564 = vsel %vm584, %v1481, 0
      %v1567 = vsel %vm584, %v1482, 0
      %v1570 = vsel %vm584, %v1483, 0
      %v1573 = vsel %vm584, %v1484, 0
      %v1576 = vsel %vm584, %v1485, 0
      %v1579 = vsel %vm584, %v1486, 0
      %v1582 = vsel %vm584, %v1487, 0
      %v1585 = vsel %vm584, %v1488, 0
      %v1588 = vsel %vm584, %v1489, 0
      %v1591 = vsel %vm584, %v1490, 0
      %v1594 = vsel %vm681, %v1496, 0
      %1596 = vmatprep.subr.mxu0 0.0
      %1597 = vmatpush1.msra.mxu0 %v1492
      %1598 = vmatprep.subr.mxu0 0.0
      %1599 = vmatpush1.msra.mxu0 %v1493
      %1600 = vmatprep.subr.mxu0 0.0
      %1601 = vmatpush1.msra.mxu0 %v1494
      %1602 = vmatprep.subr.mxu0 0.0
      %1603 = vmatpush1.msra.mxu0 %v1495
      %1604 = vmatprep.subr.mxu0 0.0
      %1605 = vmatpush1.msra.mxu0 %v1594
      %1606 = vmatprep.subr.mxu0 0.0
      %1607 = vmatpush1.msra.mxu0 0.0
      %1608 = vmatprep.subr.mxu0 0.0
      %1609 = vmatpush1.msra.mxu0 0.0
      %1610 = vmatprep.subr.mxu0 0.0
      %1611 = vmatpush1.msra.mxu0 0.0
      %1612 = vmatprep.subr.mxu0 0.0
      %1613 = vmatpush1.msra.mxu0 0.0
      %1614 = vmatprep.subr.mxu0 0.0
      %1615 = vmatpush1.msra.mxu0 0.0
      %1616 = vmatprep.subr.mxu0 0.0
      %1617 = vmatpush1.msra.mxu0 0.0
      %1618 = vmatprep.subr.mxu0 0.0
      %1619 = vmatpush1.msra.mxu0 0.0
      %1620 = vmatprep.subr.mxu0 0.0
      %1621 = vmatpush1.msra.mxu0 0.0
      %1622 = vmatprep.subr.mxu0 0.0
      %1623 = vmatpush1.msra.mxu0 0.0
      %1624 = vmatprep.subr.mxu0 0.0
      %1625 = vmatpush1.msra.mxu0 0.0
      %1626 = vmatprep.subr.mxu0 0.0
      %1627 = vmatpush1.msra.mxu0 0.0
      %1628 = vmatprep.subr.mxu0 0.0
      %1629 = vmatpush1.msra.mxu0 0.0
      %1630 = vmatprep.subr.mxu0 0.0
      %1631 = vmatpush1.msra.mxu0 0.0
      %1632 = vmatprep.subr.mxu0 0.0
      %1633 = vmatpush1.msra.mxu0 0.0
      %1634 = vmatprep.subr.mxu0 0.0
      %1635 = vmatpush1.msra.mxu0 0.0
      %1636 = vmatprep.subr.mxu0 0.0
      %1637 = vmatpush1.msra.mxu0 0.0
      %1638 = vmatprep.subr.mxu0 0.0
      %1639 = vmatpush1.msra.mxu0 0.0
      %1640 = vmatprep.subr.mxu0 0.0
      %1641 = vmatpush1.msra.mxu0 0.0
      %1642 = vmatprep.subr.mxu0 0.0
      %1643 = vmatpush1.msra.mxu0 0.0
      %1644 = vmatprep.subr.mxu0 0.0
      %1645 = vmatpush1.msra.mxu0 0.0
      %1646 = vmatprep.subr.mxu0 0.0
      %1647 = vmatpush1.msra.mxu0 0.0
      %1648 = vmatprep.subr.mxu0 0.0
      %1649 = vmatpush1.msra.mxu0 0.0
      %1650 = vmatprep.subr.mxu0 0.0
      %1651 = vmatpush1.msra.mxu0 0.0
      %1652 = vmatprep.subr.mxu0 0.0
      %1653 = vmatpush1.msra.mxu0 0.0
      %1654 = vmatprep.subr.mxu0 0.0
      %1655 = vmatpush1.msra.mxu0 0.0
      %1656 = vmatprep.subr.mxu0 0.0
      %1657 = vmatpush1.msra.mxu0 0.0
      %1658 = vmatprep.subr.mxu0 0.0
      %1659 = vmatpush1.msra.mxu0 0.0
      %1660 = vmatprep.mubr.f32.mxu0 0.0
      %1661 = vmatmul.mubr.f32.gmra.mrb[0].mxu0 %v1498
      %v1662 = vpop.f32.mrb[0].mxu0
      %v1663 = vadd.f32 0.0, %v1662
      %v1664 = vpop.f32.mrb[0].mxu0
      %1665 = vmatprep.mubr.f32.mxu0 0.0
      %1666 = vmatmul.mubr.f32.gmra.mrb[0].mxu0 %v1501
      %v1667 = vpop.f32.mrb[0].mxu0
      %v1668 = vadd.f32 0.0, %v1667
      %v1669 = vpop.f32.mrb[0].mxu0
      %1670 = vmatprep.mubr.f32.mxu0 0.0
      %1671 = vmatmul.mubr.f32.gmra.mrb[0].mxu0 %v1504
      %v1672 = vpop.f32.mrb[0].mxu0
      %v1673 = vadd.f32 0.0, %v1672
      %v1674 = vpop.f32.mrb[0].mxu0
      %1675 = vmatprep.mubr.f32.mxu0 0.0
      %1676 = vmatmul.mubr.f32.gmra.mrb[0].mxu0 %v1507
      %v1677 = vpop.f32.mrb[0].mxu0
      %v1678 = vadd.f32 0.0, %v1677
      %v1679 = vpop.f32.mrb[0].mxu0
      %1680 = vmatprep.mubr.f32.mxu0 0.0
      %1681 = vmatmul.mubr.f32.gmra.mrb[0].mxu0 %v1510
      %v1682 = vpop.f32.mrb[0].mxu0
      %v1683 = vadd.f32 0.0, %v1682
      %v1684 = vpop.f32.mrb[0].mxu0
      %1685 = vmatprep.mubr.f32.mxu0 0.0
      %1686 = vmatmul.mubr.f32.gmra.mrb[0].mxu0 %v1513
      %v1687 = vpop.f32.mrb[0].mxu0
      %v1688 = vadd.f32 0.0, %v1687
      %v1689 = vpop.f32.mrb[0].mxu0
      %1690 = vmatprep.mubr.f32.mxu0 0.0
      %1691 = vmatmul.mubr.f32.gmra.mrb[0].mxu0 %v1516
      %v1692 = vpop.f32.mrb[0].mxu0
      %v1693 = vadd.f32 0.0, %v1692
      %v1694 = vpop.f32.mrb[0].mxu0
      %1695 = vmatprep.mubr.f32.mxu0 0.0
      %1696 = vmatmul.mubr.f32.gmra.mrb[0].mxu0 %v1519
      %v1697 = vpop.f32.mrb[0].mxu0
      %v1698 = vadd.f32 0.0, %v1697
      %v1699 = vpop.f32.mrb[0].mxu0
      %1700 = vmatprep.mubr.f32.mxu0 0.0
      %1701 = vmatmul.mubr.f32.gmra.mrb[0].mxu0 %v1522
      %v1702 = vpop.f32.mrb[0].mxu0
      %v1703 = vadd.f32 0.0, %v1702
      %v1704 = vpop.f32.mrb[0].mxu0
      %1705 = vmatprep.mubr.f32.mxu0 0.0
      %1706 = vmatmul.mubr.f32.gmra.mrb[0].mxu0 %v1525
      %v1707 = vpop.f32.mrb[0].mxu0
      %v1708 = vadd.f32 0.0, %v1707
      %v1709 = vpop.f32.mrb[0].mxu0
      %1710 = vmatprep.mubr.f32.mxu0 0.0
      %1711 = vmatmul.mubr.f32.gmra.mrb[0].mxu0 %v1528
      %v1712 = vpop.f32.mrb[0].mxu0
      %v1713 = vadd.f32 0.0, %v1712
      %v1714 = vpop.f32.mrb[0].mxu0
      %1715 = vmatprep.mubr.f32.mxu0 0.0
      %1716 = vmatmul.mubr.f32.gmra.mrb[0].mxu0 %v1531
      %v1717 = vpop.f32.mrb[0].mxu0
      %v1718 = vadd.f32 0.0, %v1717
      %v1719 = vpop.f32.mrb[0].mxu0
      %1720 = vmatprep.mubr.f32.mxu0 0.0
      %1721 = vmatmul.mubr.f32.gmra.mrb[0].mxu0 %v1534
      %v1722 = vpop.f32.mrb[0].mxu0
      %v1723 = vadd.f32 0.0, %v1722
      %v1724 = vpop.f32.mrb[0].mxu0
      %1725 = vmatprep.mubr.f32.mxu0 0.0
      %1726 = vmatmul.mubr.f32.gmra.mrb[0].mxu0 %v1537
      %v1727 = vpop.f32.mrb[0].mxu0
      %v1728 = vadd.f32 0.0, %v1727
      %v1729 = vpop.f32.mrb[0].mxu0
      %1730 = vmatprep.mubr.f32.mxu0 0.0
      %1731 = vmatmul.mubr.f32.gmra.mrb[0].mxu0 %v1540
      %v1732 = vpop.f32.mrb[0].mxu0
      %v1733 = vadd.f32 0.0, %v1732
      %v1734 = vpop.f32.mrb[0].mxu0
      %1735 = vmatprep.mubr.f32.mxu0 0.0
      %1736 = vmatmul.mubr.f32.gmra.mrb[0].mxu0 %v1543
      %v1737 = vpop.f32.mrb[0].mxu0
      %v1738 = vadd.f32 0.0, %v1737
      %v1739 = vpop.f32.mrb[0].mxu0
      %1740 = vmatprep.mubr.f32.mxu0 0.0
      %1741 = vmatmul.mubr.f32.gmra.mrb[0].mxu0 %v1546
      %v1742 = vpop.f32.mrb[0].mxu0
      %v1743 = vadd.f32 0.0, %v1742
      %v1744 = vpop.f32.mrb[0].mxu0
      %1745 = vmatprep.mubr.f32.mxu0 0.0
      %1746 = vmatmul.mubr.f32.gmra.mrb[0].mxu0 %v1549
      %v1747 = vpop.f32.mrb[0].mxu0
      %v1748 = vadd.f32 0.0, %v1747
      %v1749 = vpop.f32.mrb[0].mxu0
      %1750 = vmatprep.mubr.f32.mxu0 0.0
      %1751 = vmatmul.mubr.f32.gmra.mrb[0].mxu0 %v1552
      %v1752 = vpop.f32.mrb[0].mxu0
      %v1753 = vadd.f32 0.0, %v1752
      %v1754 = vpop.f32.mrb[0].mxu0
      %1755 = vmatprep.mubr.f32.mxu0 0.0
      %1756 = vmatmul.mubr.f32.gmra.mrb[0].mxu0 %v1555
      %v1757 = vpop.f32.mrb[0].mxu0
      %v1758 = vadd.f32 0.0, %v1757
      %v1759 = vpop.f32.mrb[0].mxu0
      %1760 = vmatprep.mubr.f32.mxu0 0.0
      %1761 = vmatmul.mubr.f32.gmra.mrb[0].mxu0 %v1558
      %v1762 = vpop.f32.mrb[0].mxu0
      %v1763 = vadd.f32 0.0, %v1762
      %v1764 = vpop.f32.mrb[0].mxu0
      %1765 = vmatprep.mubr.f32.mxu0 0.0
      %1766 = vmatmul.mubr.f32.gmra.mrb[0].mxu0 %v1561
      %v1767 = vpop.f32.mrb[0].mxu0
      %v1768 = vadd.f32 0.0, %v1767
      %v1769 = vpop.f32.mrb[0].mxu0
      %1770 = vmatprep.mubr.f32.mxu0 0.0
      %1771 = vmatmul.mubr.f32.gmra.mrb[0].mxu0 %v1564
      %v1772 = vpop.f32.mrb[0].mxu0
      %v1773 = vadd.f32 0.0, %v1772
      %v1774 = vpop.f32.mrb[0].mxu0
      %1775 = vmatprep.mubr.f32.mxu0 0.0
      %1776 = vmatmul.mubr.f32.gmra.mrb[0].mxu0 %v1567
      %v1777 = vpop.f32.mrb[0].mxu0
      %v1778 = vadd.f32 0.0, %v1777
      %v1779 = vpop.f32.mrb[0].mxu0
      %1780 = vmatprep.mubr.f32.mxu0 0.0
      %1781 = vmatmul.mubr.f32.gmra.mrb[0].mxu0 %v1570
      %v1782 = vpop.f32.mrb[0].mxu0
      %v1783 = vadd.f32 0.0, %v1782
      %v1784 = vpop.f32.mrb[0].mxu0
      %1785 = vmatprep.mubr.f32.mxu0 0.0
      %1786 = vmatmul.mubr.f32.gmra.mrb[0].mxu0 %v1573
      %v1787 = vpop.f32.mrb[0].mxu0
      %v1788 = vadd.f32 0.0, %v1787
      %v1789 = vpop.f32.mrb[0].mxu0
      %1790 = vmatprep.mubr.f32.mxu0 0.0
      %1791 = vmatmul.mubr.f32.gmra.mrb[0].mxu0 %v1576
      %v1792 = vpop.f32.mrb[0].mxu0
      %v1793 = vadd.f32 0.0, %v1792
      %v1794 = vpop.f32.mrb[0].mxu0
      %1795 = vmatprep.mubr.f32.mxu0 0.0
      %1796 = vmatmul.mubr.f32.gmra.mrb[0].mxu0 %v1579
      %v1797 = vpop.f32.mrb[0].mxu0
      %v1798 = vadd.f32 0.0, %v1797
      %v1799 = vpop.f32.mrb[0].mxu0
      %1800 = vmatprep.mubr.f32.mxu0 0.0
      %1801 = vmatmul.mubr.f32.gmra.mrb[0].mxu0 %v1582
      %v1802 = vpop.f32.mrb[0].mxu0
      %v1803 = vadd.f32 0.0, %v1802
      %v1804 = vpop.f32.mrb[0].mxu0
      %1805 = vmatprep.mubr.f32.mxu0 0.0
      %1806 = vmatmul.mubr.f32.gmra.mrb[0].mxu0 %v1585
      %v1807 = vpop.f32.mrb[0].mxu0
      %v1808 = vadd.f32 0.0, %v1807
      %v1809 = vpop.f32.mrb[0].mxu0
      %1810 = vmatprep.mubr.f32.mxu0 0.0
      %1811 = vmatmul.mubr.f32.gmra.mrb[0].mxu0 %v1588
      %v1812 = vpop.f32.mrb[0].mxu0
      %v1813 = vadd.f32 0.0, %v1812
      %v1814 = vpop.f32.mrb[0].mxu0
      %1815 = vmatprep.mubr.f32.mxu0 0.0
      %1816 = vmatmul.mubr.f32.gmra.mrb[0].mxu0 %v1591
      %v1817 = vpop.f32.mrb[0].mxu0
      %v1818 = vadd.f32 0.0, %v1817
      %v1819 = vpop.f32.mrb[0].mxu0
      %1820 = vdwg.mxu0
      %v1821 = vadd.f32 %v1076, %v1663
      %v1822 = vadd.f32 %v1081, %v1668
      %v1823 = vadd.f32 %v1086, %v1673
      %v1824 = vadd.f32 %v1091, %v1678
      %v1825 = vadd.f32 %v1096, %v1683
      %v1826 = vadd.f32 %v1101, %v1688
      %v1827 = vadd.f32 %v1106, %v1693
      %v1828 = vadd.f32 %v1111, %v1698
      %v1829 = vadd.f32 %v1116, %v1703
      %v1830 = vadd.f32 %v1121, %v1708
      %v1831 = vadd.f32 %v1126, %v1713
      %v1832 = vadd.f32 %v1131, %v1718
      %v1833 = vadd.f32 %v1136, %v1723
      %v1834 = vadd.f32 %v1141, %v1728
      %v1835 = vadd.f32 %v1146, %v1733
      %v1836 = vadd.f32 %v1151, %v1738
      %v1837 = vadd.f32 %v1156, %v1743
      %v1838 = vadd.f32 %v1161, %v1748
      %v1839 = vadd.f32 %v1166, %v1753
      %v1840 = vadd.f32 %v1171, %v1758
      %v1841 = vadd.f32 %v1176, %v1763
      %v1842 = vadd.f32 %v1181, %v1768
      %v1843 = vadd.f32 %v1186, %v1773
      %v1844 = vadd.f32 %v1191, %v1778
      %v1845 = vadd.f32 %v1196, %v1783
      %v1846 = vadd.f32 %v1201, %v1788
      %v1847 = vadd.f32 %v1206, %v1793
      %v1848 = vadd.f32 %v1211, %v1798
      %v1849 = vadd.f32 %v1216, %v1803
      %v1850 = vadd.f32 %v1221, %v1808
      %v1851 = vadd.f32 %v1226, %v1813
      %v1852 = vadd.f32 %v1231, %v1818
      %v1853 = vld [vmem:[%s269 + $0x10] sm:$0xff]
      %v1854 = vld [vmem:[%s269 + $0x18] sm:$0xff]
      %v1855 = vld [vmem:[%s269 + $0x20] sm:$0xff]
      %v1856 = vld [vmem:[%s269 + $0x28] sm:$0xff]
      %v1857 = vld [vmem:[%s269 + $0x30] sm:$0xff]
      %v1858 = vld [vmem:[%s269 + $0x38] sm:$0xff]
      %v1859 = vld [vmem:[%s269 + $0x40] sm:$0xff]
      %v1860 = vld [vmem:[%s269 + $0x48] sm:$0xff]
      %v1861 = vld [vmem:[%s269 + $0x50] sm:$0xff]
      %v1862 = vld [vmem:[%s269 + $0x58] sm:$0xff]
      %v1863 = vld [vmem:[%s269 + $0x60] sm:$0xff]
      %v1864 = vld [vmem:[%s269 + $0x68] sm:$0xff]
      %v1865 = vld [vmem:[%s269 + $0x70] sm:$0xff]
      %v1866 = vld [vmem:[%s269 + $0x78] sm:$0xff]
      %v1867 = vld [vmem:[%s269 + $0x80] sm:$0xff]
      %v1868 = vld [vmem:[%s269 + $0x88] sm:$0xff]
      %v1869 = vld [vmem:[%s269 + $0x90] sm:$0xff]
      %v1870 = vld [vmem:[%s269 + $0x98] sm:$0xff]
      %v1871 = vld [vmem:[%s269 + $0xa0] sm:$0xff]
      %v1872 = vld [vmem:[%s269 + $0xa8] sm:$0xff]
      %v1873 = vld [vmem:[%s269 + $0xb0] sm:$0xff]
      %v1874 = vld [vmem:[%s269 + $0xb8] sm:$0xff]
      %v1875 = vld [vmem:[%s269 + $0xc0] sm:$0xff]
      %v1876 = vld [vmem:[%s269 + $0xc8] sm:$0xff]
      %v1877 = vld [vmem:[%s269 + $0xd0] sm:$0xff]
      %v1878 = vld [vmem:[%s269 + $0xd8] sm:$0xff]
      %v1879 = vld [vmem:[%s269 + $0xe0] sm:$0xff]
      %v1880 = vld [vmem:[%s269 + $0xe8] sm:$0xff]
      %v1881 = vld [vmem:[%s269 + $0xf0] sm:$0xff]
      %v1882 = vld [vmem:[%s269 + $0xf8] sm:$0xff]
      %v1883 = vld [vmem:[%s269 + $0x100] sm:$0xff]
      %v1884 = vld [vmem:[%s269 + $0x108] sm:$0xff]
      %v1885 = vmul.f32 %v1853, %v352
      %v1886 = vmul.f32 %v1854, %v357
      %v1887 = vmul.f32 %v1855, %v362
      %v1888 = vmul.f32 %v1856, %v367
      %v1889 = vmul.f32 %v1857, %v372
      %v1890 = vmul.f32 %v1858, %v377
      %v1891 = vmul.f32 %v1859, %v382
      %v1892 = vmul.f32 %v1860, %v387
      %v1893 = vmul.f32 %v1861, %v392
      %v1894 = vmul.f32 %v1862, %v397
      %v1895 = vmul.f32 %v1863, %v402
      %v1896 = vmul.f32 %v1864, %v407
      %v1897 = vmul.f32 %v1865, %v412
      %v1898 = vmul.f32 %v1866, %v417
      %v1899 = vmul.f32 %v1867, %v422
      %v1900 = vmul.f32 %v1868, %v427
      %v1901 = vmul.f32 %v1869, %v432
      %v1902 = vmul.f32 %v1870, %v437
      %v1903 = vmul.f32 %v1871, %v442
      %v1904 = vmul.f32 %v1872, %v447
      %v1905 = vmul.f32 %v1873, %v452
      %v1906 = vmul.f32 %v1874, %v457
      %v1907 = vmul.f32 %v1875, %v462
      %v1908 = vmul.f32 %v1876, %v467
      %v1909 = vmul.f32 %v1877, %v472
      %v1910 = vmul.f32 %v1878, %v477
      %v1911 = vmul.f32 %v1879, %v482
      %v1912 = vmul.f32 %v1880, %v487
      %v1913 = vmul.f32 %v1881, %v492
      %v1914 = vmul.f32 %v1882, %v497
      %v1915 = vmul.f32 %v1883, %v502
      %v1916 = vmul.f32 %v1884, %v507
      %s1917 = scalar_lea.vmem %s2, 120
      %v1918 = vld [vmem:[%s1917] sm:$0xff]
      %v1919 = vld [vmem:[%s1917 + $0x8] sm:$0xff]
      %v1920 = vld [vmem:[%s1917 + $0x10] sm:$0xff]
      %v1921 = vld [vmem:[%s1917 + $0x18] sm:$0xff]
      %v1922 = vld [vmem:[%s1917 + $0x20] sm:$0xf]
      %v1924 = vsel %vm584, %v1885, 0
      %v1927 = vsel %vm584, %v1886, 0
      %v1930 = vsel %vm584, %v1887, 0
      %v1933 = vsel %vm584, %v1888, 0
      %v1936 = vsel %vm584, %v1889, 0
      %v1939 = vsel %vm584, %v1890, 0
      %v1942 = vsel %vm584, %v1891, 0
      %v1945 = vsel %vm584, %v1892, 0
      %v1948 = vsel %vm584, %v1893, 0
      %v1951 = vsel %vm584, %v1894, 0
      %v1954 = vsel %vm584, %v1895, 0
      %v1957 = vsel %vm584, %v1896, 0
      %v1960 = vsel %vm584, %v1897, 0
      %v1963 = vsel %vm584, %v1898, 0
      %v1966 = vsel %vm584, %v1899, 0
      %v1969 = vsel %vm584, %v1900, 0
      %v1972 = vsel %vm584, %v1901, 0
      %v1975 = vsel %vm584, %v1902, 0
      %v1978 = vsel %vm584, %v1903, 0
      %v1981 = vsel %vm584, %v1904, 0
      %v1984 = vsel %vm584, %v1905, 0
      %v1987 = vsel %vm584, %v1906, 0
      %v1990 = vsel %vm584, %v1907, 0
      %v1993 = vsel %vm584, %v1908, 0
      %v1996 = vsel %vm584, %v1909, 0
      %v1999 = vsel %vm584, %v1910, 0
      %v2002 = vsel %vm584, %v1911, 0
      %v2005 = vsel %vm584, %v1912, 0
      %v2008 = vsel %vm584, %v1913, 0
      %v2011 = vsel %vm584, %v1914, 0
      %v2014 = vsel %vm584, %v1915, 0
      %v2017 = vsel %vm584, %v1916, 0
      %v2020 = vsel %vm681, %v1922, 0
      %2022 = vmatprep.subr.mxu0 0.0
      %2023 = vmatpush1.msra.mxu0 %v1918
      %2024 = vmatprep.subr.mxu0 0.0
      %2025 = vmatpush1.msra.mxu0 %v1919
      %2026 = vmatprep.subr.mxu0 0.0
      %2027 = vmatpush1.msra.mxu0 %v1920
      %2028 = vmatprep.subr.mxu0 0.0
      %2029 = vmatpush1.msra.mxu0 %v1921
      %2030 = vmatprep.subr.mxu0 0.0
      %2031 = vmatpush1.msra.mxu0 %v2020
      %2032 = vmatprep.subr.mxu0 0.0
      %2033 = vmatpush1.msra.mxu0 0.0
      %2034 = vmatprep.subr.mxu0 0.0
      %2035 = vmatpush1.msra.mxu0 0.0
      %2036 = vmatprep.subr.mxu0 0.0
      %2037 = vmatpush1.msra.mxu0 0.0
      %2038 = vmatprep.subr.mxu0 0.0
      %2039 = vmatpush1.msra.mxu0 0.0
      %2040 = vmatprep.subr.mxu0 0.0
      %2041 = vmatpush1.msra.mxu0 0.0
      %2042 = vmatprep.subr.mxu0 0.0
      %2043 = vmatpush1.msra.mxu0 0.0
      %2044 = vmatprep.subr.mxu0 0.0
      %2045 = vmatpush1.msra.mxu0 0.0
      %2046 = vmatprep.subr.mxu0 0.0
      %2047 = vmatpush1.msra.mxu0 0.0
      %2048 = vmatprep.subr.mxu0 0.0
      %2049 = vmatpush1.msra.mxu0 0.0
      %2050 = vmatprep.subr.mxu0 0.0
      %2051 = vmatpush1.msra.mxu0 0.0
      %2052 = vmatprep.subr.mxu0 0.0
      %2053 = vmatpush1.msra.mxu0 0.0
      %2054 = vmatprep.subr.mxu0 0.0
      %2055 = vmatpush1.msra.mxu0 0.0
      %2056 = vmatprep.subr.mxu0 0.0
      %2057 = vmatpush1.msra.mxu0 0.0
      %2058 = vmatprep.subr.mxu0 0.0
      %2059 = vmatpush1.msra.mxu0 0.0
      %2060 = vmatprep.subr.mxu0 0.0
      %2061 = vmatpush1.msra.mxu0 0.0
      %2062 = vmatprep.subr.mxu0 0.0
      %2063 = vmatpush1.msra.mxu0 0.0
      %2064 = vmatprep.subr.mxu0 0.0
      %2065 = vmatpush1.msra.mxu0 0.0
      %2066 = vmatprep.subr.mxu0 0.0
      %2067 = vmatpush1.msra.mxu0 0.0
      %2068 = vmatprep.subr.mxu0 0.0
      %2069 = vmatpush1.msra.mxu0 0.0
      %2070 = vmatprep.subr.mxu0 0.0
      %2071 = vmatpush1.msra.mxu0 0.0
      %2072 = vmatprep.subr.mxu0 0.0
      %2073 = vmatpush1.msra.mxu0 0.0
      %2074 = vmatprep.subr.mxu0 0.0
      %2075 = vmatpush1.msra.mxu0 0.0
      %2076 = vmatprep.subr.mxu0 0.0
      %2077 = vmatpush1.msra.mxu0 0.0
      %2078 = vmatprep.subr.mxu0 0.0
      %2079 = vmatpush1.msra.mxu0 0.0
      %2080 = vmatprep.subr.mxu0 0.0
      %2081 = vmatpush1.msra.mxu0 0.0
      %2082 = vmatprep.subr.mxu0 0.0
      %2083 = vmatpush1.msra.mxu0 0.0
      %2084 = vmatprep.subr.mxu0 0.0
      %2085 = vmatpush1.msra.mxu0 0.0
      %2086 = vmatprep.mubr.f32.mxu0 0.0
      %2087 = vmatmul.mubr.f32.gmra.mrb[0].mxu0 %v1924
      %v2088 = vpop.f32.mrb[0].mxu0
      %v2089 = vadd.f32 0.0, %v2088
      %v2090 = vpop.f32.mrb[0].mxu0
      %2091 = vmatprep.mubr.f32.mxu0 0.0
      %2092 = vmatmul.mubr.f32.gmra.mrb[0].mxu0 %v1927
      %v2093 = vpop.f32.mrb[0].mxu0
      %v2094 = vadd.f32 0.0, %v2093
      %v2095 = vpop.f32.mrb[0].mxu0
      %2096 = vmatprep.mubr.f32.mxu0 0.0
      %2097 = vmatmul.mubr.f32.gmra.mrb[0].mxu0 %v1930
      %v2098 = vpop.f32.mrb[0].mxu0
      %v2099 = vadd.f32 0.0, %v2098
      %v2100 = vpop.f32.mrb[0].mxu0
      %2101 = vmatprep.mubr.f32.mxu0 0.0
      %2102 = vmatmul.mubr.f32.gmra.mrb[0].mxu0 %v1933
      %v2103 = vpop.f32.mrb[0].mxu0
      %v2104 = vadd.f32 0.0, %v2103
      %v2105 = vpop.f32.mrb[0].mxu0
      %2106 = vmatprep.mubr.f32.mxu0 0.0
      %2107 = vmatmul.mubr.f32.gmra.mrb[0].mxu0 %v1936
      %v2108 = vpop.f32.mrb[0].mxu0
      %v2109 = vadd.f32 0.0, %v2108
      %v2110 = vpop.f32.mrb[0].mxu0
      %2111 = vmatprep.mubr.f32.mxu0 0.0
      %2112 = vmatmul.mubr.f32.gmra.mrb[0].mxu0 %v1939
      %v2113 = vpop.f32.mrb[0].mxu0
      %v2114 = vadd.f32 0.0, %v2113
      %v2115 = vpop.f32.mrb[0].mxu0
      %2116 = vmatprep.mubr.f32.mxu0 0.0
      %2117 = vmatmul.mubr.f32.gmra.mrb[0].mxu0 %v1942
      %v2118 = vpop.f32.mrb[0].mxu0
      %v2119 = vadd.f32 0.0, %v2118
      %v2120 = vpop.f32.mrb[0].mxu0
      %2121 = vmatprep.mubr.f32.mxu0 0.0
      %2122 = vmatmul.mubr.f32.gmra.mrb[0].mxu0 %v1945
      %v2123 = vpop.f32.mrb[0].mxu0
      %v2124 = vadd.f32 0.0, %v2123
      %v2125 = vpop.f32.mrb[0].mxu0
      %2126 = vmatprep.mubr.f32.mxu0 0.0
      %2127 = vmatmul.mubr.f32.gmra.mrb[0].mxu0 %v1948
      %v2128 = vpop.f32.mrb[0].mxu0
      %v2129 = vadd.f32 0.0, %v2128
      %v2130 = vpop.f32.mrb[0].mxu0
      %2131 = vmatprep.mubr.f32.mxu0 0.0
      %2132 = vmatmul.mubr.f32.gmra.mrb[0].mxu0 %v1951
      %v2133 = vpop.f32.mrb[0].mxu0
      %v2134 = vadd.f32 0.0, %v2133
      %v2135 = vpop.f32.mrb[0].mxu0
      %2136 = vmatprep.mubr.f32.mxu0 0.0
      %2137 = vmatmul.mubr.f32.gmra.mrb[0].mxu0 %v1954
      %v2138 = vpop.f32.mrb[0].mxu0
      %v2139 = vadd.f32 0.0, %v2138
      %v2140 = vpop.f32.mrb[0].mxu0
      %2141 = vmatprep.mubr.f32.mxu0 0.0
      %2142 = vmatmul.mubr.f32.gmra.mrb[0].mxu0 %v1957
      %v2143 = vpop.f32.mrb[0].mxu0
      %v2144 = vadd.f32 0.0, %v2143
      %v2145 = vpop.f32.mrb[0].mxu0
      %2146 = vmatprep.mubr.f32.mxu0 0.0
      %2147 = vmatmul.mubr.f32.gmra.mrb[0].mxu0 %v1960
      %v2148 = vpop.f32.mrb[0].mxu0
      %v2149 = vadd.f32 0.0, %v2148
      %v2150 = vpop.f32.mrb[0].mxu0
      %2151 = vmatprep.mubr.f32.mxu0 0.0
      %2152 = vmatmul.mubr.f32.gmra.mrb[0].mxu0 %v1963
      %v2153 = vpop.f32.mrb[0].mxu0
      %v2154 = vadd.f32 0.0, %v2153
      %v2155 = vpop.f32.mrb[0].mxu0
      %2156 = vmatprep.mubr.f32.mxu0 0.0
      %2157 = vmatmul.mubr.f32.gmra.mrb[0].mxu0 %v1966
      %v2158 = vpop.f32.mrb[0].mxu0
      %v2159 = vadd.f32 0.0, %v2158
      %v2160 = vpop.f32.mrb[0].mxu0
      %2161 = vmatprep.mubr.f32.mxu0 0.0
      %2162 = vmatmul.mubr.f32.gmra.mrb[0].mxu0 %v1969
      %v2163 = vpop.f32.mrb[0].mxu0
      %v2164 = vadd.f32 0.0, %v2163
      %v2165 = vpop.f32.mrb[0].mxu0
      %2166 = vmatprep.mubr.f32.mxu0 0.0
      %2167 = vmatmul.mubr.f32.gmra.mrb[0].mxu0 %v1972
      %v2168 = vpop.f32.mrb[0].mxu0
      %v2169 = vadd.f32 0.0, %v2168
      %v2170 = vpop.f32.mrb[0].mxu0
      %2171 = vmatprep.mubr.f32.mxu0 0.0
      %2172 = vmatmul.mubr.f32.gmra.mrb[0].mxu0 %v1975
      %v2173 = vpop.f32.mrb[0].mxu0
      %v2174 = vadd.f32 0.0, %v2173
      %v2175 = vpop.f32.mrb[0].mxu0
      %2176 = vmatprep.mubr.f32.mxu0 0.0
      %2177 = vmatmul.mubr.f32.gmra.mrb[0].mxu0 %v1978
      %v2178 = vpop.f32.mrb[0].mxu0
      %v2179 = vadd.f32 0.0, %v2178
      %v2180 = vpop.f32.mrb[0].mxu0
      %2181 = vmatprep.mubr.f32.mxu0 0.0
      %2182 = vmatmul.mubr.f32.gmra.mrb[0].mxu0 %v1981
      %v2183 = vpop.f32.mrb[0].mxu0
      %v2184 = vadd.f32 0.0, %v2183
      %v2185 = vpop.f32.mrb[0].mxu0
      %2186 = vmatprep.mubr.f32.mxu0 0.0
      %2187 = vmatmul.mubr.f32.gmra.mrb[0].mxu0 %v1984
      %v2188 = vpop.f32.mrb[0].mxu0
      %v2189 = vadd.f32 0.0, %v2188
      %v2190 = vpop.f32.mrb[0].mxu0
      %2191 = vmatprep.mubr.f32.mxu0 0.0
      %2192 = vmatmul.mubr.f32.gmra.mrb[0].mxu0 %v1987
      %v2193 = vpop.f32.mrb[0].mxu0
      %v2194 = vadd.f32 0.0, %v2193
      %v2195 = vpop.f32.mrb[0].mxu0
      %2196 = vmatprep.mubr.f32.mxu0 0.0
      %2197 = vmatmul.mubr.f32.gmra.mrb[0].mxu0 %v1990
      %v2198 = vpop.f32.mrb[0].mxu0
      %v2199 = vadd.f32 0.0, %v2198
      %v2200 = vpop.f32.mrb[0].mxu0
      %2201 = vmatprep.mubr.f32.mxu0 0.0
      %2202 = vmatmul.mubr.f32.gmra.mrb[0].mxu0 %v1993
      %v2203 = vpop.f32.mrb[0].mxu0
      %v2204 = vadd.f32 0.0, %v2203
      %v2205 = vpop.f32.mrb[0].mxu0
      %2206 = vmatprep.mubr.f32.mxu0 0.0
      %2207 = vmatmul.mubr.f32.gmra.mrb[0].mxu0 %v1996
      %v2208 = vpop.f32.mrb[0].mxu0
      %v2209 = vadd.f32 0.0, %v2208
      %v2210 = vpop.f32.mrb[0].mxu0
      %2211 = vmatprep.mubr.f32.mxu0 0.0
      %2212 = vmatmul.mubr.f32.gmra.mrb[0].mxu0 %v1999
      %v2213 = vpop.f32.mrb[0].mxu0
      %v2214 = vadd.f32 0.0, %v2213
      %v2215 = vpop.f32.mrb[0].mxu0
      %2216 = vmatprep.mubr.f32.mxu0 0.0
      %2217 = vmatmul.mubr.f32.gmra.mrb[0].mxu0 %v2002
      %v2218 = vpop.f32.mrb[0].mxu0
      %v2219 = vadd.f32 0.0, %v2218
      %v2220 = vpop.f32.mrb[0].mxu0
      %2221 = vmatprep.mubr.f32.mxu0 0.0
      %2222 = vmatmul.mubr.f32.gmra.mrb[0].mxu0 %v2005
      %v2223 = vpop.f32.mrb[0].mxu0
      %v2224 = vadd.f32 0.0, %v2223
      %v2225 = vpop.f32.mrb[0].mxu0
      %2226 = vmatprep.mubr.f32.mxu0 0.0
      %2227 = vmatmul.mubr.f32.gmra.mrb[0].mxu0 %v2008
      %v2228 = vpop.f32.mrb[0].mxu0
      %v2229 = vadd.f32 0.0, %v2228
      %v2230 = vpop.f32.mrb[0].mxu0
      %2231 = vmatprep.mubr.f32.mxu0 0.0
      %2232 = vmatmul.mubr.f32.gmra.mrb[0].mxu0 %v2011
      %v2233 = vpop.f32.mrb[0].mxu0
      %v2234 = vadd.f32 0.0, %v2233
      %v2235 = vpop.f32.mrb[0].mxu0
      %2236 = vmatprep.mubr.f32.mxu0 0.0
      %2237 = vmatmul.mubr.f32.gmra.mrb[0].mxu0 %v2014
      %v2238 = vpop.f32.mrb[0].mxu0
      %v2239 = vadd.f32 0.0, %v2238
      %v2240 = vpop.f32.mrb[0].mxu0
      %2241 = vmatprep.mubr.f32.mxu0 0.0
      %2242 = vmatmul.mubr.f32.gmra.mrb[0].mxu0 %v2017
      %v2243 = vpop.f32.mrb[0].mxu0
      %v2244 = vadd.f32 0.0, %v2243
      %v2245 = vpop.f32.mrb[0].mxu0
      %2246 = vdwg.mxu0
      %v2247 = vadd.f32 %v1821, %v2089
      %v2248 = vadd.f32 %v1822, %v2094
      %v2249 = vadd.f32 %v1823, %v2099
      %v2250 = vadd.f32 %v1824, %v2104
      %v2251 = vadd.f32 %v1825, %v2109
      %v2252 = vadd.f32 %v1826, %v2114
      %v2253 = vadd.f32 %v1827, %v2119
      %v2254 = vadd.f32 %v1828, %v2124
      %v2255 = vadd.f32 %v1829, %v2129
      %v2256 = vadd.f32 %v1830, %v2134
      %v2257 = vadd.f32 %v1831, %v2139
      %v2258 = vadd.f32 %v1832, %v2144
      %v2259 = vadd.f32 %v1833, %v2149
      %v2260 = vadd.f32 %v1834, %v2154
      %v2261 = vadd.f32 %v1835, %v2159
      %v2262 = vadd.f32 %v1836, %v2164
      %v2263 = vadd.f32 %v1837, %v2169
      %v2264 = vadd.f32 %v1838, %v2174
      %v2265 = vadd.f32 %v1839, %v2179
      %v2266 = vadd.f32 %v1840, %v2184
      %v2267 = vadd.f32 %v1841, %v2189
      %v2268 = vadd.f32 %v1842, %v2194
      %v2269 = vadd.f32 %v1843, %v2199
      %v2270 = vadd.f32 %v1844, %v2204
      %v2271 = vadd.f32 %v1845, %v2209
      %v2272 = vadd.f32 %v1846, %v2214
      %v2273 = vadd.f32 %v1847, %v2219
      %v2274 = vadd.f32 %v1848, %v2224
      %v2275 = vadd.f32 %v1849, %v2229
      %v2276 = vadd.f32 %v1850, %v2234
      %v2277 = vadd.f32 %v1851, %v2239
      %v2278 = vadd.f32 %v1852, %v2244
      %v2279 = vld [vmem:[%s269 + $0x11] sm:$0xff]
      %v2280 = vld [vmem:[%s269 + $0x19] sm:$0xff]
      %v2281 = vld [vmem:[%s269 + $0x21] sm:$0xff]
      %v2282 = vld [vmem:[%s269 + $0x29] sm:$0xff]
      %v2283 = vld [vmem:[%s269 + $0x31] sm:$0xff]
      %v2284 = vld [vmem:[%s269 + $0x39] sm:$0xff]
      %v2285 = vld [vmem:[%s269 + $0x41] sm:$0xff]
      %v2286 = vld [vmem:[%s269 + $0x49] sm:$0xff]
      %v2287 = vld [vmem:[%s269 + $0x51] sm:$0xff]
      %v2288 = vld [vmem:[%s269 + $0x59] sm:$0xff]
      %v2289 = vld [vmem:[%s269 + $0x61] sm:$0xff]
      %v2290 = vld [vmem:[%s269 + $0x69] sm:$0xff]
      %v2291 = vld [vmem:[%s269 + $0x71] sm:$0xff]
      %v2292 = vld [vmem:[%s269 + $0x79] sm:$0xff]
      %v2293 = vld [vmem:[%s269 + $0x81] sm:$0xff]
      %v2294 = vld [vmem:[%s269 + $0x89] sm:$0xff]
      %v2295 = vld [vmem:[%s269 + $0x91] sm:$0xff]
      %v2296 = vld [vmem:[%s269 + $0x99] sm:$0xff]
      %v2297 = vld [vmem:[%s269 + $0xa1] sm:$0xff]
      %v2298 = vld [vmem:[%s269 + $0xa9] sm:$0xff]
      %v2299 = vld [vmem:[%s269 + $0xb1] sm:$0xff]
      %v2300 = vld [vmem:[%s269 + $0xb9] sm:$0xff]
      %v2301 = vld [vmem:[%s269 + $0xc1] sm:$0xff]
      %v2302 = vld [vmem:[%s269 + $0xc9] sm:$0xff]
      %v2303 = vld [vmem:[%s269 + $0xd1] sm:$0xff]
      %v2304 = vld [vmem:[%s269 + $0xd9] sm:$0xff]
      %v2305 = vld [vmem:[%s269 + $0xe1] sm:$0xff]
      %v2306 = vld [vmem:[%s269 + $0xe9] sm:$0xff]
      %v2307 = vld [vmem:[%s269 + $0xf1] sm:$0xff]
      %v2308 = vld [vmem:[%s269 + $0xf9] sm:$0xff]
      %v2309 = vld [vmem:[%s269 + $0x101] sm:$0xff]
      %v2310 = vld [vmem:[%s269 + $0x109] sm:$0xff]
      %s2311 = scalar_lea.vmem %s2, 160
      %v2312 = vld [vmem:[%s2311] sm:$0xff]
      %v2313 = vld [vmem:[%s2311 + $0x8] sm:$0xff]
      %v2314 = vld [vmem:[%s2311 + $0x10] sm:$0xff]
      %v2315 = vld [vmem:[%s2311 + $0x18] sm:$0xff]
      %v2316 = vld [vmem:[%s2311 + $0x20] sm:$0xf]
      %v2318 = vsel %vm584, %v2279, 0
      %v2321 = vsel %vm584, %v2280, 0
      %v2324 = vsel %vm584, %v2281, 0
      %v2327 = vsel %vm584, %v2282, 0
      %v2330 = vsel %vm584, %v2283, 0
      %v2333 = vsel %vm584, %v2284, 0
      %v2336 = vsel %vm584, %v2285, 0
      %v2339 = vsel %vm584, %v2286, 0
      %v2342 = vsel %vm584, %v2287, 0
      %v2345 = vsel %vm584, %v2288, 0
      %v2348 = vsel %vm584, %v2289, 0
      %v2351 = vsel %vm584, %v2290, 0
      %v2354 = vsel %vm584, %v2291, 0
      %v2357 = vsel %vm584, %v2292, 0
      %v2360 = vsel %vm584, %v2293, 0
      %v2363 = vsel %vm584, %v2294, 0
      %v2366 = vsel %vm584, %v2295, 0
      %v2369 = vsel %vm584, %v2296, 0
      %v2372 = vsel %vm584, %v2297, 0
      %v2375 = vsel %vm584, %v2298, 0
      %v2378 = vsel %vm584, %v2299, 0
      %v2381 = vsel %vm584, %v2300, 0
      %v2384 = vsel %vm584, %v2301, 0
      %v2387 = vsel %vm584, %v2302, 0
      %v2390 = vsel %vm584, %v2303, 0
      %v2393 = vsel %vm584, %v2304, 0
      %v2396 = vsel %vm584, %v2305, 0
      %v2399 = vsel %vm584, %v2306, 0
      %v2402 = vsel %vm584, %v2307, 0
      %v2405 = vsel %vm584, %v2308, 0
      %v2408 = vsel %vm584, %v2309, 0
      %v2411 = vsel %vm584, %v2310, 0
      %v2414 = vsel %vm681, %v2316, 0
      %2416 = vmatprep.subr.mxu0 0.0
      %2417 = vmatpush1.msra.mxu0 %v2312
      %2418 = vmatprep.subr.mxu0 0.0
      %2419 = vmatpush1.msra.mxu0 %v2313
      %2420 = vmatprep.subr.mxu0 0.0
      %2421 = vmatpush1.msra.mxu0 %v2314
      %2422 = vmatprep.subr.mxu0 0.0
      %2423 = vmatpush1.msra.mxu0 %v2315
      %2424 = vmatprep.subr.mxu0 0.0
      %2425 = vmatpush1.msra.mxu0 %v2414
      %2426 = vmatprep.subr.mxu0 0.0
      %2427 = vmatpush1.msra.mxu0 0.0
      %2428 = vmatprep.subr.mxu0 0.0
      %2429 = vmatpush1.msra.mxu0 0.0
      %2430 = vmatprep.subr.mxu0 0.0
      %2431 = vmatpush1.msra.mxu0 0.0
      %2432 = vmatprep.subr.mxu0 0.0
      %2433 = vmatpush1.msra.mxu0 0.0
      %2434 = vmatprep.subr.mxu0 0.0
      %2435 = vmatpush1.msra.mxu0 0.0
      %2436 = vmatprep.subr.mxu0 0.0
      %2437 = vmatpush1.msra.mxu0 0.0
      %2438 = vmatprep.subr.mxu0 0.0
      %2439 = vmatpush1.msra.mxu0 0.0
      %2440 = vmatprep.subr.mxu0 0.0
      %2441 = vmatpush1.msra.mxu0 0.0
      %2442 = vmatprep.subr.mxu0 0.0
      %2443 = vmatpush1.msra.mxu0 0.0
      %2444 = vmatprep.subr.mxu0 0.0
      %2445 = vmatpush1.msra.mxu0 0.0
      %2446 = vmatprep.subr.mxu0 0.0
      %2447 = vmatpush1.msra.mxu0 0.0
      %2448 = vmatprep.subr.mxu0 0.0
      %2449 = vmatpush1.msra.mxu0 0.0
      %2450 = vmatprep.subr.mxu0 0.0
      %2451 = vmatpush1.msra.mxu0 0.0
      %2452 = vmatprep.subr.mxu0 0.0
      %2453 = vmatpush1.msra.mxu0 0.0
      %2454 = vmatprep.subr.mxu0 0.0
      %2455 = vmatpush1.msra.mxu0 0.0
      %2456 = vmatprep.subr.mxu0 0.0
      %2457 = vmatpush1.msra.mxu0 0.0
      %2458 = vmatprep.subr.mxu0 0.0
      %2459 = vmatpush1.msra.mxu0 0.0
      %2460 = vmatprep.subr.mxu0 0.0
      %2461 = vmatpush1.msra.mxu0 0.0
      %2462 = vmatprep.subr.mxu0 0.0
      %2463 = vmatpush1.msra.mxu0 0.0
      %2464 = vmatprep.subr.mxu0 0.0
      %2465 = vmatpush1.msra.mxu0 0.0
      %2466 = vmatprep.subr.mxu0 0.0
      %2467 = vmatpush1.msra.mxu0 0.0
      %2468 = vmatprep.subr.mxu0 0.0
      %2469 = vmatpush1.msra.mxu0 0.0
      %2470 = vmatprep.subr.mxu0 0.0
      %2471 = vmatpush1.msra.mxu0 0.0
      %2472 = vmatprep.subr.mxu0 0.0
      %2473 = vmatpush1.msra.mxu0 0.0
      %2474 = vmatprep.subr.mxu0 0.0
      %2475 = vmatpush1.msra.mxu0 0.0
      %2476 = vmatprep.subr.mxu0 0.0
      %2477 = vmatpush1.msra.mxu0 0.0
      %2478 = vmatprep.subr.mxu0 0.0
      %2479 = vmatpush1.msra.mxu0 0.0
      %2480 = vmatprep.mubr.f32.mxu0 0.0
      %2481 = vmatmul.mubr.f32.gmra.mrb[0].mxu0 %v2318
      %v2482 = vpop.f32.mrb[0].mxu0
      %v2483 = vadd.f32 0.0, %v2482
      %v2484 = vpop.f32.mrb[0].mxu0
      %2485 = vmatprep.mubr.f32.mxu0 0.0
      %2486 = vmatmul.mubr.f32.gmra.mrb[0].mxu0 %v2321
      %v2487 = vpop.f32.mrb[0].mxu0
      %v2488 = vadd.f32 0.0, %v2487
      %v2489 = vpop.f32.mrb[0].mxu0
      %2490 = vmatprep.mubr.f32.mxu0 0.0
      %2491 = vmatmul.mubr.f32.gmra.mrb[0].mxu0 %v2324
      %v2492 = vpop.f32.mrb[0].mxu0
      %v2493 = vadd.f32 0.0, %v2492
      %v2494 = vpop.f32.mrb[0].mxu0
      %2495 = vmatprep.mubr.f32.mxu0 0.0
      %2496 = vmatmul.mubr.f32.gmra.mrb[0].mxu0 %v2327
      %v2497 = vpop.f32.mrb[0].mxu0
      %v2498 = vadd.f32 0.0, %v2497
      %v2499 = vpop.f32.mrb[0].mxu0
      %2500 = vmatprep.mubr.f32.mxu0 0.0
      %2501 = vmatmul.mubr.f32.gmra.mrb[0].mxu0 %v2330
      %v2502 = vpop.f32.mrb[0].mxu0
      %v2503 = vadd.f32 0.0, %v2502
      %v2504 = vpop.f32.mrb[0].mxu0
      %2505 = vmatprep.mubr.f32.mxu0 0.0
      %2506 = vmatmul.mubr.f32.gmra.mrb[0].mxu0 %v2333
      %v2507 = vpop.f32.mrb[0].mxu0
      %v2508 = vadd.f32 0.0, %v2507
      %v2509 = vpop.f32.mrb[0].mxu0
      %2510 = vmatprep.mubr.f32.mxu0 0.0
      %2511 = vmatmul.mubr.f32.gmra.mrb[0].mxu0 %v2336
      %v2512 = vpop.f32.mrb[0].mxu0
      %v2513 = vadd.f32 0.0, %v2512
      %v2514 = vpop.f32.mrb[0].mxu0
      %2515 = vmatprep.mubr.f32.mxu0 0.0
      %2516 = vmatmul.mubr.f32.gmra.mrb[0].mxu0 %v2339
      %v2517 = vpop.f32.mrb[0].mxu0
      %v2518 = vadd.f32 0.0, %v2517
      %v2519 = vpop.f32.mrb[0].mxu0
      %2520 = vmatprep.mubr.f32.mxu0 0.0
      %2521 = vmatmul.mubr.f32.gmra.mrb[0].mxu0 %v2342
      %v2522 = vpop.f32.mrb[0].mxu0
      %v2523 = vadd.f32 0.0, %v2522
      %v2524 = vpop.f32.mrb[0].mxu0
      %2525 = vmatprep.mubr.f32.mxu0 0.0
      %2526 = vmatmul.mubr.f32.gmra.mrb[0].mxu0 %v2345
      %v2527 = vpop.f32.mrb[0].mxu0
      %v2528 = vadd.f32 0.0, %v2527
      %v2529 = vpop.f32.mrb[0].mxu0
      %2530 = vmatprep.mubr.f32.mxu0 0.0
      %2531 = vmatmul.mubr.f32.gmra.mrb[0].mxu0 %v2348
      %v2532 = vpop.f32.mrb[0].mxu0
      %v2533 = vadd.f32 0.0, %v2532
      %v2534 = vpop.f32.mrb[0].mxu0
      %2535 = vmatprep.mubr.f32.mxu0 0.0
      %2536 = vmatmul.mubr.f32.gmra.mrb[0].mxu0 %v2351
      %v2537 = vpop.f32.mrb[0].mxu0
      %v2538 = vadd.f32 0.0, %v2537
      %v2539 = vpop.f32.mrb[0].mxu0
      %2540 = vmatprep.mubr.f32.mxu0 0.0
      %2541 = vmatmul.mubr.f32.gmra.mrb[0].mxu0 %v2354
      %v2542 = vpop.f32.mrb[0].mxu0
      %v2543 = vadd.f32 0.0, %v2542
      %v2544 = vpop.f32.mrb[0].mxu0
      %2545 = vmatprep.mubr.f32.mxu0 0.0
      %2546 = vmatmul.mubr.f32.gmra.mrb[0].mxu0 %v2357
      %v2547 = vpop.f32.mrb[0].mxu0
      %v2548 = vadd.f32 0.0, %v2547
      %v2549 = vpop.f32.mrb[0].mxu0
      %2550 = vmatprep.mubr.f32.mxu0 0.0
      %2551 = vmatmul.mubr.f32.gmra.mrb[0].mxu0 %v2360
      %v2552 = vpop.f32.mrb[0].mxu0
      %v2553 = vadd.f32 0.0, %v2552
      %v2554 = vpop.f32.mrb[0].mxu0
      %2555 = vmatprep.mubr.f32.mxu0 0.0
      %2556 = vmatmul.mubr.f32.gmra.mrb[0].mxu0 %v2363
      %v2557 = vpop.f32.mrb[0].mxu0
      %v2558 = vadd.f32 0.0, %v2557
      %v2559 = vpop.f32.mrb[0].mxu0
      %2560 = vmatprep.mubr.f32.mxu0 0.0
      %2561 = vmatmul.mubr.f32.gmra.mrb[0].mxu0 %v2366
      %v2562 = vpop.f32.mrb[0].mxu0
      %v2563 = vadd.f32 0.0, %v2562
      %v2564 = vpop.f32.mrb[0].mxu0
      %2565 = vmatprep.mubr.f32.mxu0 0.0
      %2566 = vmatmul.mubr.f32.gmra.mrb[0].mxu0 %v2369
      %v2567 = vpop.f32.mrb[0].mxu0
      %v2568 = vadd.f32 0.0, %v2567
      %v2569 = vpop.f32.mrb[0].mxu0
      %2570 = vmatprep.mubr.f32.mxu0 0.0
      %2571 = vmatmul.mubr.f32.gmra.mrb[0].mxu0 %v2372
      %v2572 = vpop.f32.mrb[0].mxu0
      %v2573 = vadd.f32 0.0, %v2572
      %v2574 = vpop.f32.mrb[0].mxu0
      %2575 = vmatprep.mubr.f32.mxu0 0.0
      %2576 = vmatmul.mubr.f32.gmra.mrb[0].mxu0 %v2375
      %v2577 = vpop.f32.mrb[0].mxu0
      %v2578 = vadd.f32 0.0, %v2577
      %v2579 = vpop.f32.mrb[0].mxu0
      %2580 = vmatprep.mubr.f32.mxu0 0.0
      %2581 = vmatmul.mubr.f32.gmra.mrb[0].mxu0 %v2378
      %v2582 = vpop.f32.mrb[0].mxu0
      %v2583 = vadd.f32 0.0, %v2582
      %v2584 = vpop.f32.mrb[0].mxu0
      %2585 = vmatprep.mubr.f32.mxu0 0.0
      %2586 = vmatmul.mubr.f32.gmra.mrb[0].mxu0 %v2381
      %v2587 = vpop.f32.mrb[0].mxu0
      %v2588 = vadd.f32 0.0, %v2587
      %v2589 = vpop.f32.mrb[0].mxu0
      %2590 = vmatprep.mubr.f32.mxu0 0.0
      %2591 = vmatmul.mubr.f32.gmra.mrb[0].mxu0 %v2384
      %v2592 = vpop.f32.mrb[0].mxu0
      %v2593 = vadd.f32 0.0, %v2592
      %v2594 = vpop.f32.mrb[0].mxu0
      %2595 = vmatprep.mubr.f32.mxu0 0.0
      %2596 = vmatmul.mubr.f32.gmra.mrb[0].mxu0 %v2387
      %v2597 = vpop.f32.mrb[0].mxu0
      %v2598 = vadd.f32 0.0, %v2597
      %v2599 = vpop.f32.mrb[0].mxu0
      %2600 = vmatprep.mubr.f32.mxu0 0.0
      %2601 = vmatmul.mubr.f32.gmra.mrb[0].mxu0 %v2390
      %v2602 = vpop.f32.mrb[0].mxu0
      %v2603 = vadd.f32 0.0, %v2602
      %v2604 = vpop.f32.mrb[0].mxu0
      %2605 = vmatprep.mubr.f32.mxu0 0.0
      %2606 = vmatmul.mubr.f32.gmra.mrb[0].mxu0 %v2393
      %v2607 = vpop.f32.mrb[0].mxu0
      %v2608 = vadd.f32 0.0, %v2607
      %v2609 = vpop.f32.mrb[0].mxu0
      %2610 = vmatprep.mubr.f32.mxu0 0.0
      %2611 = vmatmul.mubr.f32.gmra.mrb[0].mxu0 %v2396
      %v2612 = vpop.f32.mrb[0].mxu0
      %v2613 = vadd.f32 0.0, %v2612
      %v2614 = vpop.f32.mrb[0].mxu0
      %2615 = vmatprep.mubr.f32.mxu0 0.0
      %2616 = vmatmul.mubr.f32.gmra.mrb[0].mxu0 %v2399
      %v2617 = vpop.f32.mrb[0].mxu0
      %v2618 = vadd.f32 0.0, %v2617
      %v2619 = vpop.f32.mrb[0].mxu0
      %2620 = vmatprep.mubr.f32.mxu0 0.0
      %2621 = vmatmul.mubr.f32.gmra.mrb[0].mxu0 %v2402
      %v2622 = vpop.f32.mrb[0].mxu0
      %v2623 = vadd.f32 0.0, %v2622
      %v2624 = vpop.f32.mrb[0].mxu0
      %2625 = vmatprep.mubr.f32.mxu0 0.0
      %2626 = vmatmul.mubr.f32.gmra.mrb[0].mxu0 %v2405
      %v2627 = vpop.f32.mrb[0].mxu0
      %v2628 = vadd.f32 0.0, %v2627
      %v2629 = vpop.f32.mrb[0].mxu0
      %2630 = vmatprep.mubr.f32.mxu0 0.0
      %2631 = vmatmul.mubr.f32.gmra.mrb[0].mxu0 %v2408
      %v2632 = vpop.f32.mrb[0].mxu0
      %v2633 = vadd.f32 0.0, %v2632
      %v2634 = vpop.f32.mrb[0].mxu0
      %2635 = vmatprep.mubr.f32.mxu0 0.0
      %2636 = vmatmul.mubr.f32.gmra.mrb[0].mxu0 %v2411
      %v2637 = vpop.f32.mrb[0].mxu0
      %v2638 = vadd.f32 0.0, %v2637
      %v2639 = vpop.f32.mrb[0].mxu0
      %2640 = vdwg.mxu0
      %v2641 = vadd.f32 %v2247, %v2483
      %v2642 = vadd.f32 %v2248, %v2488
      %v2643 = vadd.f32 %v2249, %v2493
      %v2644 = vadd.f32 %v2250, %v2498
      %v2645 = vadd.f32 %v2251, %v2503
      %v2646 = vadd.f32 %v2252, %v2508
      %v2647 = vadd.f32 %v2253, %v2513
      %v2648 = vadd.f32 %v2254, %v2518
      %v2649 = vadd.f32 %v2255, %v2523
      %v2650 = vadd.f32 %v2256, %v2528
      %v2651 = vadd.f32 %v2257, %v2533
      %v2652 = vadd.f32 %v2258, %v2538
      %v2653 = vadd.f32 %v2259, %v2543
      %v2654 = vadd.f32 %v2260, %v2548
      %v2655 = vadd.f32 %v2261, %v2553
      %v2656 = vadd.f32 %v2262, %v2558
      %v2657 = vadd.f32 %v2263, %v2563
      %v2658 = vadd.f32 %v2264, %v2568
      %v2659 = vadd.f32 %v2265, %v2573
      %v2660 = vadd.f32 %v2266, %v2578
      %v2661 = vadd.f32 %v2267, %v2583
      %v2662 = vadd.f32 %v2268, %v2588
      %v2663 = vadd.f32 %v2269, %v2593
      %v2664 = vadd.f32 %v2270, %v2598
      %v2665 = vadd.f32 %v2271, %v2603
      %v2666 = vadd.f32 %v2272, %v2608
      %v2667 = vadd.f32 %v2273, %v2613
      %v2668 = vadd.f32 %v2274, %v2618
      %v2669 = vadd.f32 %v2275, %v2623
      %v2670 = vadd.f32 %v2276, %v2628
      %v2671 = vadd.f32 %v2277, %v2633
      %v2672 = vadd.f32 %v2278, %v2638
      %v2673 = vld [vmem:[%s269 + $0x12] sm:$0xff]
      %v2674 = vld [vmem:[%s269 + $0x1a] sm:$0xff]
      %v2675 = vld [vmem:[%s269 + $0x22] sm:$0xff]
      %v2676 = vld [vmem:[%s269 + $0x2a] sm:$0xff]
      %v2677 = vld [vmem:[%s269 + $0x32] sm:$0xff]
      %v2678 = vld [vmem:[%s269 + $0x3a] sm:$0xff]
      %v2679 = vld [vmem:[%s269 + $0x42] sm:$0xff]
      %v2680 = vld [vmem:[%s269 + $0x4a] sm:$0xff]
      %v2681 = vld [vmem:[%s269 + $0x52] sm:$0xff]
      %v2682 = vld [vmem:[%s269 + $0x5a] sm:$0xff]
      %v2683 = vld [vmem:[%s269 + $0x62] sm:$0xff]
      %v2684 = vld [vmem:[%s269 + $0x6a] sm:$0xff]
      %v2685 = vld [vmem:[%s269 + $0x72] sm:$0xff]
      %v2686 = vld [vmem:[%s269 + $0x7a] sm:$0xff]
      %v2687 = vld [vmem:[%s269 + $0x82] sm:$0xff]
      %v2688 = vld [vmem:[%s269 + $0x8a] sm:$0xff]
      %v2689 = vld [vmem:[%s269 + $0x92] sm:$0xff]
      %v2690 = vld [vmem:[%s269 + $0x9a] sm:$0xff]
      %v2691 = vld [vmem:[%s269 + $0xa2] sm:$0xff]
      %v2692 = vld [vmem:[%s269 + $0xaa] sm:$0xff]
      %v2693 = vld [vmem:[%s269 + $0xb2] sm:$0xff]
      %v2694 = vld [vmem:[%s269 + $0xba] sm:$0xff]
      %v2695 = vld [vmem:[%s269 + $0xc2] sm:$0xff]
      %v2696 = vld [vmem:[%s269 + $0xca] sm:$0xff]
      %v2697 = vld [vmem:[%s269 + $0xd2] sm:$0xff]
      %v2698 = vld [vmem:[%s269 + $0xda] sm:$0xff]
      %v2699 = vld [vmem:[%s269 + $0xe2] sm:$0xff]
      %v2700 = vld [vmem:[%s269 + $0xea] sm:$0xff]
      %v2701 = vld [vmem:[%s269 + $0xf2] sm:$0xff]
      %v2702 = vld [vmem:[%s269 + $0xfa] sm:$0xff]
      %v2703 = vld [vmem:[%s269 + $0x102] sm:$0xff]
      %v2704 = vld [vmem:[%s269 + $0x10a] sm:$0xff]
      %v2705 = vmul.f32 %v2673, %v1302
      %v2706 = vmul.f32 %v2674, %v1307
      %v2707 = vmul.f32 %v2675, %v1312
      %v2708 = vmul.f32 %v2676, %v1317
      %v2709 = vmul.f32 %v2677, %v1322
      %v2710 = vmul.f32 %v2678, %v1327
      %v2711 = vmul.f32 %v2679, %v1332
      %v2712 = vmul.f32 %v2680, %v1337
      %v2713 = vmul.f32 %v2681, %v1342
      %v2714 = vmul.f32 %v2682, %v1347
      %v2715 = vmul.f32 %v2683, %v1352
      %v2716 = vmul.f32 %v2684, %v1357
      %v2717 = vmul.f32 %v2685, %v1362
      %v2718 = vmul.f32 %v2686, %v1367
      %v2719 = vmul.f32 %v2687, %v1372
      %v2720 = vmul.f32 %v2688, %v1377
      %v2721 = vmul.f32 %v2689, %v1382
      %v2722 = vmul.f32 %v2690, %v1387
      %v2723 = vmul.f32 %v2691, %v1392
      %v2724 = vmul.f32 %v2692, %v1397
      %v2725 = vmul.f32 %v2693, %v1402
      %v2726 = vmul.f32 %v2694, %v1407
      %v2727 = vmul.f32 %v2695, %v1412
      %v2728 = vmul.f32 %v2696, %v1417
      %v2729 = vmul.f32 %v2697, %v1422
      %v2730 = vmul.f32 %v2698, %v1427
      %v2731 = vmul.f32 %v2699, %v1432
      %v2732 = vmul.f32 %v2700, %v1437
      %v2733 = vmul.f32 %v2701, %v1442
      %v2734 = vmul.f32 %v2702, %v1447
      %v2735 = vmul.f32 %v2703, %v1452
      %v2736 = vmul.f32 %v2704, %v1457
      %s2737 = scalar_lea.vmem %s2, 200
      %v2738 = vld [vmem:[%s2737] sm:$0xff]
      %v2739 = vld [vmem:[%s2737 + $0x8] sm:$0xff]
      %v2740 = vld [vmem:[%s2737 + $0x10] sm:$0xff]
      %v2741 = vld [vmem:[%s2737 + $0x18] sm:$0xff]
      %v2742 = vld [vmem:[%s2737 + $0x20] sm:$0xf]
      %v2744 = vsel %vm584, %v2705, 0
      %v2747 = vsel %vm584, %v2706, 0
      %v2750 = vsel %vm584, %v2707, 0
      %v2753 = vsel %vm584, %v2708, 0
      %v2756 = vsel %vm584, %v2709, 0
      %v2759 = vsel %vm584, %v2710, 0
      %v2762 = vsel %vm584, %v2711, 0
      %v2765 = vsel %vm584, %v2712, 0
      %v2768 = vsel %vm584, %v2713, 0
      %v2771 = vsel %vm584, %v2714, 0
      %v2774 = vsel %vm584, %v2715, 0
      %v2777 = vsel %vm584, %v2716, 0
      %v2780 = vsel %vm584, %v2717, 0
      %v2783 = vsel %vm584, %v2718, 0
      %v2786 = vsel %vm584, %v2719, 0
      %v2789 = vsel %vm584, %v2720, 0
      %v2792 = vsel %vm584, %v2721, 0
      %v2795 = vsel %vm584, %v2722, 0
      %v2798 = vsel %vm584, %v2723, 0
      %v2801 = vsel %vm584, %v2724, 0
      %v2804 = vsel %vm584, %v2725, 0
      %v2807 = vsel %vm584, %v2726, 0
      %v2810 = vsel %vm584, %v2727, 0
      %v2813 = vsel %vm584, %v2728, 0
      %v2816 = vsel %vm584, %v2729, 0
      %v2819 = vsel %vm584, %v2730, 0
      %v2822 = vsel %vm584, %v2731, 0
      %v2825 = vsel %vm584, %v2732, 0
      %v2828 = vsel %vm584, %v2733, 0
      %v2831 = vsel %vm584, %v2734, 0
      %v2834 = vsel %vm584, %v2735, 0
      %v2837 = vsel %vm584, %v2736, 0
      %v2840 = vsel %vm681, %v2742, 0
      %2842 = vmatprep.subr.mxu0 0.0
      %2843 = vmatpush1.msra.mxu0 %v2738
      %2844 = vmatprep.subr.mxu0 0.0
      %2845 = vmatpush1.msra.mxu0 %v2739
      %2846 = vmatprep.subr.mxu0 0.0
      %2847 = vmatpush1.msra.mxu0 %v2740
      %2848 = vmatprep.subr.mxu0 0.0
      %2849 = vmatpush1.msra.mxu0 %v2741
      %2850 = vmatprep.subr.mxu0 0.0
      %2851 = vmatpush1.msra.mxu0 %v2840
      %2852 = vmatprep.subr.mxu0 0.0
      %2853 = vmatpush1.msra.mxu0 0.0
      %2854 = vmatprep.subr.mxu0 0.0
      %2855 = vmatpush1.msra.mxu0 0.0
      %2856 = vmatprep.subr.mxu0 0.0
      %2857 = vmatpush1.msra.mxu0 0.0
      %2858 = vmatprep.subr.mxu0 0.0
      %2859 = vmatpush1.msra.mxu0 0.0
      %2860 = vmatprep.subr.mxu0 0.0
      %2861 = vmatpush1.msra.mxu0 0.0
      %2862 = vmatprep.subr.mxu0 0.0
      %2863 = vmatpush1.msra.mxu0 0.0
      %2864 = vmatprep.subr.mxu0 0.0
      %2865 = vmatpush1.msra.mxu0 0.0
      %2866 = vmatprep.subr.mxu0 0.0
      %2867 = vmatpush1.msra.mxu0 0.0
      %2868 = vmatprep.subr.mxu0 0.0
      %2869 = vmatpush1.msra.mxu0 0.0
      %2870 = vmatprep.subr.mxu0 0.0
      %2871 = vmatpush1.msra.mxu0 0.0
      %2872 = vmatprep.subr.mxu0 0.0
      %2873 = vmatpush1.msra.mxu0 0.0
      %2874 = vmatprep.subr.mxu0 0.0
      %2875 = vmatpush1.msra.mxu0 0.0
      %2876 = vmatprep.subr.mxu0 0.0
      %2877 = vmatpush1.msra.mxu0 0.0
      %2878 = vmatprep.subr.mxu0 0.0
      %2879 = vmatpush1.msra.mxu0 0.0
      %2880 = vmatprep.subr.mxu0 0.0
      %2881 = vmatpush1.msra.mxu0 0.0
      %2882 = vmatprep.subr.mxu0 0.0
      %2883 = vmatpush1.msra.mxu0 0.0
      %2884 = vmatprep.subr.mxu0 0.0
      %2885 = vmatpush1.msra.mxu0 0.0
      %2886 = vmatprep.subr.mxu0 0.0
      %2887 = vmatpush1.msra.mxu0 0.0
      %2888 = vmatprep.subr.mxu0 0.0
      %2889 = vmatpush1.msra.mxu0 0.0
      %2890 = vmatprep.subr.mxu0 0.0
      %2891 = vmatpush1.msra.mxu0 0.0
      %2892 = vmatprep.subr.mxu0 0.0
      %2893 = vmatpush1.msra.mxu0 0.0
      %2894 = vmatprep.subr.mxu0 0.0
      %2895 = vmatpush1.msra.mxu0 0.0
      %2896 = vmatprep.subr.mxu0 0.0
      %2897 = vmatpush1.msra.mxu0 0.0
      %2898 = vmatprep.subr.mxu0 0.0
      %2899 = vmatpush1.msra.mxu0 0.0
      %2900 = vmatprep.subr.mxu0 0.0
      %2901 = vmatpush1.msra.mxu0 0.0
      %2902 = vmatprep.subr.mxu0 0.0
      %2903 = vmatpush1.msra.mxu0 0.0
      %2904 = vmatprep.subr.mxu0 0.0
      %2905 = vmatpush1.msra.mxu0 0.0
      %2906 = vmatprep.mubr.f32.mxu0 0.0
      %2907 = vmatmul.mubr.f32.gmra.mrb[0].mxu0 %v2744
      %v2908 = vpop.f32.mrb[0].mxu0
      %v2909 = vadd.f32 0.0, %v2908
      %v2910 = vpop.f32.mrb[0].mxu0
      %2911 = vmatprep.mubr.f32.mxu0 0.0
      %2912 = vmatmul.mubr.f32.gmra.mrb[0].mxu0 %v2747
      %v2913 = vpop.f32.mrb[0].mxu0
      %v2914 = vadd.f32 0.0, %v2913
      %v2915 = vpop.f32.mrb[0].mxu0
      %2916 = vmatprep.mubr.f32.mxu0 0.0
      %2917 = vmatmul.mubr.f32.gmra.mrb[0].mxu0 %v2750
      %v2918 = vpop.f32.mrb[0].mxu0
      %v2919 = vadd.f32 0.0, %v2918
      %v2920 = vpop.f32.mrb[0].mxu0
      %2921 = vmatprep.mubr.f32.mxu0 0.0
      %2922 = vmatmul.mubr.f32.gmra.mrb[0].mxu0 %v2753
      %v2923 = vpop.f32.mrb[0].mxu0
      %v2924 = vadd.f32 0.0, %v2923
      %v2925 = vpop.f32.mrb[0].mxu0
      %2926 = vmatprep.mubr.f32.mxu0 0.0
      %2927 = vmatmul.mubr.f32.gmra.mrb[0].mxu0 %v2756
      %v2928 = vpop.f32.mrb[0].mxu0
      %v2929 = vadd.f32 0.0, %v2928
      %v2930 = vpop.f32.mrb[0].mxu0
      %2931 = vmatprep.mubr.f32.mxu0 0.0
      %2932 = vmatmul.mubr.f32.gmra.mrb[0].mxu0 %v2759
      %v2933 = vpop.f32.mrb[0].mxu0
      %v2934 = vadd.f32 0.0, %v2933
      %v2935 = vpop.f32.mrb[0].mxu0
      %2936 = vmatprep.mubr.f32.mxu0 0.0
      %2937 = vmatmul.mubr.f32.gmra.mrb[0].mxu0 %v2762
      %v2938 = vpop.f32.mrb[0].mxu0
      %v2939 = vadd.f32 0.0, %v2938
      %v2940 = vpop.f32.mrb[0].mxu0
      %2941 = vmatprep.mubr.f32.mxu0 0.0
      %2942 = vmatmul.mubr.f32.gmra.mrb[0].mxu0 %v2765
      %v2943 = vpop.f32.mrb[0].mxu0
      %v2944 = vadd.f32 0.0, %v2943
      %v2945 = vpop.f32.mrb[0].mxu0
      %2946 = vmatprep.mubr.f32.mxu0 0.0
      %2947 = vmatmul.mubr.f32.gmra.mrb[0].mxu0 %v2768
      %v2948 = vpop.f32.mrb[0].mxu0
      %v2949 = vadd.f32 0.0, %v2948
      %v2950 = vpop.f32.mrb[0].mxu0
      %2951 = vmatprep.mubr.f32.mxu0 0.0
      %2952 = vmatmul.mubr.f32.gmra.mrb[0].mxu0 %v2771
      %v2953 = vpop.f32.mrb[0].mxu0
      %v2954 = vadd.f32 0.0, %v2953
      %v2955 = vpop.f32.mrb[0].mxu0
      %2956 = vmatprep.mubr.f32.mxu0 0.0
      %2957 = vmatmul.mubr.f32.gmra.mrb[0].mxu0 %v2774
      %v2958 = vpop.f32.mrb[0].mxu0
      %v2959 = vadd.f32 0.0, %v2958
      %v2960 = vpop.f32.mrb[0].mxu0
      %2961 = vmatprep.mubr.f32.mxu0 0.0
      %2962 = vmatmul.mubr.f32.gmra.mrb[0].mxu0 %v2777
      %v2963 = vpop.f32.mrb[0].mxu0
      %v2964 = vadd.f32 0.0, %v2963
      %v2965 = vpop.f32.mrb[0].mxu0
      %2966 = vmatprep.mubr.f32.mxu0 0.0
      %2967 = vmatmul.mubr.f32.gmra.mrb[0].mxu0 %v2780
      %v2968 = vpop.f32.mrb[0].mxu0
      %v2969 = vadd.f32 0.0, %v2968
      %v2970 = vpop.f32.mrb[0].mxu0
      %2971 = vmatprep.mubr.f32.mxu0 0.0
      %2972 = vmatmul.mubr.f32.gmra.mrb[0].mxu0 %v2783
      %v2973 = vpop.f32.mrb[0].mxu0
      %v2974 = vadd.f32 0.0, %v2973
      %v2975 = vpop.f32.mrb[0].mxu0
      %2976 = vmatprep.mubr.f32.mxu0 0.0
      %2977 = vmatmul.mubr.f32.gmra.mrb[0].mxu0 %v2786
      %v2978 = vpop.f32.mrb[0].mxu0
      %v2979 = vadd.f32 0.0, %v2978
      %v2980 = vpop.f32.mrb[0].mxu0
      %2981 = vmatprep.mubr.f32.mxu0 0.0
      %2982 = vmatmul.mubr.f32.gmra.mrb[0].mxu0 %v2789
      %v2983 = vpop.f32.mrb[0].mxu0
      %v2984 = vadd.f32 0.0, %v2983
      %v2985 = vpop.f32.mrb[0].mxu0
      %2986 = vmatprep.mubr.f32.mxu0 0.0
      %2987 = vmatmul.mubr.f32.gmra.mrb[0].mxu0 %v2792
      %v2988 = vpop.f32.mrb[0].mxu0
      %v2989 = vadd.f32 0.0, %v2988
      %v2990 = vpop.f32.mrb[0].mxu0
      %2991 = vmatprep.mubr.f32.mxu0 0.0
      %2992 = vmatmul.mubr.f32.gmra.mrb[0].mxu0 %v2795
      %v2993 = vpop.f32.mrb[0].mxu0
      %v2994 = vadd.f32 0.0, %v2993
      %v2995 = vpop.f32.mrb[0].mxu0
      %2996 = vmatprep.mubr.f32.mxu0 0.0
      %2997 = vmatmul.mubr.f32.gmra.mrb[0].mxu0 %v2798
      %v2998 = vpop.f32.mrb[0].mxu0
      %v2999 = vadd.f32 0.0, %v2998
      %v3000 = vpop.f32.mrb[0].mxu0
      %3001 = vmatprep.mubr.f32.mxu0 0.0
      %3002 = vmatmul.mubr.f32.gmra.mrb[0].mxu0 %v2801
      %v3003 = vpop.f32.mrb[0].mxu0
      %v3004 = vadd.f32 0.0, %v3003
      %v3005 = vpop.f32.mrb[0].mxu0
      %3006 = vmatprep.mubr.f32.mxu0 0.0
      %3007 = vmatmul.mubr.f32.gmra.mrb[0].mxu0 %v2804
      %v3008 = vpop.f32.mrb[0].mxu0
      %v3009 = vadd.f32 0.0, %v3008
      %v3010 = vpop.f32.mrb[0].mxu0
      %3011 = vmatprep.mubr.f32.mxu0 0.0
      %3012 = vmatmul.mubr.f32.gmra.mrb[0].mxu0 %v2807
      %v3013 = vpop.f32.mrb[0].mxu0
      %v3014 = vadd.f32 0.0, %v3013
      %v3015 = vpop.f32.mrb[0].mxu0
      %3016 = vmatprep.mubr.f32.mxu0 0.0
      %3017 = vmatmul.mubr.f32.gmra.mrb[0].mxu0 %v2810
      %v3018 = vpop.f32.mrb[0].mxu0
      %v3019 = vadd.f32 0.0, %v3018
      %v3020 = vpop.f32.mrb[0].mxu0
      %3021 = vmatprep.mubr.f32.mxu0 0.0
      %3022 = vmatmul.mubr.f32.gmra.mrb[0].mxu0 %v2813
      %v3023 = vpop.f32.mrb[0].mxu0
      %v3024 = vadd.f32 0.0, %v3023
      %v3025 = vpop.f32.mrb[0].mxu0
      %3026 = vmatprep.mubr.f32.mxu0 0.0
      %3027 = vmatmul.mubr.f32.gmra.mrb[0].mxu0 %v2816
      %v3028 = vpop.f32.mrb[0].mxu0
      %v3029 = vadd.f32 0.0, %v3028
      %v3030 = vpop.f32.mrb[0].mxu0
      %3031 = vmatprep.mubr.f32.mxu0 0.0
      %3032 = vmatmul.mubr.f32.gmra.mrb[0].mxu0 %v2819
      %v3033 = vpop.f32.mrb[0].mxu0
      %v3034 = vadd.f32 0.0, %v3033
      %v3035 = vpop.f32.mrb[0].mxu0
      %3036 = vmatprep.mubr.f32.mxu0 0.0
      %3037 = vmatmul.mubr.f32.gmra.mrb[0].mxu0 %v2822
      %v3038 = vpop.f32.mrb[0].mxu0
      %v3039 = vadd.f32 0.0, %v3038
      %v3040 = vpop.f32.mrb[0].mxu0
      %3041 = vmatprep.mubr.f32.mxu0 0.0
      %3042 = vmatmul.mubr.f32.gmra.mrb[0].mxu0 %v2825
      %v3043 = vpop.f32.mrb[0].mxu0
      %v3044 = vadd.f32 0.0, %v3043
      %v3045 = vpop.f32.mrb[0].mxu0
      %3046 = vmatprep.mubr.f32.mxu0 0.0
      %3047 = vmatmul.mubr.f32.gmra.mrb[0].mxu0 %v2828
      %v3048 = vpop.f32.mrb[0].mxu0
      %v3049 = vadd.f32 0.0, %v3048
      %v3050 = vpop.f32.mrb[0].mxu0
      %3051 = vmatprep.mubr.f32.mxu0 0.0
      %3052 = vmatmul.mubr.f32.gmra.mrb[0].mxu0 %v2831
      %v3053 = vpop.f32.mrb[0].mxu0
      %v3054 = vadd.f32 0.0, %v3053
      %v3055 = vpop.f32.mrb[0].mxu0
      %3056 = vmatprep.mubr.f32.mxu0 0.0
      %3057 = vmatmul.mubr.f32.gmra.mrb[0].mxu0 %v2834
      %v3058 = vpop.f32.mrb[0].mxu0
      %v3059 = vadd.f32 0.0, %v3058
      %v3060 = vpop.f32.mrb[0].mxu0
      %3061 = vmatprep.mubr.f32.mxu0 0.0
      %3062 = vmatmul.mubr.f32.gmra.mrb[0].mxu0 %v2837
      %v3063 = vpop.f32.mrb[0].mxu0
      %v3064 = vadd.f32 0.0, %v3063
      %v3065 = vpop.f32.mrb[0].mxu0
      %3066 = vdwg.mxu0
      %v3067 = vadd.f32 %v2641, %v2909
      %v3068 = vadd.f32 %v2642, %v2914
      %v3069 = vadd.f32 %v2643, %v2919
      %v3070 = vadd.f32 %v2644, %v2924
      %v3071 = vadd.f32 %v2645, %v2929
      %v3072 = vadd.f32 %v2646, %v2934
      %v3073 = vadd.f32 %v2647, %v2939
      %v3074 = vadd.f32 %v2648, %v2944
      %v3075 = vadd.f32 %v2649, %v2949
      %v3076 = vadd.f32 %v2650, %v2954
      %v3077 = vadd.f32 %v2651, %v2959
      %v3078 = vadd.f32 %v2652, %v2964
      %v3079 = vadd.f32 %v2653, %v2969
      %v3080 = vadd.f32 %v2654, %v2974
      %v3081 = vadd.f32 %v2655, %v2979
      %v3082 = vadd.f32 %v2656, %v2984
      %v3083 = vadd.f32 %v2657, %v2989
      %v3084 = vadd.f32 %v2658, %v2994
      %v3085 = vadd.f32 %v2659, %v2999
      %v3086 = vadd.f32 %v2660, %v3004
      %v3087 = vadd.f32 %v2661, %v3009
      %v3088 = vadd.f32 %v2662, %v3014
      %v3089 = vadd.f32 %v2663, %v3019
      %v3090 = vadd.f32 %v2664, %v3024
      %v3091 = vadd.f32 %v2665, %v3029
      %v3092 = vadd.f32 %v2666, %v3034
      %v3093 = vadd.f32 %v2667, %v3039
      %v3094 = vadd.f32 %v2668, %v3044
      %v3095 = vadd.f32 %v2669, %v3049
      %v3096 = vadd.f32 %v2670, %v3054
      %v3097 = vadd.f32 %v2671, %v3059
      %v3098 = vadd.f32 %v2672, %v3064
      %v3099 = vld [vmem:[%s269 + $0x20] sm:$0xff]
      %v3100 = vld [vmem:[%s269 + $0x28] sm:$0xff]
      %v3101 = vld [vmem:[%s269 + $0x30] sm:$0xff]
      %v3102 = vld [vmem:[%s269 + $0x38] sm:$0xff]
      %v3103 = vld [vmem:[%s269 + $0x40] sm:$0xff]
      %v3104 = vld [vmem:[%s269 + $0x48] sm:$0xff]
      %v3105 = vld [vmem:[%s269 + $0x50] sm:$0xff]
      %v3106 = vld [vmem:[%s269 + $0x58] sm:$0xff]
      %v3107 = vld [vmem:[%s269 + $0x60] sm:$0xff]
      %v3108 = vld [vmem:[%s269 + $0x68] sm:$0xff]
      %v3109 = vld [vmem:[%s269 + $0x70] sm:$0xff]
      %v3110 = vld [vmem:[%s269 + $0x78] sm:$0xff]
      %v3111 = vld [vmem:[%s269 + $0x80] sm:$0xff]
      %v3112 = vld [vmem:[%s269 + $0x88] sm:$0xff]
      %v3113 = vld [vmem:[%s269 + $0x90] sm:$0xff]
      %v3114 = vld [vmem:[%s269 + $0x98] sm:$0xff]
      %v3115 = vld [vmem:[%s269 + $0xa0] sm:$0xff]
      %v3116 = vld [vmem:[%s269 + $0xa8] sm:$0xff]
      %v3117 = vld [vmem:[%s269 + $0xb0] sm:$0xff]
      %v3118 = vld [vmem:[%s269 + $0xb8] sm:$0xff]
      %v3119 = vld [vmem:[%s269 + $0xc0] sm:$0xff]
      %v3120 = vld [vmem:[%s269 + $0xc8] sm:$0xff]
      %v3121 = vld [vmem:[%s269 + $0xd0] sm:$0xff]
      %v3122 = vld [vmem:[%s269 + $0xd8] sm:$0xff]
      %v3123 = vld [vmem:[%s269 + $0xe0] sm:$0xff]
      %v3124 = vld [vmem:[%s269 + $0xe8] sm:$0xff]
      %v3125 = vld [vmem:[%s269 + $0xf0] sm:$0xff]
      %v3126 = vld [vmem:[%s269 + $0xf8] sm:$0xff]
      %v3127 = vld [vmem:[%s269 + $0x100] sm:$0xff]
      %v3128 = vld [vmem:[%s269 + $0x108] sm:$0xff]
      %v3129 = vld [vmem:[%s269 + $0x110] sm:$0xff]
      %v3130 = vld [vmem:[%s269 + $0x118] sm:$0xff]
      %v3131 = vmul.f32 %v3099, %v352
      %v3132 = vmul.f32 %v3100, %v357
      %v3133 = vmul.f32 %v3101, %v362
      %v3134 = vmul.f32 %v3102, %v367
      %v3135 = vmul.f32 %v3103, %v372
      %v3136 = vmul.f32 %v3104, %v377
      %v3137 = vmul.f32 %v3105, %v382
      %v3138 = vmul.f32 %v3106, %v387
      %v3139 = vmul.f32 %v3107, %v392
      %v3140 = vmul.f32 %v3108, %v397
      %v3141 = vmul.f32 %v3109, %v402
      %v3142 = vmul.f32 %v3110, %v407
      %v3143 = vmul.f32 %v3111, %v412
      %v3144 = vmul.f32 %v3112, %v417
      %v3145 = vmul.f32 %v3113, %v422
      %v3146 = vmul.f32 %v3114, %v427
      %v3147 = vmul.f32 %v3115, %v432
      %v3148 = vmul.f32 %v3116, %v437
      %v3149 = vmul.f32 %v3117, %v442
      %v3150 = vmul.f32 %v3118, %v447
      %v3151 = vmul.f32 %v3119, %v452
      %v3152 = vmul.f32 %v3120, %v457
      %v3153 = vmul.f32 %v3121, %v462
      %v3154 = vmul.f32 %v3122, %v467
      %v3155 = vmul.f32 %v3123, %v472
      %v3156 = vmul.f32 %v3124, %v477
      %v3157 = vmul.f32 %v3125, %v482
      %v3158 = vmul.f32 %v3126, %v487
      %v3159 = vmul.f32 %v3127, %v492
      %v3160 = vmul.f32 %v3128, %v497
      %v3161 = vmul.f32 %v3129, %v502
      %v3162 = vmul.f32 %v3130, %v507
      %s3163 = scalar_lea.vmem %s2, 240
      %v3164 = vld [vmem:[%s3163] sm:$0xff]
      %v3165 = vld [vmem:[%s3163 + $0x8] sm:$0xff]
      %v3166 = vld [vmem:[%s3163 + $0x10] sm:$0xff]
      %v3167 = vld [vmem:[%s3163 + $0x18] sm:$0xff]
      %v3168 = vld [vmem:[%s3163 + $0x20] sm:$0xf]
      %v3170 = vsel %vm584, %v3131, 0
      %v3173 = vsel %vm584, %v3132, 0
      %v3176 = vsel %vm584, %v3133, 0
      %v3179 = vsel %vm584, %v3134, 0
      %v3182 = vsel %vm584, %v3135, 0
      %v3185 = vsel %vm584, %v3136, 0
      %v3188 = vsel %vm584, %v3137, 0
      %v3191 = vsel %vm584, %v3138, 0
      %v3194 = vsel %vm584, %v3139, 0
      %v3197 = vsel %vm584, %v3140, 0
      %v3200 = vsel %vm584, %v3141, 0
      %v3203 = vsel %vm584, %v3142, 0
      %v3206 = vsel %vm584, %v3143, 0
      %v3209 = vsel %vm584, %v3144, 0
      %v3212 = vsel %vm584, %v3145, 0
      %v3215 = vsel %vm584, %v3146, 0
      %v3218 = vsel %vm584, %v3147, 0
      %v3221 = vsel %vm584, %v3148, 0
      %v3224 = vsel %vm584, %v3149, 0
      %v3227 = vsel %vm584, %v3150, 0
      %v3230 = vsel %vm584, %v3151, 0
      %v3233 = vsel %vm584, %v3152, 0
      %v3236 = vsel %vm584, %v3153, 0
      %v3239 = vsel %vm584, %v3154, 0
      %v3242 = vsel %vm584, %v3155, 0
      %v3245 = vsel %vm584, %v3156, 0
      %v3248 = vsel %vm584, %v3157, 0
      %v3251 = vsel %vm584, %v3158, 0
      %v3254 = vsel %vm584, %v3159, 0
      %v3257 = vsel %vm584, %v3160, 0
      %v3260 = vsel %vm584, %v3161, 0
      %v3263 = vsel %vm584, %v3162, 0
      %v3266 = vsel %vm681, %v3168, 0
      %3268 = vmatprep.subr.mxu0 0.0
      %3269 = vmatpush1.msra.mxu0 %v3164
      %3270 = vmatprep.subr.mxu0 0.0
      %3271 = vmatpush1.msra.mxu0 %v3165
      %3272 = vmatprep.subr.mxu0 0.0
      %3273 = vmatpush1.msra.mxu0 %v3166
      %3274 = vmatprep.subr.mxu0 0.0
      %3275 = vmatpush1.msra.mxu0 %v3167
      %3276 = vmatprep.subr.mxu0 0.0
      %3277 = vmatpush1.msra.mxu0 %v3266
      %3278 = vmatprep.subr.mxu0 0.0
      %3279 = vmatpush1.msra.mxu0 0.0
      %3280 = vmatprep.subr.mxu0 0.0
      %3281 = vmatpush1.msra.mxu0 0.0
      %3282 = vmatprep.subr.mxu0 0.0
      %3283 = vmatpush1.msra.mxu0 0.0
      %3284 = vmatprep.subr.mxu0 0.0
      %3285 = vmatpush1.msra.mxu0 0.0
      %3286 = vmatprep.subr.mxu0 0.0
      %3287 = vmatpush1.msra.mxu0 0.0
      %3288 = vmatprep.subr.mxu0 0.0
      %3289 = vmatpush1.msra.mxu0 0.0
      %3290 = vmatprep.subr.mxu0 0.0
      %3291 = vmatpush1.msra.mxu0 0.0
      %3292 = vmatprep.subr.mxu0 0.0
      %3293 = vmatpush1.msra.mxu0 0.0
      %3294 = vmatprep.subr.mxu0 0.0
      %3295 = vmatpush1.msra.mxu0 0.0
      %3296 = vmatprep.subr.mxu0 0.0
      %3297 = vmatpush1.msra.mxu0 0.0
      %3298 = vmatprep.subr.mxu0 0.0
      %3299 = vmatpush1.msra.mxu0 0.0
      %3300 = vmatprep.subr.mxu0 0.0
      %3301 = vmatpush1.msra.mxu0 0.0
      %3302 = vmatprep.subr.mxu0 0.0
      %3303 = vmatpush1.msra.mxu0 0.0
      %3304 = vmatprep.subr.mxu0 0.0
      %3305 = vmatpush1.msra.mxu0 0.0
      %3306 = vmatprep.subr.mxu0 0.0
      %3307 = vmatpush1.msra.mxu0 0.0
      %3308 = vmatprep.subr.mxu0 0.0
      %3309 = vmatpush1.msra.mxu0 0.0
      %3310 = vmatprep.subr.mxu0 0.0
      %3311 = vmatpush1.msra.mxu0 0.0
      %3312 = vmatprep.subr.mxu0 0.0
      %3313 = vmatpush1.msra.mxu0 0.0
      %3314 = vmatprep.subr.mxu0 0.0
      %3315 = vmatpush1.msra.mxu0 0.0
      %3316 = vmatprep.subr.mxu0 0.0
      %3317 = vmatpush1.msra.mxu0 0.0
      %3318 = vmatprep.subr.mxu0 0.0
      %3319 = vmatpush1.msra.mxu0 0.0
      %3320 = vmatprep.subr.mxu0 0.0
      %3321 = vmatpush1.msra.mxu0 0.0
      %3322 = vmatprep.subr.mxu0 0.0
      %3323 = vmatpush1.msra.mxu0 0.0
      %3324 = vmatprep.subr.mxu0 0.0
      %3325 = vmatpush1.msra.mxu0 0.0
      %3326 = vmatprep.subr.mxu0 0.0
      %3327 = vmatpush1.msra.mxu0 0.0
      %3328 = vmatprep.subr.mxu0 0.0
      %3329 = vmatpush1.msra.mxu0 0.0
      %3330 = vmatprep.subr.mxu0 0.0
      %3331 = vmatpush1.msra.mxu0 0.0
      %3332 = vmatprep.mubr.f32.mxu0 0.0
      %3333 = vmatmul.mubr.f32.gmra.mrb[0].mxu0 %v3170
      %v3334 = vpop.f32.mrb[0].mxu0
      %v3335 = vadd.f32 0.0, %v3334
      %v3336 = vpop.f32.mrb[0].mxu0
      %3337 = vmatprep.mubr.f32.mxu0 0.0
      %3338 = vmatmul.mubr.f32.gmra.mrb[0].mxu0 %v3173
      %v3339 = vpop.f32.mrb[0].mxu0
      %v3340 = vadd.f32 0.0, %v3339
      %v3341 = vpop.f32.mrb[0].mxu0
      %3342 = vmatprep.mubr.f32.mxu0 0.0
      %3343 = vmatmul.mubr.f32.gmra.mrb[0].mxu0 %v3176
      %v3344 = vpop.f32.mrb[0].mxu0
      %v3345 = vadd.f32 0.0, %v3344
      %v3346 = vpop.f32.mrb[0].mxu0
      %3347 = vmatprep.mubr.f32.mxu0 0.0
      %3348 = vmatmul.mubr.f32.gmra.mrb[0].mxu0 %v3179
      %v3349 = vpop.f32.mrb[0].mxu0
      %v3350 = vadd.f32 0.0, %v3349
      %v3351 = vpop.f32.mrb[0].mxu0
      %3352 = vmatprep.mubr.f32.mxu0 0.0
      %3353 = vmatmul.mubr.f32.gmra.mrb[0].mxu0 %v3182
      %v3354 = vpop.f32.mrb[0].mxu0
      %v3355 = vadd.f32 0.0, %v3354
      %v3356 = vpop.f32.mrb[0].mxu0
      %3357 = vmatprep.mubr.f32.mxu0 0.0
      %3358 = vmatmul.mubr.f32.gmra.mrb[0].mxu0 %v3185
      %v3359 = vpop.f32.mrb[0].mxu0
      %v3360 = vadd.f32 0.0, %v3359
      %v3361 = vpop.f32.mrb[0].mxu0
      %3362 = vmatprep.mubr.f32.mxu0 0.0
      %3363 = vmatmul.mubr.f32.gmra.mrb[0].mxu0 %v3188
      %v3364 = vpop.f32.mrb[0].mxu0
      %v3365 = vadd.f32 0.0, %v3364
      %v3366 = vpop.f32.mrb[0].mxu0
      %3367 = vmatprep.mubr.f32.mxu0 0.0
      %3368 = vmatmul.mubr.f32.gmra.mrb[0].mxu0 %v3191
      %v3369 = vpop.f32.mrb[0].mxu0
      %v3370 = vadd.f32 0.0, %v3369
      %v3371 = vpop.f32.mrb[0].mxu0
      %3372 = vmatprep.mubr.f32.mxu0 0.0
      %3373 = vmatmul.mubr.f32.gmra.mrb[0].mxu0 %v3194
      %v3374 = vpop.f32.mrb[0].mxu0
      %v3375 = vadd.f32 0.0, %v3374
      %v3376 = vpop.f32.mrb[0].mxu0
      %3377 = vmatprep.mubr.f32.mxu0 0.0
      %3378 = vmatmul.mubr.f32.gmra.mrb[0].mxu0 %v3197
      %v3379 = vpop.f32.mrb[0].mxu0
      %v3380 = vadd.f32 0.0, %v3379
      %v3381 = vpop.f32.mrb[0].mxu0
      %3382 = vmatprep.mubr.f32.mxu0 0.0
      %3383 = vmatmul.mubr.f32.gmra.mrb[0].mxu0 %v3200
      %v3384 = vpop.f32.mrb[0].mxu0
      %v3385 = vadd.f32 0.0, %v3384
      %v3386 = vpop.f32.mrb[0].mxu0
      %3387 = vmatprep.mubr.f32.mxu0 0.0
      %3388 = vmatmul.mubr.f32.gmra.mrb[0].mxu0 %v3203
      %v3389 = vpop.f32.mrb[0].mxu0
      %v3390 = vadd.f32 0.0, %v3389
      %v3391 = vpop.f32.mrb[0].mxu0
      %3392 = vmatprep.mubr.f32.mxu0 0.0
      %3393 = vmatmul.mubr.f32.gmra.mrb[0].mxu0 %v3206
      %v3394 = vpop.f32.mrb[0].mxu0
      %v3395 = vadd.f32 0.0, %v3394
      %v3396 = vpop.f32.mrb[0].mxu0
      %3397 = vmatprep.mubr.f32.mxu0 0.0
      %3398 = vmatmul.mubr.f32.gmra.mrb[0].mxu0 %v3209
      %v3399 = vpop.f32.mrb[0].mxu0
      %v3400 = vadd.f32 0.0, %v3399
      %v3401 = vpop.f32.mrb[0].mxu0
      %3402 = vmatprep.mubr.f32.mxu0 0.0
      %3403 = vmatmul.mubr.f32.gmra.mrb[0].mxu0 %v3212
      %v3404 = vpop.f32.mrb[0].mxu0
      %v3405 = vadd.f32 0.0, %v3404
      %v3406 = vpop.f32.mrb[0].mxu0
      %3407 = vmatprep.mubr.f32.mxu0 0.0
      %3408 = vmatmul.mubr.f32.gmra.mrb[0].mxu0 %v3215
      %v3409 = vpop.f32.mrb[0].mxu0
      %v3410 = vadd.f32 0.0, %v3409
      %v3411 = vpop.f32.mrb[0].mxu0
      %3412 = vmatprep.mubr.f32.mxu0 0.0
      %3413 = vmatmul.mubr.f32.gmra.mrb[0].mxu0 %v3218
      %v3414 = vpop.f32.mrb[0].mxu0
      %v3415 = vadd.f32 0.0, %v3414
      %v3416 = vpop.f32.mrb[0].mxu0
      %3417 = vmatprep.mubr.f32.mxu0 0.0
      %3418 = vmatmul.mubr.f32.gmra.mrb[0].mxu0 %v3221
      %v3419 = vpop.f32.mrb[0].mxu0
      %v3420 = vadd.f32 0.0, %v3419
      %v3421 = vpop.f32.mrb[0].mxu0
      %3422 = vmatprep.mubr.f32.mxu0 0.0
      %3423 = vmatmul.mubr.f32.gmra.mrb[0].mxu0 %v3224
      %v3424 = vpop.f32.mrb[0].mxu0
      %v3425 = vadd.f32 0.0, %v3424
      %v3426 = vpop.f32.mrb[0].mxu0
      %3427 = vmatprep.mubr.f32.mxu0 0.0
      %3428 = vmatmul.mubr.f32.gmra.mrb[0].mxu0 %v3227
      %v3429 = vpop.f32.mrb[0].mxu0
      %v3430 = vadd.f32 0.0, %v3429
      %v3431 = vpop.f32.mrb[0].mxu0
      %3432 = vmatprep.mubr.f32.mxu0 0.0
      %3433 = vmatmul.mubr.f32.gmra.mrb[0].mxu0 %v3230
      %v3434 = vpop.f32.mrb[0].mxu0
      %v3435 = vadd.f32 0.0, %v3434
      %v3436 = vpop.f32.mrb[0].mxu0
      %3437 = vmatprep.mubr.f32.mxu0 0.0
      %3438 = vmatmul.mubr.f32.gmra.mrb[0].mxu0 %v3233
      %v3439 = vpop.f32.mrb[0].mxu0
      %v3440 = vadd.f32 0.0, %v3439
      %v3441 = vpop.f32.mrb[0].mxu0
      %3442 = vmatprep.mubr.f32.mxu0 0.0
      %3443 = vmatmul.mubr.f32.gmra.mrb[0].mxu0 %v3236
      %v3444 = vpop.f32.mrb[0].mxu0
      %v3445 = vadd.f32 0.0, %v3444
      %v3446 = vpop.f32.mrb[0].mxu0
      %3447 = vmatprep.mubr.f32.mxu0 0.0
      %3448 = vmatmul.mubr.f32.gmra.mrb[0].mxu0 %v3239
      %v3449 = vpop.f32.mrb[0].mxu0
      %v3450 = vadd.f32 0.0, %v3449
      %v3451 = vpop.f32.mrb[0].mxu0
      %3452 = vmatprep.mubr.f32.mxu0 0.0
      %3453 = vmatmul.mubr.f32.gmra.mrb[0].mxu0 %v3242
      %v3454 = vpop.f32.mrb[0].mxu0
      %v3455 = vadd.f32 0.0, %v3454
      %v3456 = vpop.f32.mrb[0].mxu0
      %3457 = vmatprep.mubr.f32.mxu0 0.0
      %3458 = vmatmul.mubr.f32.gmra.mrb[0].mxu0 %v3245
      %v3459 = vpop.f32.mrb[0].mxu0
      %v3460 = vadd.f32 0.0, %v3459
      %v3461 = vpop.f32.mrb[0].mxu0
      %3462 = vmatprep.mubr.f32.mxu0 0.0
      %3463 = vmatmul.mubr.f32.gmra.mrb[0].mxu0 %v3248
      %v3464 = vpop.f32.mrb[0].mxu0
      %v3465 = vadd.f32 0.0, %v3464
      %v3466 = vpop.f32.mrb[0].mxu0
      %3467 = vmatprep.mubr.f32.mxu0 0.0
      %3468 = vmatmul.mubr.f32.gmra.mrb[0].mxu0 %v3251
      %v3469 = vpop.f32.mrb[0].mxu0
      %v3470 = vadd.f32 0.0, %v3469
      %v3471 = vpop.f32.mrb[0].mxu0
      %3472 = vmatprep.mubr.f32.mxu0 0.0
      %3473 = vmatmul.mubr.f32.gmra.mrb[0].mxu0 %v3254
      %v3474 = vpop.f32.mrb[0].mxu0
      %v3475 = vadd.f32 0.0, %v3474
      %v3476 = vpop.f32.mrb[0].mxu0
      %3477 = vmatprep.mubr.f32.mxu0 0.0
      %3478 = vmatmul.mubr.f32.gmra.mrb[0].mxu0 %v3257
      %v3479 = vpop.f32.mrb[0].mxu0
      %v3480 = vadd.f32 0.0, %v3479
      %v3481 = vpop.f32.mrb[0].mxu0
      %3482 = vmatprep.mubr.f32.mxu0 0.0
      %3483 = vmatmul.mubr.f32.gmra.mrb[0].mxu0 %v3260
      %v3484 = vpop.f32.mrb[0].mxu0
      %v3485 = vadd.f32 0.0, %v3484
      %v3486 = vpop.f32.mrb[0].mxu0
      %3487 = vmatprep.mubr.f32.mxu0 0.0
      %3488 = vmatmul.mubr.f32.gmra.mrb[0].mxu0 %v3263
      %v3489 = vpop.f32.mrb[0].mxu0
      %v3490 = vadd.f32 0.0, %v3489
      %v3491 = vpop.f32.mrb[0].mxu0
      %3492 = vdwg.mxu0
      %v3493 = vadd.f32 %v3067, %v3335
      %v3494 = vadd.f32 %v3068, %v3340
      %v3495 = vadd.f32 %v3069, %v3345
      %v3496 = vadd.f32 %v3070, %v3350
      %v3497 = vadd.f32 %v3071, %v3355
      %v3498 = vadd.f32 %v3072, %v3360
      %v3499 = vadd.f32 %v3073, %v3365
      %v3500 = vadd.f32 %v3074, %v3370
      %v3501 = vadd.f32 %v3075, %v3375
      %v3502 = vadd.f32 %v3076, %v3380
      %v3503 = vadd.f32 %v3077, %v3385
      %v3504 = vadd.f32 %v3078, %v3390
      %v3505 = vadd.f32 %v3079, %v3395
      %v3506 = vadd.f32 %v3080, %v3400
      %v3507 = vadd.f32 %v3081, %v3405
      %v3508 = vadd.f32 %v3082, %v3410
      %v3509 = vadd.f32 %v3083, %v3415
      %v3510 = vadd.f32 %v3084, %v3420
      %v3511 = vadd.f32 %v3085, %v3425
      %v3512 = vadd.f32 %v3086, %v3430
      %v3513 = vadd.f32 %v3087, %v3435
      %v3514 = vadd.f32 %v3088, %v3440
      %v3515 = vadd.f32 %v3089, %v3445
      %v3516 = vadd.f32 %v3090, %v3450
      %v3517 = vadd.f32 %v3091, %v3455
      %v3518 = vadd.f32 %v3092, %v3460
      %v3519 = vadd.f32 %v3093, %v3465
      %v3520 = vadd.f32 %v3094, %v3470
      %v3521 = vadd.f32 %v3095, %v3475
      %v3522 = vadd.f32 %v3096, %v3480
      %v3523 = vadd.f32 %v3097, %v3485
      %v3524 = vadd.f32 %v3098, %v3490
      %v3525 = vld [vmem:[%s269 + $0x21] sm:$0xff]
      %v3526 = vld [vmem:[%s269 + $0x29] sm:$0xff]
      %v3527 = vld [vmem:[%s269 + $0x31] sm:$0xff]
      %v3528 = vld [vmem:[%s269 + $0x39] sm:$0xff]
      %v3529 = vld [vmem:[%s269 + $0x41] sm:$0xff]
      %v3530 = vld [vmem:[%s269 + $0x49] sm:$0xff]
      %v3531 = vld [vmem:[%s269 + $0x51] sm:$0xff]
      %v3532 = vld [vmem:[%s269 + $0x59] sm:$0xff]
      %v3533 = vld [vmem:[%s269 + $0x61] sm:$0xff]
      %v3534 = vld [vmem:[%s269 + $0x69] sm:$0xff]
      %v3535 = vld [vmem:[%s269 + $0x71] sm:$0xff]
      %v3536 = vld [vmem:[%s269 + $0x79] sm:$0xff]
      %v3537 = vld [vmem:[%s269 + $0x81] sm:$0xff]
      %v3538 = vld [vmem:[%s269 + $0x89] sm:$0xff]
      %v3539 = vld [vmem:[%s269 + $0x91] sm:$0xff]
      %v3540 = vld [vmem:[%s269 + $0x99] sm:$0xff]
      %v3541 = vld [vmem:[%s269 + $0xa1] sm:$0xff]
      %v3542 = vld [vmem:[%s269 + $0xa9] sm:$0xff]
      %v3543 = vld [vmem:[%s269 + $0xb1] sm:$0xff]
      %v3544 = vld [vmem:[%s269 + $0xb9] sm:$0xff]
      %v3545 = vld [vmem:[%s269 + $0xc1] sm:$0xff]
      %v3546 = vld [vmem:[%s269 + $0xc9] sm:$0xff]
      %v3547 = vld [vmem:[%s269 + $0xd1] sm:$0xff]
      %v3548 = vld [vmem:[%s269 + $0xd9] sm:$0xff]
      %v3549 = vld [vmem:[%s269 + $0xe1] sm:$0xff]
      %v3550 = vld [vmem:[%s269 + $0xe9] sm:$0xff]
      %v3551 = vld [vmem:[%s269 + $0xf1] sm:$0xff]
      %v3552 = vld [vmem:[%s269 + $0xf9] sm:$0xff]
      %v3553 = vld [vmem:[%s269 + $0x101] sm:$0xff]
      %v3554 = vld [vmem:[%s269 + $0x109] sm:$0xff]
      %v3555 = vld [vmem:[%s269 + $0x111] sm:$0xff]
      %v3556 = vld [vmem:[%s269 + $0x119] sm:$0xff]
      %s3557 = scalar_lea.vmem %s2, 280
      %v3558 = vld [vmem:[%s3557] sm:$0xff]
      %v3559 = vld [vmem:[%s3557 + $0x8] sm:$0xff]
      %v3560 = vld [vmem:[%s3557 + $0x10] sm:$0xff]
      %v3561 = vld [vmem:[%s3557 + $0x18] sm:$0xff]
      %v3562 = vld [vmem:[%s3557 + $0x20] sm:$0xf]
      %v3564 = vsel %vm584, %v3525, 0
      %v3567 = vsel %vm584, %v3526, 0
      %v3570 = vsel %vm584, %v3527, 0
      %v3573 = vsel %vm584, %v3528, 0
      %v3576 = vsel %vm584, %v3529, 0
      %v3579 = vsel %vm584, %v3530, 0
      %v3582 = vsel %vm584, %v3531, 0
      %v3585 = vsel %vm584, %v3532, 0
      %v3588 = vsel %vm584, %v3533, 0
      %v3591 = vsel %vm584, %v3534, 0
      %v3594 = vsel %vm584, %v3535, 0
      %v3597 = vsel %vm584, %v3536, 0
      %v3600 = vsel %vm584, %v3537, 0
      %v3603 = vsel %vm584, %v3538, 0
      %v3606 = vsel %vm584, %v3539, 0
      %v3609 = vsel %vm584, %v3540, 0
      %v3612 = vsel %vm584, %v3541, 0
      %v3615 = vsel %vm584, %v3542, 0
      %v3618 = vsel %vm584, %v3543, 0
      %v3621 = vsel %vm584, %v3544, 0
      %v3624 = vsel %vm584, %v3545, 0
      %v3627 = vsel %vm584, %v3546, 0
      %v3630 = vsel %vm584, %v3547, 0
      %v3633 = vsel %vm584, %v3548, 0
      %v3636 = vsel %vm584, %v3549, 0
      %v3639 = vsel %vm584, %v3550, 0
      %v3642 = vsel %vm584, %v3551, 0
      %v3645 = vsel %vm584, %v3552, 0
      %v3648 = vsel %vm584, %v3553, 0
      %v3651 = vsel %vm584, %v3554, 0
      %v3654 = vsel %vm584, %v3555, 0
      %v3657 = vsel %vm584, %v3556, 0
      %v3660 = vsel %vm681, %v3562, 0
      %3662 = vmatprep.subr.mxu0 0.0
      %3663 = vmatpush1.msra.mxu0 %v3558
      %3664 = vmatprep.subr.mxu0 0.0
      %3665 = vmatpush1.msra.mxu0 %v3559
      %3666 = vmatprep.subr.mxu0 0.0
      %3667 = vmatpush1.msra.mxu0 %v3560
      %3668 = vmatprep.subr.mxu0 0.0
      %3669 = vmatpush1.msra.mxu0 %v3561
      %3670 = vmatprep.subr.mxu0 0.0
      %3671 = vmatpush1.msra.mxu0 %v3660
      %3672 = vmatprep.subr.mxu0 0.0
      %3673 = vmatpush1.msra.mxu0 0.0
      %3674 = vmatprep.subr.mxu0 0.0
      %3675 = vmatpush1.msra.mxu0 0.0
      %3676 = vmatprep.subr.mxu0 0.0
      %3677 = vmatpush1.msra.mxu0 0.0
      %3678 = vmatprep.subr.mxu0 0.0
      %3679 = vmatpush1.msra.mxu0 0.0
      %3680 = vmatprep.subr.mxu0 0.0
      %3681 = vmatpush1.msra.mxu0 0.0
      %3682 = vmatprep.subr.mxu0 0.0
      %3683 = vmatpush1.msra.mxu0 0.0
      %3684 = vmatprep.subr.mxu0 0.0
      %3685 = vmatpush1.msra.mxu0 0.0
      %3686 = vmatprep.subr.mxu0 0.0
      %3687 = vmatpush1.msra.mxu0 0.0
      %3688 = vmatprep.subr.mxu0 0.0
      %3689 = vmatpush1.msra.mxu0 0.0
      %3690 = vmatprep.subr.mxu0 0.0
      %3691 = vmatpush1.msra.mxu0 0.0
      %3692 = vmatprep.subr.mxu0 0.0
      %3693 = vmatpush1.msra.mxu0 0.0
      %3694 = vmatprep.subr.mxu0 0.0
      %3695 = vmatpush1.msra.mxu0 0.0
      %3696 = vmatprep.subr.mxu0 0.0
      %3697 = vmatpush1.msra.mxu0 0.0
      %3698 = vmatprep.subr.mxu0 0.0
      %3699 = vmatpush1.msra.mxu0 0.0
      %3700 = vmatprep.subr.mxu0 0.0
      %3701 = vmatpush1.msra.mxu0 0.0
      %3702 = vmatprep.subr.mxu0 0.0
      %3703 = vmatpush1.msra.mxu0 0.0
      %3704 = vmatprep.subr.mxu0 0.0
      %3705 = vmatpush1.msra.mxu0 0.0
      %3706 = vmatprep.subr.mxu0 0.0
      %3707 = vmatpush1.msra.mxu0 0.0
      %3708 = vmatprep.subr.mxu0 0.0
      %3709 = vmatpush1.msra.mxu0 0.0
      %3710 = vmatprep.subr.mxu0 0.0
      %3711 = vmatpush1.msra.mxu0 0.0
      %3712 = vmatprep.subr.mxu0 0.0
      %3713 = vmatpush1.msra.mxu0 0.0
      %3714 = vmatprep.subr.mxu0 0.0
      %3715 = vmatpush1.msra.mxu0 0.0
      %3716 = vmatprep.subr.mxu0 0.0
      %3717 = vmatpush1.msra.mxu0 0.0
      %3718 = vmatprep.subr.mxu0 0.0
      %3719 = vmatpush1.msra.mxu0 0.0
      %3720 = vmatprep.subr.mxu0 0.0
      %3721 = vmatpush1.msra.mxu0 0.0
      %3722 = vmatprep.subr.mxu0 0.0
      %3723 = vmatpush1.msra.mxu0 0.0
      %3724 = vmatprep.subr.mxu0 0.0
      %3725 = vmatpush1.msra.mxu0 0.0
      %3726 = vmatprep.mubr.f32.mxu0 0.0
      %3727 = vmatmul.mubr.f32.gmra.mrb[0].mxu0 %v3564
      %v3728 = vpop.f32.mrb[0].mxu0
      %v3729 = vadd.f32 0.0, %v3728
      %v3730 = vpop.f32.mrb[0].mxu0
      %3731 = vmatprep.mubr.f32.mxu0 0.0
      %3732 = vmatmul.mubr.f32.gmra.mrb[0].mxu0 %v3567
      %v3733 = vpop.f32.mrb[0].mxu0
      %v3734 = vadd.f32 0.0, %v3733
      %v3735 = vpop.f32.mrb[0].mxu0
      %3736 = vmatprep.mubr.f32.mxu0 0.0
      %3737 = vmatmul.mubr.f32.gmra.mrb[0].mxu0 %v3570
      %v3738 = vpop.f32.mrb[0].mxu0
      %v3739 = vadd.f32 0.0, %v3738
      %v3740 = vpop.f32.mrb[0].mxu0
      %3741 = vmatprep.mubr.f32.mxu0 0.0
      %3742 = vmatmul.mubr.f32.gmra.mrb[0].mxu0 %v3573
      %v3743 = vpop.f32.mrb[0].mxu0
      %v3744 = vadd.f32 0.0, %v3743
      %v3745 = vpop.f32.mrb[0].mxu0
      %3746 = vmatprep.mubr.f32.mxu0 0.0
      %3747 = vmatmul.mubr.f32.gmra.mrb[0].mxu0 %v3576
      %v3748 = vpop.f32.mrb[0].mxu0
      %v3749 = vadd.f32 0.0, %v3748
      %v3750 = vpop.f32.mrb[0].mxu0
      %3751 = vmatprep.mubr.f32.mxu0 0.0
      %3752 = vmatmul.mubr.f32.gmra.mrb[0].mxu0 %v3579
      %v3753 = vpop.f32.mrb[0].mxu0
      %v3754 = vadd.f32 0.0, %v3753
      %v3755 = vpop.f32.mrb[0].mxu0
      %3756 = vmatprep.mubr.f32.mxu0 0.0
      %3757 = vmatmul.mubr.f32.gmra.mrb[0].mxu0 %v3582
      %v3758 = vpop.f32.mrb[0].mxu0
      %v3759 = vadd.f32 0.0, %v3758
      %v3760 = vpop.f32.mrb[0].mxu0
      %3761 = vmatprep.mubr.f32.mxu0 0.0
      %3762 = vmatmul.mubr.f32.gmra.mrb[0].mxu0 %v3585
      %v3763 = vpop.f32.mrb[0].mxu0
      %v3764 = vadd.f32 0.0, %v3763
      %v3765 = vpop.f32.mrb[0].mxu0
      %3766 = vmatprep.mubr.f32.mxu0 0.0
      %3767 = vmatmul.mubr.f32.gmra.mrb[0].mxu0 %v3588
      %v3768 = vpop.f32.mrb[0].mxu0
      %v3769 = vadd.f32 0.0, %v3768
      %v3770 = vpop.f32.mrb[0].mxu0
      %3771 = vmatprep.mubr.f32.mxu0 0.0
      %3772 = vmatmul.mubr.f32.gmra.mrb[0].mxu0 %v3591
      %v3773 = vpop.f32.mrb[0].mxu0
      %v3774 = vadd.f32 0.0, %v3773
      %v3775 = vpop.f32.mrb[0].mxu0
      %3776 = vmatprep.mubr.f32.mxu0 0.0
      %3777 = vmatmul.mubr.f32.gmra.mrb[0].mxu0 %v3594
      %v3778 = vpop.f32.mrb[0].mxu0
      %v3779 = vadd.f32 0.0, %v3778
      %v3780 = vpop.f32.mrb[0].mxu0
      %3781 = vmatprep.mubr.f32.mxu0 0.0
      %3782 = vmatmul.mubr.f32.gmra.mrb[0].mxu0 %v3597
      %v3783 = vpop.f32.mrb[0].mxu0
      %v3784 = vadd.f32 0.0, %v3783
      %v3785 = vpop.f32.mrb[0].mxu0
      %3786 = vmatprep.mubr.f32.mxu0 0.0
      %3787 = vmatmul.mubr.f32.gmra.mrb[0].mxu0 %v3600
      %v3788 = vpop.f32.mrb[0].mxu0
      %v3789 = vadd.f32 0.0, %v3788
      %v3790 = vpop.f32.mrb[0].mxu0
      %3791 = vmatprep.mubr.f32.mxu0 0.0
      %3792 = vmatmul.mubr.f32.gmra.mrb[0].mxu0 %v3603
      %v3793 = vpop.f32.mrb[0].mxu0
      %v3794 = vadd.f32 0.0, %v3793
      %v3795 = vpop.f32.mrb[0].mxu0
      %3796 = vmatprep.mubr.f32.mxu0 0.0
      %3797 = vmatmul.mubr.f32.gmra.mrb[0].mxu0 %v3606
      %v3798 = vpop.f32.mrb[0].mxu0
      %v3799 = vadd.f32 0.0, %v3798
      %v3800 = vpop.f32.mrb[0].mxu0
      %3801 = vmatprep.mubr.f32.mxu0 0.0
      %3802 = vmatmul.mubr.f32.gmra.mrb[0].mxu0 %v3609
      %v3803 = vpop.f32.mrb[0].mxu0
      %v3804 = vadd.f32 0.0, %v3803
      %v3805 = vpop.f32.mrb[0].mxu0
      %3806 = vmatprep.mubr.f32.mxu0 0.0
      %3807 = vmatmul.mubr.f32.gmra.mrb[0].mxu0 %v3612
      %v3808 = vpop.f32.mrb[0].mxu0
      %v3809 = vadd.f32 0.0, %v3808
      %v3810 = vpop.f32.mrb[0].mxu0
      %3811 = vmatprep.mubr.f32.mxu0 0.0
      %3812 = vmatmul.mubr.f32.gmra.mrb[0].mxu0 %v3615
      %v3813 = vpop.f32.mrb[0].mxu0
      %v3814 = vadd.f32 0.0, %v3813
      %v3815 = vpop.f32.mrb[0].mxu0
      %3816 = vmatprep.mubr.f32.mxu0 0.0
      %3817 = vmatmul.mubr.f32.gmra.mrb[0].mxu0 %v3618
      %v3818 = vpop.f32.mrb[0].mxu0
      %v3819 = vadd.f32 0.0, %v3818
      %v3820 = vpop.f32.mrb[0].mxu0
      %3821 = vmatprep.mubr.f32.mxu0 0.0
      %3822 = vmatmul.mubr.f32.gmra.mrb[0].mxu0 %v3621
      %v3823 = vpop.f32.mrb[0].mxu0
      %v3824 = vadd.f32 0.0, %v3823
      %v3825 = vpop.f32.mrb[0].mxu0
      %3826 = vmatprep.mubr.f32.mxu0 0.0
      %3827 = vmatmul.mubr.f32.gmra.mrb[0].mxu0 %v3624
      %v3828 = vpop.f32.mrb[0].mxu0
      %v3829 = vadd.f32 0.0, %v3828
      %v3830 = vpop.f32.mrb[0].mxu0
      %3831 = vmatprep.mubr.f32.mxu0 0.0
      %3832 = vmatmul.mubr.f32.gmra.mrb[0].mxu0 %v3627
      %v3833 = vpop.f32.mrb[0].mxu0
      %v3834 = vadd.f32 0.0, %v3833
      %v3835 = vpop.f32.mrb[0].mxu0
      %3836 = vmatprep.mubr.f32.mxu0 0.0
      %3837 = vmatmul.mubr.f32.gmra.mrb[0].mxu0 %v3630
      %v3838 = vpop.f32.mrb[0].mxu0
      %v3839 = vadd.f32 0.0, %v3838
      %v3840 = vpop.f32.mrb[0].mxu0
      %3841 = vmatprep.mubr.f32.mxu0 0.0
      %3842 = vmatmul.mubr.f32.gmra.mrb[0].mxu0 %v3633
      %v3843 = vpop.f32.mrb[0].mxu0
      %v3844 = vadd.f32 0.0, %v3843
      %v3845 = vpop.f32.mrb[0].mxu0
      %3846 = vmatprep.mubr.f32.mxu0 0.0
      %3847 = vmatmul.mubr.f32.gmra.mrb[0].mxu0 %v3636
      %v3848 = vpop.f32.mrb[0].mxu0
      %v3849 = vadd.f32 0.0, %v3848
      %v3850 = vpop.f32.mrb[0].mxu0
      %3851 = vmatprep.mubr.f32.mxu0 0.0
      %3852 = vmatmul.mubr.f32.gmra.mrb[0].mxu0 %v3639
      %v3853 = vpop.f32.mrb[0].mxu0
      %v3854 = vadd.f32 0.0, %v3853
      %v3855 = vpop.f32.mrb[0].mxu0
      %3856 = vmatprep.mubr.f32.mxu0 0.0
      %3857 = vmatmul.mubr.f32.gmra.mrb[0].mxu0 %v3642
      %v3858 = vpop.f32.mrb[0].mxu0
      %v3859 = vadd.f32 0.0, %v3858
      %v3860 = vpop.f32.mrb[0].mxu0
      %3861 = vmatprep.mubr.f32.mxu0 0.0
      %3862 = vmatmul.mubr.f32.gmra.mrb[0].mxu0 %v3645
      %v3863 = vpop.f32.mrb[0].mxu0
      %v3864 = vadd.f32 0.0, %v3863
      %v3865 = vpop.f32.mrb[0].mxu0
      %3866 = vmatprep.mubr.f32.mxu0 0.0
      %3867 = vmatmul.mubr.f32.gmra.mrb[0].mxu0 %v3648
      %v3868 = vpop.f32.mrb[0].mxu0
      %v3869 = vadd.f32 0.0, %v3868
      %v3870 = vpop.f32.mrb[0].mxu0
      %3871 = vmatprep.mubr.f32.mxu0 0.0
      %3872 = vmatmul.mubr.f32.gmra.mrb[0].mxu0 %v3651
      %v3873 = vpop.f32.mrb[0].mxu0
      %v3874 = vadd.f32 0.0, %v3873
      %v3875 = vpop.f32.mrb[0].mxu0
      %3876 = vmatprep.mubr.f32.mxu0 0.0
      %3877 = vmatmul.mubr.f32.gmra.mrb[0].mxu0 %v3654
      %v3878 = vpop.f32.mrb[0].mxu0
      %v3879 = vadd.f32 0.0, %v3878
      %v3880 = vpop.f32.mrb[0].mxu0
      %3881 = vmatprep.mubr.f32.mxu0 0.0
      %3882 = vmatmul.mubr.f32.gmra.mrb[0].mxu0 %v3657
      %v3883 = vpop.f32.mrb[0].mxu0
      %v3884 = vadd.f32 0.0, %v3883
      %v3885 = vpop.f32.mrb[0].mxu0
      %3886 = vdwg.mxu0
      %v3887 = vadd.f32 %v3493, %v3729
      %v3888 = vadd.f32 %v3494, %v3734
      %v3889 = vadd.f32 %v3495, %v3739
      %v3890 = vadd.f32 %v3496, %v3744
      %v3891 = vadd.f32 %v3497, %v3749
      %v3892 = vadd.f32 %v3498, %v3754
      %v3893 = vadd.f32 %v3499, %v3759
      %v3894 = vadd.f32 %v3500, %v3764
      %v3895 = vadd.f32 %v3501, %v3769
      %v3896 = vadd.f32 %v3502, %v3774
      %v3897 = vadd.f32 %v3503, %v3779
      %v3898 = vadd.f32 %v3504, %v3784
      %v3899 = vadd.f32 %v3505, %v3789
      %v3900 = vadd.f32 %v3506, %v3794
      %v3901 = vadd.f32 %v3507, %v3799
      %v3902 = vadd.f32 %v3508, %v3804
      %v3903 = vadd.f32 %v3509, %v3809
      %v3904 = vadd.f32 %v3510, %v3814
      %v3905 = vadd.f32 %v3511, %v3819
      %v3906 = vadd.f32 %v3512, %v3824
      %v3907 = vadd.f32 %v3513, %v3829
      %v3908 = vadd.f32 %v3514, %v3834
      %v3909 = vadd.f32 %v3515, %v3839
      %v3910 = vadd.f32 %v3516, %v3844
      %v3911 = vadd.f32 %v3517, %v3849
      %v3912 = vadd.f32 %v3518, %v3854
      %v3913 = vadd.f32 %v3519, %v3859
      %v3914 = vadd.f32 %v3520, %v3864
      %v3915 = vadd.f32 %v3521, %v3869
      %v3916 = vadd.f32 %v3522, %v3874
      %v3917 = vadd.f32 %v3523, %v3879
      %v3918 = vadd.f32 %v3524, %v3884
      %v3919 = vld [vmem:[%s269 + $0x22] sm:$0xff]
      %v3920 = vld [vmem:[%s269 + $0x2a] sm:$0xff]
      %v3921 = vld [vmem:[%s269 + $0x32] sm:$0xff]
      %v3922 = vld [vmem:[%s269 + $0x3a] sm:$0xff]
      %v3923 = vld [vmem:[%s269 + $0x42] sm:$0xff]
      %v3924 = vld [vmem:[%s269 + $0x4a] sm:$0xff]
      %v3925 = vld [vmem:[%s269 + $0x52] sm:$0xff]
      %v3926 = vld [vmem:[%s269 + $0x5a] sm:$0xff]
      %v3927 = vld [vmem:[%s269 + $0x62] sm:$0xff]
      %v3928 = vld [vmem:[%s269 + $0x6a] sm:$0xff]
      %v3929 = vld [vmem:[%s269 + $0x72] sm:$0xff]
      %v3930 = vld [vmem:[%s269 + $0x7a] sm:$0xff]
      %v3931 = vld [vmem:[%s269 + $0x82] sm:$0xff]
      %v3932 = vld [vmem:[%s269 + $0x8a] sm:$0xff]
      %v3933 = vld [vmem:[%s269 + $0x92] sm:$0xff]
      %v3934 = vld [vmem:[%s269 + $0x9a] sm:$0xff]
      %v3935 = vld [vmem:[%s269 + $0xa2] sm:$0xff]
      %v3936 = vld [vmem:[%s269 + $0xaa] sm:$0xff]
      %v3937 = vld [vmem:[%s269 + $0xb2] sm:$0xff]
      %v3938 = vld [vmem:[%s269 + $0xba] sm:$0xff]
      %v3939 = vld [vmem:[%s269 + $0xc2] sm:$0xff]
      %v3940 = vld [vmem:[%s269 + $0xca] sm:$0xff]
      %v3941 = vld [vmem:[%s269 + $0xd2] sm:$0xff]
      %v3942 = vld [vmem:[%s269 + $0xda] sm:$0xff]
      %v3943 = vld [vmem:[%s269 + $0xe2] sm:$0xff]
      %v3944 = vld [vmem:[%s269 + $0xea] sm:$0xff]
      %v3945 = vld [vmem:[%s269 + $0xf2] sm:$0xff]
      %v3946 = vld [vmem:[%s269 + $0xfa] sm:$0xff]
      %v3947 = vld [vmem:[%s269 + $0x102] sm:$0xff]
      %v3948 = vld [vmem:[%s269 + $0x10a] sm:$0xff]
      %v3949 = vld [vmem:[%s269 + $0x112] sm:$0xff]
      %v3950 = vld [vmem:[%s269 + $0x11a] sm:$0xff]
      %v3951 = vmul.f32 %v3919, %v1302
      %v3952 = vmul.f32 %v3920, %v1307
      %v3953 = vmul.f32 %v3921, %v1312
      %v3954 = vmul.f32 %v3922, %v1317
      %v3955 = vmul.f32 %v3923, %v1322
      %v3956 = vmul.f32 %v3924, %v1327
      %v3957 = vmul.f32 %v3925, %v1332
      %v3958 = vmul.f32 %v3926, %v1337
      %v3959 = vmul.f32 %v3927, %v1342
      %v3960 = vmul.f32 %v3928, %v1347
      %v3961 = vmul.f32 %v3929, %v1352
      %v3962 = vmul.f32 %v3930, %v1357
      %v3963 = vmul.f32 %v3931, %v1362
      %v3964 = vmul.f32 %v3932, %v1367
      %v3965 = vmul.f32 %v3933, %v1372
      %v3966 = vmul.f32 %v3934, %v1377
      %v3967 = vmul.f32 %v3935, %v1382
      %v3968 = vmul.f32 %v3936, %v1387
      %v3969 = vmul.f32 %v3937, %v1392
      %v3970 = vmul.f32 %v3938, %v1397
      %v3971 = vmul.f32 %v3939, %v1402
      %v3972 = vmul.f32 %v3940, %v1407
      %v3973 = vmul.f32 %v3941, %v1412
      %v3974 = vmul.f32 %v3942, %v1417
      %v3975 = vmul.f32 %v3943, %v1422
      %v3976 = vmul.f32 %v3944, %v1427
      %v3977 = vmul.f32 %v3945, %v1432
      %v3978 = vmul.f32 %v3946, %v1437
      %v3979 = vmul.f32 %v3947, %v1442
      %v3980 = vmul.f32 %v3948, %v1447
      %v3981 = vmul.f32 %v3949, %v1452
      %v3982 = vmul.f32 %v3950, %v1457
      %s3983 = scalar_lea.vmem %s2, 320
      %v3984 = vld [vmem:[%s3983] sm:$0xff]
      %v3985 = vld [vmem:[%s3983 + $0x8] sm:$0xff]
      %v3986 = vld [vmem:[%s3983 + $0x10] sm:$0xff]
      %v3987 = vld [vmem:[%s3983 + $0x18] sm:$0xff]
      %v3988 = vld [vmem:[%s3983 + $0x20] sm:$0xf]
      %v3990 = vsel %vm584, %v3951, 0
      %v3993 = vsel %vm584, %v3952, 0
      %v3996 = vsel %vm584, %v3953, 0
      %v3999 = vsel %vm584, %v3954, 0
      %v4002 = vsel %vm584, %v3955, 0
      %v4005 = vsel %vm584, %v3956, 0
      %v4008 = vsel %vm584, %v3957, 0
      %v4011 = vsel %vm584, %v3958, 0
      %v4014 = vsel %vm584, %v3959, 0
      %v4017 = vsel %vm584, %v3960, 0
      %v4020 = vsel %vm584, %v3961, 0
      %v4023 = vsel %vm584, %v3962, 0
      %v4026 = vsel %vm584, %v3963, 0
      %v4029 = vsel %vm584, %v3964, 0
      %v4032 = vsel %vm584, %v3965, 0
      %v4035 = vsel %vm584, %v3966, 0
      %v4038 = vsel %vm584, %v3967, 0
      %v4041 = vsel %vm584, %v3968, 0
      %v4044 = vsel %vm584, %v3969, 0
      %v4047 = vsel %vm584, %v3970, 0
      %v4050 = vsel %vm584, %v3971, 0
      %v4053 = vsel %vm584, %v3972, 0
      %v4056 = vsel %vm584, %v3973, 0
      %v4059 = vsel %vm584, %v3974, 0
      %v4062 = vsel %vm584, %v3975, 0
      %v4065 = vsel %vm584, %v3976, 0
      %v4068 = vsel %vm584, %v3977, 0
      %v4071 = vsel %vm584, %v3978, 0
      %v4074 = vsel %vm584, %v3979, 0
      %v4077 = vsel %vm584, %v3980, 0
      %v4080 = vsel %vm584, %v3981, 0
      %v4083 = vsel %vm584, %v3982, 0
      %v4086 = vsel %vm681, %v3988, 0
      %4088 = vmatprep.subr.mxu0 0.0
      %4089 = vmatpush1.msra.mxu0 %v3984
      %4090 = vmatprep.subr.mxu0 0.0
      %4091 = vmatpush1.msra.mxu0 %v3985
      %4092 = vmatprep.subr.mxu0 0.0
      %4093 = vmatpush1.msra.mxu0 %v3986
      %4094 = vmatprep.subr.mxu0 0.0
      %4095 = vmatpush1.msra.mxu0 %v3987
      %4096 = vmatprep.subr.mxu0 0.0
      %4097 = vmatpush1.msra.mxu0 %v4086
      %4098 = vmatprep.subr.mxu0 0.0
      %4099 = vmatpush1.msra.mxu0 0.0
      %4100 = vmatprep.subr.mxu0 0.0
      %4101 = vmatpush1.msra.mxu0 0.0
      %4102 = vmatprep.subr.mxu0 0.0
      %4103 = vmatpush1.msra.mxu0 0.0
      %4104 = vmatprep.subr.mxu0 0.0
      %4105 = vmatpush1.msra.mxu0 0.0
      %4106 = vmatprep.subr.mxu0 0.0
      %4107 = vmatpush1.msra.mxu0 0.0
      %4108 = vmatprep.subr.mxu0 0.0
      %4109 = vmatpush1.msra.mxu0 0.0
      %4110 = vmatprep.subr.mxu0 0.0
      %4111 = vmatpush1.msra.mxu0 0.0
      %4112 = vmatprep.subr.mxu0 0.0
      %4113 = vmatpush1.msra.mxu0 0.0
      %4114 = vmatprep.subr.mxu0 0.0
      %4115 = vmatpush1.msra.mxu0 0.0
      %4116 = vmatprep.subr.mxu0 0.0
      %4117 = vmatpush1.msra.mxu0 0.0
      %4118 = vmatprep.subr.mxu0 0.0
      %4119 = vmatpush1.msra.mxu0 0.0
      %4120 = vmatprep.subr.mxu0 0.0
      %4121 = vmatpush1.msra.mxu0 0.0
      %4122 = vmatprep.subr.mxu0 0.0
      %4123 = vmatpush1.msra.mxu0 0.0
      %4124 = vmatprep.subr.mxu0 0.0
      %4125 = vmatpush1.msra.mxu0 0.0
      %4126 = vmatprep.subr.mxu0 0.0
      %4127 = vmatpush1.msra.mxu0 0.0
      %4128 = vmatprep.subr.mxu0 0.0
      %4129 = vmatpush1.msra.mxu0 0.0
      %4130 = vmatprep.subr.mxu0 0.0
      %4131 = vmatpush1.msra.mxu0 0.0
      %4132 = vmatprep.subr.mxu0 0.0
      %4133 = vmatpush1.msra.mxu0 0.0
      %4134 = vmatprep.subr.mxu0 0.0
      %4135 = vmatpush1.msra.mxu0 0.0
      %4136 = vmatprep.subr.mxu0 0.0
      %4137 = vmatpush1.msra.mxu0 0.0
      %4138 = vmatprep.subr.mxu0 0.0
      %4139 = vmatpush1.msra.mxu0 0.0
      %4140 = vmatprep.subr.mxu0 0.0
      %4141 = vmatpush1.msra.mxu0 0.0
      %4142 = vmatprep.subr.mxu0 0.0
      %4143 = vmatpush1.msra.mxu0 0.0
      %4144 = vmatprep.subr.mxu0 0.0
      %4145 = vmatpush1.msra.mxu0 0.0
      %4146 = vmatprep.subr.mxu0 0.0
      %4147 = vmatpush1.msra.mxu0 0.0
      %4148 = vmatprep.subr.mxu0 0.0
      %4149 = vmatpush1.msra.mxu0 0.0
      %4150 = vmatprep.subr.mxu0 0.0
      %4151 = vmatpush1.msra.mxu0 0.0
      %4152 = vmatprep.mubr.f32.mxu0 0.0
      %4153 = vmatmul.mubr.f32.gmra.mrb[0].mxu0 %v3990
      %v4154 = vpop.f32.mrb[0].mxu0
      %v4155 = vadd.f32 0.0, %v4154
      %v4156 = vpop.f32.mrb[0].mxu0
      %4157 = vmatprep.mubr.f32.mxu0 0.0
      %4158 = vmatmul.mubr.f32.gmra.mrb[0].mxu0 %v3993
      %v4159 = vpop.f32.mrb[0].mxu0
      %v4160 = vadd.f32 0.0, %v4159
      %v4161 = vpop.f32.mrb[0].mxu0
      %4162 = vmatprep.mubr.f32.mxu0 0.0
      %4163 = vmatmul.mubr.f32.gmra.mrb[0].mxu0 %v3996
      %v4164 = vpop.f32.mrb[0].mxu0
      %v4165 = vadd.f32 0.0, %v4164
      %v4166 = vpop.f32.mrb[0].mxu0
      %4167 = vmatprep.mubr.f32.mxu0 0.0
      %4168 = vmatmul.mubr.f32.gmra.mrb[0].mxu0 %v3999
      %v4169 = vpop.f32.mrb[0].mxu0
      %v4170 = vadd.f32 0.0, %v4169
      %v4171 = vpop.f32.mrb[0].mxu0
      %4172 = vmatprep.mubr.f32.mxu0 0.0
      %4173 = vmatmul.mubr.f32.gmra.mrb[0].mxu0 %v4002
      %v4174 = vpop.f32.mrb[0].mxu0
      %v4175 = vadd.f32 0.0, %v4174
      %v4176 = vpop.f32.mrb[0].mxu0
      %4177 = vmatprep.mubr.f32.mxu0 0.0
      %4178 = vmatmul.mubr.f32.gmra.mrb[0].mxu0 %v4005
      %v4179 = vpop.f32.mrb[0].mxu0
      %v4180 = vadd.f32 0.0, %v4179
      %v4181 = vpop.f32.mrb[0].mxu0
      %4182 = vmatprep.mubr.f32.mxu0 0.0
      %4183 = vmatmul.mubr.f32.gmra.mrb[0].mxu0 %v4008
      %v4184 = vpop.f32.mrb[0].mxu0
      %v4185 = vadd.f32 0.0, %v4184
      %v4186 = vpop.f32.mrb[0].mxu0
      %4187 = vmatprep.mubr.f32.mxu0 0.0
      %4188 = vmatmul.mubr.f32.gmra.mrb[0].mxu0 %v4011
      %v4189 = vpop.f32.mrb[0].mxu0
      %v4190 = vadd.f32 0.0, %v4189
      %v4191 = vpop.f32.mrb[0].mxu0
      %4192 = vmatprep.mubr.f32.mxu0 0.0
      %4193 = vmatmul.mubr.f32.gmra.mrb[0].mxu0 %v4014
      %v4194 = vpop.f32.mrb[0].mxu0
      %v4195 = vadd.f32 0.0, %v4194
      %v4196 = vpop.f32.mrb[0].mxu0
      %4197 = vmatprep.mubr.f32.mxu0 0.0
      %4198 = vmatmul.mubr.f32.gmra.mrb[0].mxu0 %v4017
      %v4199 = vpop.f32.mrb[0].mxu0
      %v4200 = vadd.f32 0.0, %v4199
      %v4201 = vpop.f32.mrb[0].mxu0
      %4202 = vmatprep.mubr.f32.mxu0 0.0
      %4203 = vmatmul.mubr.f32.gmra.mrb[0].mxu0 %v4020
      %v4204 = vpop.f32.mrb[0].mxu0
      %v4205 = vadd.f32 0.0, %v4204
      %v4206 = vpop.f32.mrb[0].mxu0
      %4207 = vmatprep.mubr.f32.mxu0 0.0
      %4208 = vmatmul.mubr.f32.gmra.mrb[0].mxu0 %v4023
      %v4209 = vpop.f32.mrb[0].mxu0
      %v4210 = vadd.f32 0.0, %v4209
      %v4211 = vpop.f32.mrb[0].mxu0
      %4212 = vmatprep.mubr.f32.mxu0 0.0
      %4213 = vmatmul.mubr.f32.gmra.mrb[0].mxu0 %v4026
      %v4214 = vpop.f32.mrb[0].mxu0
      %v4215 = vadd.f32 0.0, %v4214
      %v4216 = vpop.f32.mrb[0].mxu0
      %4217 = vmatprep.mubr.f32.mxu0 0.0
      %4218 = vmatmul.mubr.f32.gmra.mrb[0].mxu0 %v4029
      %v4219 = vpop.f32.mrb[0].mxu0
      %v4220 = vadd.f32 0.0, %v4219
      %v4221 = vpop.f32.mrb[0].mxu0
      %4222 = vmatprep.mubr.f32.mxu0 0.0
      %4223 = vmatmul.mubr.f32.gmra.mrb[0].mxu0 %v4032
      %v4224 = vpop.f32.mrb[0].mxu0
      %v4225 = vadd.f32 0.0, %v4224
      %v4226 = vpop.f32.mrb[0].mxu0
      %4227 = vmatprep.mubr.f32.mxu0 0.0
      %4228 = vmatmul.mubr.f32.gmra.mrb[0].mxu0 %v4035
      %v4229 = vpop.f32.mrb[0].mxu0
      %v4230 = vadd.f32 0.0, %v4229
      %v4231 = vpop.f32.mrb[0].mxu0
      %4232 = vmatprep.mubr.f32.mxu0 0.0
      %4233 = vmatmul.mubr.f32.gmra.mrb[0].mxu0 %v4038
      %v4234 = vpop.f32.mrb[0].mxu0
      %v4235 = vadd.f32 0.0, %v4234
      %v4236 = vpop.f32.mrb[0].mxu0
      %4237 = vmatprep.mubr.f32.mxu0 0.0
      %4238 = vmatmul.mubr.f32.gmra.mrb[0].mxu0 %v4041
      %v4239 = vpop.f32.mrb[0].mxu0
      %v4240 = vadd.f32 0.0, %v4239
      %v4241 = vpop.f32.mrb[0].mxu0
      %4242 = vmatprep.mubr.f32.mxu0 0.0
      %4243 = vmatmul.mubr.f32.gmra.mrb[0].mxu0 %v4044
      %v4244 = vpop.f32.mrb[0].mxu0
      %v4245 = vadd.f32 0.0, %v4244
      %v4246 = vpop.f32.mrb[0].mxu0
      %4247 = vmatprep.mubr.f32.mxu0 0.0
      %4248 = vmatmul.mubr.f32.gmra.mrb[0].mxu0 %v4047
      %v4249 = vpop.f32.mrb[0].mxu0
      %v4250 = vadd.f32 0.0, %v4249
      %v4251 = vpop.f32.mrb[0].mxu0
      %4252 = vmatprep.mubr.f32.mxu0 0.0
      %4253 = vmatmul.mubr.f32.gmra.mrb[0].mxu0 %v4050
      %v4254 = vpop.f32.mrb[0].mxu0
      %v4255 = vadd.f32 0.0, %v4254
      %v4256 = vpop.f32.mrb[0].mxu0
      %4257 = vmatprep.mubr.f32.mxu0 0.0
      %4258 = vmatmul.mubr.f32.gmra.mrb[0].mxu0 %v4053
      %v4259 = vpop.f32.mrb[0].mxu0
      %v4260 = vadd.f32 0.0, %v4259
      %v4261 = vpop.f32.mrb[0].mxu0
      %4262 = vmatprep.mubr.f32.mxu0 0.0
      %4263 = vmatmul.mubr.f32.gmra.mrb[0].mxu0 %v4056
      %v4264 = vpop.f32.mrb[0].mxu0
      %v4265 = vadd.f32 0.0, %v4264
      %v4266 = vpop.f32.mrb[0].mxu0
      %4267 = vmatprep.mubr.f32.mxu0 0.0
      %4268 = vmatmul.mubr.f32.gmra.mrb[0].mxu0 %v4059
      %v4269 = vpop.f32.mrb[0].mxu0
      %v4270 = vadd.f32 0.0, %v4269
      %v4271 = vpop.f32.mrb[0].mxu0
      %4272 = vmatprep.mubr.f32.mxu0 0.0
      %4273 = vmatmul.mubr.f32.gmra.mrb[0].mxu0 %v4062
      %v4274 = vpop.f32.mrb[0].mxu0
      %v4275 = vadd.f32 0.0, %v4274
      %v4276 = vpop.f32.mrb[0].mxu0
      %4277 = vmatprep.mubr.f32.mxu0 0.0
      %4278 = vmatmul.mubr.f32.gmra.mrb[0].mxu0 %v4065
      %v4279 = vpop.f32.mrb[0].mxu0
      %v4280 = vadd.f32 0.0, %v4279
      %v4281 = vpop.f32.mrb[0].mxu0
      %4282 = vmatprep.mubr.f32.mxu0 0.0
      %4283 = vmatmul.mubr.f32.gmra.mrb[0].mxu0 %v4068
      %v4284 = vpop.f32.mrb[0].mxu0
      %v4285 = vadd.f32 0.0, %v4284
      %v4286 = vpop.f32.mrb[0].mxu0
      %4287 = vmatprep.mubr.f32.mxu0 0.0
      %4288 = vmatmul.mubr.f32.gmra.mrb[0].mxu0 %v4071
      %v4289 = vpop.f32.mrb[0].mxu0
      %v4290 = vadd.f32 0.0, %v4289
      %v4291 = vpop.f32.mrb[0].mxu0
      %4292 = vmatprep.mubr.f32.mxu0 0.0
      %4293 = vmatmul.mubr.f32.gmra.mrb[0].mxu0 %v4074
      %v4294 = vpop.f32.mrb[0].mxu0
      %v4295 = vadd.f32 0.0, %v4294
      %v4296 = vpop.f32.mrb[0].mxu0
      %4297 = vmatprep.mubr.f32.mxu0 0.0
      %4298 = vmatmul.mubr.f32.gmra.mrb[0].mxu0 %v4077
      %v4299 = vpop.f32.mrb[0].mxu0
      %v4300 = vadd.f32 0.0, %v4299
      %v4301 = vpop.f32.mrb[0].mxu0
      %4302 = vmatprep.mubr.f32.mxu0 0.0
      %4303 = vmatmul.mubr.f32.gmra.mrb[0].mxu0 %v4080
      %v4304 = vpop.f32.mrb[0].mxu0
      %v4305 = vadd.f32 0.0, %v4304
      %v4306 = vpop.f32.mrb[0].mxu0
      %4307 = vmatprep.mubr.f32.mxu0 0.0
      %4308 = vmatmul.mubr.f32.gmra.mrb[0].mxu0 %v4083
      %v4309 = vpop.f32.mrb[0].mxu0
      %v4310 = vadd.f32 0.0, %v4309
      %v4311 = vpop.f32.mrb[0].mxu0
      %4312 = vdwg.mxu0
      %v4313 = vadd.f32 %v3887, %v4155
      %v4314 = vadd.f32 %v3888, %v4160
      %v4315 = vadd.f32 %v3889, %v4165
      %v4316 = vadd.f32 %v3890, %v4170
      %v4317 = vadd.f32 %v3891, %v4175
      %v4318 = vadd.f32 %v3892, %v4180
      %v4319 = vadd.f32 %v3893, %v4185
      %v4320 = vadd.f32 %v3894, %v4190
      %v4321 = vadd.f32 %v3895, %v4195
      %v4322 = vadd.f32 %v3896, %v4200
      %v4323 = vadd.f32 %v3897, %v4205
      %v4324 = vadd.f32 %v3898, %v4210
      %v4325 = vadd.f32 %v3899, %v4215
      %v4326 = vadd.f32 %v3900, %v4220
      %v4327 = vadd.f32 %v3901, %v4225
      %v4328 = vadd.f32 %v3902, %v4230
      %v4329 = vadd.f32 %v3903, %v4235
      %v4330 = vadd.f32 %v3904, %v4240
      %v4331 = vadd.f32 %v3905, %v4245
      %v4332 = vadd.f32 %v3906, %v4250
      %v4333 = vadd.f32 %v3907, %v4255
      %v4334 = vadd.f32 %v3908, %v4260
      %v4335 = vadd.f32 %v3909, %v4265
      %v4336 = vadd.f32 %v3910, %v4270
      %v4337 = vadd.f32 %v3911, %v4275
      %v4338 = vadd.f32 %v3912, %v4280
      %v4339 = vadd.f32 %v3913, %v4285
      %v4340 = vadd.f32 %v3914, %v4290
      %v4341 = vadd.f32 %v3915, %v4295
      %v4342 = vadd.f32 %v3916, %v4300
      %v4343 = vadd.f32 %v3917, %v4305
      %v4344 = vadd.f32 %v3918, %v4310
      %v4345 = vld [vmem:[%s3] sm:$0x1]
      %v4347 = vlaneseq
      %v4348 = vshrl.u32 %v4347, 7
      %v4349 = vsub.s32 0, %v4348
      %v4350 = vrot.slane %v4345, %v4349
      %v4352 = vadd.f32 %v4313, %v4350
      %v4353 = vadd.f32 %v4314, %v4350
      %v4354 = vadd.f32 %v4315, %v4350
      %v4355 = vadd.f32 %v4316, %v4350
      %v4356 = vadd.f32 %v4317, %v4350
      %v4357 = vadd.f32 %v4318, %v4350
      %v4358 = vadd.f32 %v4319, %v4350
      %v4359 = vadd.f32 %v4320, %v4350
      %v4360 = vadd.f32 %v4321, %v4350
      %v4361 = vadd.f32 %v4322, %v4350
      %v4362 = vadd.f32 %v4323, %v4350
      %v4363 = vadd.f32 %v4324, %v4350
      %v4364 = vadd.f32 %v4325, %v4350
      %v4365 = vadd.f32 %v4326, %v4350
      %v4366 = vadd.f32 %v4327, %v4350
      %v4367 = vadd.f32 %v4328, %v4350
      %v4368 = vadd.f32 %v4329, %v4350
      %v4369 = vadd.f32 %v4330, %v4350
      %v4370 = vadd.f32 %v4331, %v4350
      %v4371 = vadd.f32 %v4332, %v4350
      %v4372 = vadd.f32 %v4333, %v4350
      %v4373 = vadd.f32 %v4334, %v4350
      %v4374 = vadd.f32 %v4335, %v4350
      %v4375 = vadd.f32 %v4336, %v4350
      %v4376 = vadd.f32 %v4337, %v4350
      %v4377 = vadd.f32 %v4338, %v4350
      %v4378 = vadd.f32 %v4339, %v4350
      %v4379 = vadd.f32 %v4340, %v4350
      %v4380 = vadd.f32 %v4341, %v4350
      %v4381 = vadd.f32 %v4342, %v4350
      %v4382 = vadd.f32 %v4343, %v4350
      %v4383 = vadd.f32 %v4344, %v4350
      %v4384 = vsub.f32 0.0, %v4352
      %v4385 = vsub.f32 0.0, %v4353
      %v4386 = vsub.f32 0.0, %v4354
      %v4387 = vsub.f32 0.0, %v4355
      %v4388 = vsub.f32 0.0, %v4356
      %v4389 = vsub.f32 0.0, %v4357
      %v4390 = vsub.f32 0.0, %v4358
      %v4391 = vsub.f32 0.0, %v4359
      %v4392 = vsub.f32 0.0, %v4360
      %v4393 = vsub.f32 0.0, %v4361
      %v4394 = vsub.f32 0.0, %v4362
      %v4395 = vsub.f32 0.0, %v4363
      %v4396 = vsub.f32 0.0, %v4364
      %v4397 = vsub.f32 0.0, %v4365
      %v4398 = vsub.f32 0.0, %v4366
      %v4399 = vsub.f32 0.0, %v4367
      %v4400 = vsub.f32 0.0, %v4368
      %v4401 = vsub.f32 0.0, %v4369
      %v4402 = vsub.f32 0.0, %v4370
      %v4403 = vsub.f32 0.0, %v4371
      %v4404 = vsub.f32 0.0, %v4372
      %v4405 = vsub.f32 0.0, %v4373
      %v4406 = vsub.f32 0.0, %v4374
      %v4407 = vsub.f32 0.0, %v4375
      %v4408 = vsub.f32 0.0, %v4376
      %v4409 = vsub.f32 0.0, %v4377
      %v4410 = vsub.f32 0.0, %v4378
      %v4411 = vsub.f32 0.0, %v4379
      %v4412 = vsub.f32 0.0, %v4380
      %v4413 = vsub.f32 0.0, %v4381
      %v4414 = vsub.f32 0.0, %v4382
      %v4415 = vsub.f32 0.0, %v4383
      %v4416 = vmul.f32 %v4384, 1.442695
      %v4417 = vpow.pop %v4416
      %v4418 = vmul.f32 %v4385, 1.442695
      %v4419 = vpow.pop %v4418
      %v4420 = vmul.f32 %v4386, 1.442695
      %v4421 = vpow.pop %v4420
      %v4422 = vmul.f32 %v4387, 1.442695
      %v4423 = vpow.pop %v4422
      %v4424 = vmul.f32 %v4388, 1.442695
      %v4425 = vpow.pop %v4424
      %v4426 = vmul.f32 %v4389, 1.442695
      %v4427 = vpow.pop %v4426
      %v4428 = vmul.f32 %v4390, 1.442695
      %v4429 = vpow.pop %v4428
      %v4430 = vmul.f32 %v4391, 1.442695
      %v4431 = vpow.pop %v4430
      %v4432 = vmul.f32 %v4392, 1.442695
      %v4433 = vpow.pop %v4432
      %v4434 = vmul.f32 %v4393, 1.442695
      %v4435 = vpow.pop %v4434
      %v4436 = vmul.f32 %v4394, 1.442695
      %v4437 = vpow.pop %v4436
      %v4438 = vmul.f32 %v4395, 1.442695
      %v4439 = vpow.pop %v4438
      %v4440 = vmul.f32 %v4396, 1.442695
      %v4441 = vpow.pop %v4440
      %v4442 = vmul.f32 %v4397, 1.442695
      %v4443 = vpow.pop %v4442
      %v4444 = vmul.f32 %v4398, 1.442695
      %v4445 = vpow.pop %v4444
      %v4446 = vmul.f32 %v4399, 1.442695
      %v4447 = vpow.pop %v4446
      %v4448 = vmul.f32 %v4400, 1.442695
      %v4449 = vpow.pop %v4448
      %v4450 = vmul.f32 %v4401, 1.442695
      %v4451 = vpow.pop %v4450
      %v4452 = vmul.f32 %v4402, 1.442695
      %v4453 = vpow.pop %v4452
      %v4454 = vmul.f32 %v4403, 1.442695
      %v4455 = vpow.pop %v4454
      %v4456 = vmul.f32 %v4404, 1.442695
      %v4457 = vpow.pop %v4456
      %v4458 = vmul.f32 %v4405, 1.442695
      %v4459 = vpow.pop %v4458
      %v4460 = vmul.f32 %v4406, 1.442695
      %v4461 = vpow.pop %v4460
      %v4462 = vmul.f32 %v4407, 1.442695
      %v4463 = vpow.pop %v4462
      %v4464 = vmul.f32 %v4408, 1.442695
      %v4465 = vpow.pop %v4464
      %v4466 = vmul.f32 %v4409, 1.442695
      %v4467 = vpow.pop %v4466
      %v4468 = vmul.f32 %v4410, 1.442695
      %v4469 = vpow.pop %v4468
      %v4470 = vmul.f32 %v4411, 1.442695
      %v4471 = vpow.pop %v4470
      %v4472 = vmul.f32 %v4412, 1.442695
      %v4473 = vpow.pop %v4472
      %v4474 = vmul.f32 %v4413, 1.442695
      %v4475 = vpow.pop %v4474
      %v4476 = vmul.f32 %v4414, 1.442695
      %v4477 = vpow.pop %v4476
      %v4478 = vmul.f32 %v4415, 1.442695
      %v4479 = vpow.pop %v4478
      %v4480 = vadd.f32 %v4417, 1.0
      %v4481 = vadd.f32 %v4419, 1.0
      %v4482 = vadd.f32 %v4421, 1.0
      %v4483 = vadd.f32 %v4423, 1.0
      %v4484 = vadd.f32 %v4425, 1.0
      %v4485 = vadd.f32 %v4427, 1.0
      %v4486 = vadd.f32 %v4429, 1.0
      %v4487 = vadd.f32 %v4431, 1.0
      %v4488 = vadd.f32 %v4433, 1.0
      %v4489 = vadd.f32 %v4435, 1.0
      %v4490 = vadd.f32 %v4437, 1.0
      %v4491 = vadd.f32 %v4439, 1.0
      %v4492 = vadd.f32 %v4441, 1.0
      %v4493 = vadd.f32 %v4443, 1.0
      %v4494 = vadd.f32 %v4445, 1.0
      %v4495 = vadd.f32 %v4447, 1.0
      %v4496 = vadd.f32 %v4449, 1.0
      %v4497 = vadd.f32 %v4451, 1.0
      %v4498 = vadd.f32 %v4453, 1.0
      %v4499 = vadd.f32 %v4455, 1.0
      %v4500 = vadd.f32 %v4457, 1.0
      %v4501 = vadd.f32 %v4459, 1.0
      %v4502 = vadd.f32 %v4461, 1.0
      %v4503 = vadd.f32 %v4463, 1.0
      %v4504 = vadd.f32 %v4465, 1.0
      %v4505 = vadd.f32 %v4467, 1.0
      %v4506 = vadd.f32 %v4469, 1.0
      %v4507 = vadd.f32 %v4471, 1.0
      %v4508 = vadd.f32 %v4473, 1.0
      %v4509 = vadd.f32 %v4475, 1.0
      %v4510 = vadd.f32 %v4477, 1.0
      %v4511 = vadd.f32 %v4479, 1.0
      %v4512 = vrcp.pop %v4480
      %v4513 = vmul.f32 1.0, %v4512
      %v4514 = vrcp.pop %v4481
      %v4515 = vmul.f32 1.0, %v4514
      %v4516 = vrcp.pop %v4482
      %v4517 = vmul.f32 1.0, %v4516
      %v4518 = vrcp.pop %v4483
      %v4519 = vmul.f32 1.0, %v4518
      %v4520 = vrcp.pop %v4484
      %v4521 = vmul.f32 1.0, %v4520
      %v4522 = vrcp.pop %v4485
      %v4523 = vmul.f32 1.0, %v4522
      %v4524 = vrcp.pop %v4486
      %v4525 = vmul.f32 1.0, %v4524
      %v4526 = vrcp.pop %v4487
      %v4527 = vmul.f32 1.0, %v4526
      %v4528 = vrcp.pop %v4488
      %v4529 = vmul.f32 1.0, %v4528
      %v4530 = vrcp.pop %v4489
      %v4531 = vmul.f32 1.0, %v4530
      %v4532 = vrcp.pop %v4490
      %v4533 = vmul.f32 1.0, %v4532
      %v4534 = vrcp.pop %v4491
      %v4535 = vmul.f32 1.0, %v4534
      %v4536 = vrcp.pop %v4492
      %v4537 = vmul.f32 1.0, %v4536
      %v4538 = vrcp.pop %v4493
      %v4539 = vmul.f32 1.0, %v4538
      %v4540 = vrcp.pop %v4494
      %v4541 = vmul.f32 1.0, %v4540
      %v4542 = vrcp.pop %v4495
      %v4543 = vmul.f32 1.0, %v4542
      %v4544 = vrcp.pop %v4496
      %v4545 = vmul.f32 1.0, %v4544
      %v4546 = vrcp.pop %v4497
      %v4547 = vmul.f32 1.0, %v4546
      %v4548 = vrcp.pop %v4498
      %v4549 = vmul.f32 1.0, %v4548
      %v4550 = vrcp.pop %v4499
      %v4551 = vmul.f32 1.0, %v4550
      %v4552 = vrcp.pop %v4500
      %v4553 = vmul.f32 1.0, %v4552
      %v4554 = vrcp.pop %v4501
      %v4555 = vmul.f32 1.0, %v4554
      %v4556 = vrcp.pop %v4502
      %v4557 = vmul.f32 1.0, %v4556
      %v4558 = vrcp.pop %v4503
      %v4559 = vmul.f32 1.0, %v4558
      %v4560 = vrcp.pop %v4504
      %v4561 = vmul.f32 1.0, %v4560
      %v4562 = vrcp.pop %v4505
      %v4563 = vmul.f32 1.0, %v4562
      %v4564 = vrcp.pop %v4506
      %v4565 = vmul.f32 1.0, %v4564
      %v4566 = vrcp.pop %v4507
      %v4567 = vmul.f32 1.0, %v4566
      %v4568 = vrcp.pop %v4508
      %v4569 = vmul.f32 1.0, %v4568
      %v4570 = vrcp.pop %v4509
      %v4571 = vmul.f32 1.0, %v4570
      %v4572 = vrcp.pop %v4510
      %v4573 = vmul.f32 1.0, %v4572
      %v4574 = vrcp.pop %v4511
      %v4575 = vmul.f32 1.0, %v4574
      %v4576 = vtanh.pop %v4352
      %v4577 = vtanh.pop %v4353
      %v4578 = vtanh.pop %v4354
      %v4579 = vtanh.pop %v4355
      %v4580 = vtanh.pop %v4356
      %v4581 = vtanh.pop %v4357
      %v4582 = vtanh.pop %v4358
      %v4583 = vtanh.pop %v4359
      %v4584 = vtanh.pop %v4360
      %v4585 = vtanh.pop %v4361
      %v4586 = vtanh.pop %v4362
      %v4587 = vtanh.pop %v4363
      %v4588 = vtanh.pop %v4364
      %v4589 = vtanh.pop %v4365
      %v4590 = vtanh.pop %v4366
      %v4591 = vtanh.pop %v4367
      %v4592 = vtanh.pop %v4368
      %v4593 = vtanh.pop %v4369
      %v4594 = vtanh.pop %v4370
      %v4595 = vtanh.pop %v4371
      %v4596 = vtanh.pop %v4372
      %v4597 = vtanh.pop %v4373
      %v4598 = vtanh.pop %v4374
      %v4599 = vtanh.pop %v4375
      %v4600 = vtanh.pop %v4376
      %v4601 = vtanh.pop %v4377
      %v4602 = vtanh.pop %v4378
      %v4603 = vtanh.pop %v4379
      %v4604 = vtanh.pop %v4380
      %v4605 = vtanh.pop %v4381
      %v4606 = vtanh.pop %v4382
      %v4607 = vtanh.pop %v4383
      %v4608 = vld [vmem:[%s274] sm:$0xff]
      %v4609 = vld [vmem:[%s274 + $0x8] sm:$0xff]
      %v4610 = vld [vmem:[%s274 + $0x10] sm:$0xff]
      %v4611 = vld [vmem:[%s274 + $0x18] sm:$0xff]
      %v4612 = vld [vmem:[%s274 + $0x20] sm:$0xff]
      %v4613 = vld [vmem:[%s274 + $0x28] sm:$0xff]
      %v4614 = vld [vmem:[%s274 + $0x30] sm:$0xff]
      %v4615 = vld [vmem:[%s274 + $0x38] sm:$0xff]
      %v4616 = vld [vmem:[%s274 + $0x40] sm:$0xff]
      %v4617 = vld [vmem:[%s274 + $0x48] sm:$0xff]
      %v4618 = vld [vmem:[%s274 + $0x50] sm:$0xff]
      %v4619 = vld [vmem:[%s274 + $0x58] sm:$0xff]
      %v4620 = vld [vmem:[%s274 + $0x60] sm:$0xff]
      %v4621 = vld [vmem:[%s274 + $0x68] sm:$0xff]
      %v4622 = vld [vmem:[%s274 + $0x70] sm:$0xff]
      %v4623 = vld [vmem:[%s274 + $0x78] sm:$0xff]
      %v4624 = vld [vmem:[%s274 + $0x80] sm:$0xff]
      %v4625 = vld [vmem:[%s274 + $0x88] sm:$0xff]
      %v4626 = vld [vmem:[%s274 + $0x90] sm:$0xff]
      %v4627 = vld [vmem:[%s274 + $0x98] sm:$0xff]
      %v4628 = vld [vmem:[%s274 + $0xa0] sm:$0xff]
      %v4629 = vld [vmem:[%s274 + $0xa8] sm:$0xff]
      %v4630 = vld [vmem:[%s274 + $0xb0] sm:$0xff]
      %v4631 = vld [vmem:[%s274 + $0xb8] sm:$0xff]
      %v4632 = vld [vmem:[%s274 + $0xc0] sm:$0xff]
      %v4633 = vld [vmem:[%s274 + $0xc8] sm:$0xff]
      %v4634 = vld [vmem:[%s274 + $0xd0] sm:$0xff]
      %v4635 = vld [vmem:[%s274 + $0xd8] sm:$0xff]
      %v4636 = vld [vmem:[%s274 + $0xe0] sm:$0xff]
      %v4637 = vld [vmem:[%s274 + $0xe8] sm:$0xff]
      %v4638 = vld [vmem:[%s274 + $0xf0] sm:$0xff]
      %v4639 = vld [vmem:[%s274 + $0xf8] sm:$0xff]
      %4672 = vrot.lane.b32.xlu0 %v4608, 32
      %v4673 = vpop.permute.xlu0 %4672
      %4674 = vrot.lane.b32.xlu0 %v4609, 32
      %v4675 = vpop.permute.xlu0 %4674
      %4676 = vrot.lane.b32.xlu0 %v4610, 32
      %v4677 = vpop.permute.xlu0 %4676
      %4678 = vrot.lane.b32.xlu0 %v4611, 32
      %v4679 = vpop.permute.xlu0 %4678
      %4680 = vrot.lane.b32.xlu0 %v4612, 32
      %v4681 = vpop.permute.xlu0 %4680
      %4682 = vrot.lane.b32.xlu0 %v4613, 32
      %v4683 = vpop.permute.xlu0 %4682
      %4684 = vrot.lane.b32.xlu0 %v4614, 32
      %v4685 = vpop.permute.xlu0 %4684
      %4686 = vrot.lane.b32.xlu0 %v4615, 32
      %v4687 = vpop.permute.xlu0 %4686
      %4688 = vrot.lane.b32.xlu0 %v4616, 32
      %v4689 = vpop.permute.xlu0 %4688
      %4690 = vrot.lane.b32.xlu0 %v4617, 32
      %v4691 = vpop.permute.xlu0 %4690
      %4692 = vrot.lane.b32.xlu0 %v4618, 32
      %v4693 = vpop.permute.xlu0 %4692
      %4694 = vrot.lane.b32.xlu0 %v4619, 32
      %v4695 = vpop.permute.xlu0 %4694
      %4696 = vrot.lane.b32.xlu0 %v4620, 32
      %v4697 = vpop.permute.xlu0 %4696
      %4698 = vrot.lane.b32.xlu0 %v4621, 32
      %v4699 = vpop.permute.xlu0 %4698
      %4700 = vrot.lane.b32.xlu0 %v4622, 32
      %v4701 = vpop.permute.xlu0 %4700
      %4702 = vrot.lane.b32.xlu0 %v4623, 32
      %v4703 = vpop.permute.xlu0 %4702
      %4704 = vrot.lane.b32.xlu0 %v4624, 32
      %v4705 = vpop.permute.xlu0 %4704
      %4706 = vrot.lane.b32.xlu0 %v4625, 32
      %v4707 = vpop.permute.xlu0 %4706
      %4708 = vrot.lane.b32.xlu0 %v4626, 32
      %v4709 = vpop.permute.xlu0 %4708
      %4710 = vrot.lane.b32.xlu0 %v4627, 32
      %v4711 = vpop.permute.xlu0 %4710
      %4712 = vrot.lane.b32.xlu0 %v4628, 32
      %v4713 = vpop.permute.xlu0 %4712
      %4714 = vrot.lane.b32.xlu0 %v4629, 32
      %v4715 = vpop.permute.xlu0 %4714
      %4716 = vrot.lane.b32.xlu0 %v4630, 32
      %v4717 = vpop.permute.xlu0 %4716
      %4718 = vrot.lane.b32.xlu0 %v4631, 32
      %v4719 = vpop.permute.xlu0 %4718
      %4720 = vrot.lane.b32.xlu0 %v4632, 32
      %v4721 = vpop.permute.xlu0 %4720
      %4722 = vrot.lane.b32.xlu0 %v4633, 32
      %v4723 = vpop.permute.xlu0 %4722
      %4724 = vrot.lane.b32.xlu0 %v4634, 32
      %v4725 = vpop.permute.xlu0 %4724
      %4726 = vrot.lane.b32.xlu0 %v4635, 32
      %v4727 = vpop.permute.xlu0 %4726
      %4728 = vrot.lane.b32.xlu0 %v4636, 32
      %v4729 = vpop.permute.xlu0 %4728
      %4730 = vrot.lane.b32.xlu0 %v4637, 32
      %v4731 = vpop.permute.xlu0 %4730
      %4732 = vrot.lane.b32.xlu0 %v4638, 32
      %v4733 = vpop.permute.xlu0 %4732
      %4734 = vrot.lane.b32.xlu0 %v4639, 32
      %v4735 = vpop.permute.xlu0 %4734
      %v4768 = vmul.f32 %v4513, %v4673
      %v4769 = vmul.f32 %v4515, %v4675
      %v4770 = vmul.f32 %v4517, %v4677
      %v4771 = vmul.f32 %v4519, %v4679
      %v4772 = vmul.f32 %v4521, %v4681
      %v4773 = vmul.f32 %v4523, %v4683
      %v4774 = vmul.f32 %v4525, %v4685
      %v4775 = vmul.f32 %v4527, %v4687
      %v4776 = vmul.f32 %v4529, %v4689
      %v4777 = vmul.f32 %v4531, %v4691
      %v4778 = vmul.f32 %v4533, %v4693
      %v4779 = vmul.f32 %v4535, %v4695
      %v4780 = vmul.f32 %v4537, %v4697
      %v4781 = vmul.f32 %v4539, %v4699
      %v4782 = vmul.f32 %v4541, %v4701
      %v4783 = vmul.f32 %v4543, %v4703
      %v4784 = vmul.f32 %v4545, %v4705
      %v4785 = vmul.f32 %v4547, %v4707
      %v4786 = vmul.f32 %v4549, %v4709
      %v4787 = vmul.f32 %v4551, %v4711
      %v4788 = vmul.f32 %v4553, %v4713
      %v4789 = vmul.f32 %v4555, %v4715
      %v4790 = vmul.f32 %v4557, %v4717
      %v4791 = vmul.f32 %v4559, %v4719
      %v4792 = vmul.f32 %v4561, %v4721
      %v4793 = vmul.f32 %v4563, %v4723
      %v4794 = vmul.f32 %v4565, %v4725
      %v4795 = vmul.f32 %v4567, %v4727
      %v4796 = vmul.f32 %v4569, %v4729
      %v4797 = vmul.f32 %v4571, %v4731
      %v4798 = vmul.f32 %v4573, %v4733
      %v4799 = vmul.f32 %v4575, %v4735
      %4832 = vrot.lane.b32.xlu0 %v4576, 64
      %v4833 = vpop.permute.xlu0 %4832
      %4834 = vrot.lane.b32.xlu0 %v4577, 64
      %v4835 = vpop.permute.xlu0 %4834
      %4836 = vrot.lane.b32.xlu0 %v4578, 64
      %v4837 = vpop.permute.xlu0 %4836
      %4838 = vrot.lane.b32.xlu0 %v4579, 64
      %v4839 = vpop.permute.xlu0 %4838
      %4840 = vrot.lane.b32.xlu0 %v4580, 64
      %v4841 = vpop.permute.xlu0 %4840
      %4842 = vrot.lane.b32.xlu0 %v4581, 64
      %v4843 = vpop.permute.xlu0 %4842
      %4844 = vrot.lane.b32.xlu0 %v4582, 64
      %v4845 = vpop.permute.xlu0 %4844
      %4846 = vrot.lane.b32.xlu0 %v4583, 64
      %v4847 = vpop.permute.xlu0 %4846
      %4848 = vrot.lane.b32.xlu0 %v4584, 64
      %v4849 = vpop.permute.xlu0 %4848
      %4850 = vrot.lane.b32.xlu0 %v4585, 64
      %v4851 = vpop.permute.xlu0 %4850
      %4852 = vrot.lane.b32.xlu0 %v4586, 64
      %v4853 = vpop.permute.xlu0 %4852
      %4854 = vrot.lane.b32.xlu0 %v4587, 64
      %v4855 = vpop.permute.xlu0 %4854
      %4856 = vrot.lane.b32.xlu0 %v4588, 64
      %v4857 = vpop.permute.xlu0 %4856
      %4858 = vrot.lane.b32.xlu0 %v4589, 64
      %v4859 = vpop.permute.xlu0 %4858
      %4860 = vrot.lane.b32.xlu0 %v4590, 64
      %v4861 = vpop.permute.xlu0 %4860
      %4862 = vrot.lane.b32.xlu0 %v4591, 64
      %v4863 = vpop.permute.xlu0 %4862
      %4864 = vrot.lane.b32.xlu0 %v4592, 64
      %v4865 = vpop.permute.xlu0 %4864
      %4866 = vrot.lane.b32.xlu0 %v4593, 64
      %v4867 = vpop.permute.xlu0 %4866
      %4868 = vrot.lane.b32.xlu0 %v4594, 64
      %v4869 = vpop.permute.xlu0 %4868
      %4870 = vrot.lane.b32.xlu0 %v4595, 64
      %v4871 = vpop.permute.xlu0 %4870
      %4872 = vrot.lane.b32.xlu0 %v4596, 64
      %v4873 = vpop.permute.xlu0 %4872
      %4874 = vrot.lane.b32.xlu0 %v4597, 64
      %v4875 = vpop.permute.xlu0 %4874
      %4876 = vrot.lane.b32.xlu0 %v4598, 64
      %v4877 = vpop.permute.xlu0 %4876
      %4878 = vrot.lane.b32.xlu0 %v4599, 64
      %v4879 = vpop.permute.xlu0 %4878
      %4880 = vrot.lane.b32.xlu0 %v4600, 64
      %v4881 = vpop.permute.xlu0 %4880
      %4882 = vrot.lane.b32.xlu0 %v4601, 64
      %v4883 = vpop.permute.xlu0 %4882
      %4884 = vrot.lane.b32.xlu0 %v4602, 64
      %v4885 = vpop.permute.xlu0 %4884
      %4886 = vrot.lane.b32.xlu0 %v4603, 64
      %v4887 = vpop.permute.xlu0 %4886
      %4888 = vrot.lane.b32.xlu0 %v4604, 64
      %v4889 = vpop.permute.xlu0 %4888
      %4890 = vrot.lane.b32.xlu0 %v4605, 64
      %v4891 = vpop.permute.xlu0 %4890
      %4892 = vrot.lane.b32.xlu0 %v4606, 64
      %v4893 = vpop.permute.xlu0 %4892
      %4894 = vrot.lane.b32.xlu0 %v4607, 64
      %v4895 = vpop.permute.xlu0 %4894
      %v4928 = vmul.f32 %v4513, %v4833
      %v4929 = vmul.f32 %v4515, %v4835
      %v4930 = vmul.f32 %v4517, %v4837
      %v4931 = vmul.f32 %v4519, %v4839
      %v4932 = vmul.f32 %v4521, %v4841
      %v4933 = vmul.f32 %v4523, %v4843
      %v4934 = vmul.f32 %v4525, %v4845
      %v4935 = vmul.f32 %v4527, %v4847
      %v4936 = vmul.f32 %v4529, %v4849
      %v4937 = vmul.f32 %v4531, %v4851
      %v4938 = vmul.f32 %v4533, %v4853
      %v4939 = vmul.f32 %v4535, %v4855
      %v4940 = vmul.f32 %v4537, %v4857
      %v4941 = vmul.f32 %v4539, %v4859
      %v4942 = vmul.f32 %v4541, %v4861
      %v4943 = vmul.f32 %v4543, %v4863
      %v4944 = vmul.f32 %v4545, %v4865
      %v4945 = vmul.f32 %v4547, %v4867
      %v4946 = vmul.f32 %v4549, %v4869
      %v4947 = vmul.f32 %v4551, %v4871
      %v4948 = vmul.f32 %v4553, %v4873
      %v4949 = vmul.f32 %v4555, %v4875
      %v4950 = vmul.f32 %v4557, %v4877
      %v4951 = vmul.f32 %v4559, %v4879
      %v4952 = vmul.f32 %v4561, %v4881
      %v4953 = vmul.f32 %v4563, %v4883
      %v4954 = vmul.f32 %v4565, %v4885
      %v4955 = vmul.f32 %v4567, %v4887
      %v4956 = vmul.f32 %v4569, %v4889
      %v4957 = vmul.f32 %v4571, %v4891
      %v4958 = vmul.f32 %v4573, %v4893
      %v4959 = vmul.f32 %v4575, %v4895
      %4992 = vrot.lane.b32.xlu0 %v4928, 32
      %v4993 = vpop.permute.xlu0 %4992
      %4994 = vrot.lane.b32.xlu0 %v4929, 32
      %v4995 = vpop.permute.xlu0 %4994
      %4996 = vrot.lane.b32.xlu0 %v4930, 32
      %v4997 = vpop.permute.xlu0 %4996
      %4998 = vrot.lane.b32.xlu0 %v4931, 32
      %v4999 = vpop.permute.xlu0 %4998
      %5000 = vrot.lane.b32.xlu0 %v4932, 32
      %v5001 = vpop.permute.xlu0 %5000
      %5002 = vrot.lane.b32.xlu0 %v4933, 32
      %v5003 = vpop.permute.xlu0 %5002
      %5004 = vrot.lane.b32.xlu0 %v4934, 32
      %v5005 = vpop.permute.xlu0 %5004
      %5006 = vrot.lane.b32.xlu0 %v4935, 32
      %v5007 = vpop.permute.xlu0 %5006
      %5008 = vrot.lane.b32.xlu0 %v4936, 32
      %v5009 = vpop.permute.xlu0 %5008
      %5010 = vrot.lane.b32.xlu0 %v4937, 32
      %v5011 = vpop.permute.xlu0 %5010
      %5012 = vrot.lane.b32.xlu0 %v4938, 32
      %v5013 = vpop.permute.xlu0 %5012
      %5014 = vrot.lane.b32.xlu0 %v4939, 32
      %v5015 = vpop.permute.xlu0 %5014
      %5016 = vrot.lane.b32.xlu0 %v4940, 32
      %v5017 = vpop.permute.xlu0 %5016
      %5018 = vrot.lane.b32.xlu0 %v4941, 32
      %v5019 = vpop.permute.xlu0 %5018
      %5020 = vrot.lane.b32.xlu0 %v4942, 32
      %v5021 = vpop.permute.xlu0 %5020
      %5022 = vrot.lane.b32.xlu0 %v4943, 32
      %v5023 = vpop.permute.xlu0 %5022
      %5024 = vrot.lane.b32.xlu0 %v4944, 32
      %v5025 = vpop.permute.xlu0 %5024
      %5026 = vrot.lane.b32.xlu0 %v4945, 32
      %v5027 = vpop.permute.xlu0 %5026
      %5028 = vrot.lane.b32.xlu0 %v4946, 32
      %v5029 = vpop.permute.xlu0 %5028
      %5030 = vrot.lane.b32.xlu0 %v4947, 32
      %v5031 = vpop.permute.xlu0 %5030
      %5032 = vrot.lane.b32.xlu0 %v4948, 32
      %v5033 = vpop.permute.xlu0 %5032
      %5034 = vrot.lane.b32.xlu0 %v4949, 32
      %v5035 = vpop.permute.xlu0 %5034
      %5036 = vrot.lane.b32.xlu0 %v4950, 32
      %v5037 = vpop.permute.xlu0 %5036
      %5038 = vrot.lane.b32.xlu0 %v4951, 32
      %v5039 = vpop.permute.xlu0 %5038
      %5040 = vrot.lane.b32.xlu0 %v4952, 32
      %v5041 = vpop.permute.xlu0 %5040
      %5042 = vrot.lane.b32.xlu0 %v4953, 32
      %v5043 = vpop.permute.xlu0 %5042
      %5044 = vrot.lane.b32.xlu0 %v4954, 32
      %v5045 = vpop.permute.xlu0 %5044
      %5046 = vrot.lane.b32.xlu0 %v4955, 32
      %v5047 = vpop.permute.xlu0 %5046
      %5048 = vrot.lane.b32.xlu0 %v4956, 32
      %v5049 = vpop.permute.xlu0 %5048
      %5050 = vrot.lane.b32.xlu0 %v4957, 32
      %v5051 = vpop.permute.xlu0 %5050
      %5052 = vrot.lane.b32.xlu0 %v4958, 32
      %v5053 = vpop.permute.xlu0 %5052
      %5054 = vrot.lane.b32.xlu0 %v4959, 32
      %v5055 = vpop.permute.xlu0 %5054
      %v5088 = vadd.f32 %v4768, %v4993
      %v5089 = vadd.f32 %v4769, %v4995
      %v5090 = vadd.f32 %v4770, %v4997
      %v5091 = vadd.f32 %v4771, %v4999
      %v5092 = vadd.f32 %v4772, %v5001
      %v5093 = vadd.f32 %v4773, %v5003
      %v5094 = vadd.f32 %v4774, %v5005
      %v5095 = vadd.f32 %v4775, %v5007
      %v5096 = vadd.f32 %v4776, %v5009
      %v5097 = vadd.f32 %v4777, %v5011
      %v5098 = vadd.f32 %v4778, %v5013
      %v5099 = vadd.f32 %v4779, %v5015
      %v5100 = vadd.f32 %v4780, %v5017
      %v5101 = vadd.f32 %v4781, %v5019
      %v5102 = vadd.f32 %v4782, %v5021
      %v5103 = vadd.f32 %v4783, %v5023
      %v5104 = vadd.f32 %v4784, %v5025
      %v5105 = vadd.f32 %v4785, %v5027
      %v5106 = vadd.f32 %v4786, %v5029
      %v5107 = vadd.f32 %v4787, %v5031
      %v5108 = vadd.f32 %v4788, %v5033
      %v5109 = vadd.f32 %v4789, %v5035
      %v5110 = vadd.f32 %v4790, %v5037
      %v5111 = vadd.f32 %v4791, %v5039
      %v5112 = vadd.f32 %v4792, %v5041
      %v5113 = vadd.f32 %v4793, %v5043
      %v5114 = vadd.f32 %v4794, %v5045
      %v5115 = vadd.f32 %v4795, %v5047
      %v5116 = vadd.f32 %v4796, %v5049
      %v5117 = vadd.f32 %v4797, %v5051
      %v5118 = vadd.f32 %v4798, %v5053
      %v5119 = vadd.f32 %v4799, %v5055
      %v5120 = vtanh.pop %v5088
      %v5121 = vtanh.pop %v5089
      %v5122 = vtanh.pop %v5090
      %v5123 = vtanh.pop %v5091
      %v5124 = vtanh.pop %v5092
      %v5125 = vtanh.pop %v5093
      %v5126 = vtanh.pop %v5094
      %v5127 = vtanh.pop %v5095
      %v5128 = vtanh.pop %v5096
      %v5129 = vtanh.pop %v5097
      %v5130 = vtanh.pop %v5098
      %v5131 = vtanh.pop %v5099
      %v5132 = vtanh.pop %v5100
      %v5133 = vtanh.pop %v5101
      %v5134 = vtanh.pop %v5102
      %v5135 = vtanh.pop %v5103
      %v5136 = vtanh.pop %v5104
      %v5137 = vtanh.pop %v5105
      %v5138 = vtanh.pop %v5106
      %v5139 = vtanh.pop %v5107
      %v5140 = vtanh.pop %v5108
      %v5141 = vtanh.pop %v5109
      %v5142 = vtanh.pop %v5110
      %v5143 = vtanh.pop %v5111
      %v5144 = vtanh.pop %v5112
      %v5145 = vtanh.pop %v5113
      %v5146 = vtanh.pop %v5114
      %v5147 = vtanh.pop %v5115
      %v5148 = vtanh.pop %v5116
      %v5149 = vtanh.pop %v5117
      %v5150 = vtanh.pop %v5118
      %v5151 = vtanh.pop %v5119
      %5184 = vrot.lane.b32.xlu0 %v5120, 64
      %v5185 = vpop.permute.xlu0 %5184
      %5186 = vrot.lane.b32.xlu0 %v5121, 64
      %v5187 = vpop.permute.xlu0 %5186
      %5188 = vrot.lane.b32.xlu0 %v5122, 64
      %v5189 = vpop.permute.xlu0 %5188
      %5190 = vrot.lane.b32.xlu0 %v5123, 64
      %v5191 = vpop.permute.xlu0 %5190
      %5192 = vrot.lane.b32.xlu0 %v5124, 64
      %v5193 = vpop.permute.xlu0 %5192
      %5194 = vrot.lane.b32.xlu0 %v5125, 64
      %v5195 = vpop.permute.xlu0 %5194
      %5196 = vrot.lane.b32.xlu0 %v5126, 64
      %v5197 = vpop.permute.xlu0 %5196
      %5198 = vrot.lane.b32.xlu0 %v5127, 64
      %v5199 = vpop.permute.xlu0 %5198
      %5200 = vrot.lane.b32.xlu0 %v5128, 64
      %v5201 = vpop.permute.xlu0 %5200
      %5202 = vrot.lane.b32.xlu0 %v5129, 64
      %v5203 = vpop.permute.xlu0 %5202
      %5204 = vrot.lane.b32.xlu0 %v5130, 64
      %v5205 = vpop.permute.xlu0 %5204
      %5206 = vrot.lane.b32.xlu0 %v5131, 64
      %v5207 = vpop.permute.xlu0 %5206
      %5208 = vrot.lane.b32.xlu0 %v5132, 64
      %v5209 = vpop.permute.xlu0 %5208
      %5210 = vrot.lane.b32.xlu0 %v5133, 64
      %v5211 = vpop.permute.xlu0 %5210
      %5212 = vrot.lane.b32.xlu0 %v5134, 64
      %v5213 = vpop.permute.xlu0 %5212
      %5214 = vrot.lane.b32.xlu0 %v5135, 64
      %v5215 = vpop.permute.xlu0 %5214
      %5216 = vrot.lane.b32.xlu0 %v5136, 64
      %v5217 = vpop.permute.xlu0 %5216
      %5218 = vrot.lane.b32.xlu0 %v5137, 64
      %v5219 = vpop.permute.xlu0 %5218
      %5220 = vrot.lane.b32.xlu0 %v5138, 64
      %v5221 = vpop.permute.xlu0 %5220
      %5222 = vrot.lane.b32.xlu0 %v5139, 64
      %v5223 = vpop.permute.xlu0 %5222
      %5224 = vrot.lane.b32.xlu0 %v5140, 64
      %v5225 = vpop.permute.xlu0 %5224
      %5226 = vrot.lane.b32.xlu0 %v5141, 64
      %v5227 = vpop.permute.xlu0 %5226
      %5228 = vrot.lane.b32.xlu0 %v5142, 64
      %v5229 = vpop.permute.xlu0 %5228
      %5230 = vrot.lane.b32.xlu0 %v5143, 64
      %v5231 = vpop.permute.xlu0 %5230
      %5232 = vrot.lane.b32.xlu0 %v5144, 64
      %v5233 = vpop.permute.xlu0 %5232
      %5234 = vrot.lane.b32.xlu0 %v5145, 64
      %v5235 = vpop.permute.xlu0 %5234
      %5236 = vrot.lane.b32.xlu0 %v5146, 64
      %v5237 = vpop.permute.xlu0 %5236
      %5238 = vrot.lane.b32.xlu0 %v5147, 64
      %v5239 = vpop.permute.xlu0 %5238
      %5240 = vrot.lane.b32.xlu0 %v5148, 64
      %v5241 = vpop.permute.xlu0 %5240
      %5242 = vrot.lane.b32.xlu0 %v5149, 64
      %v5243 = vpop.permute.xlu0 %5242
      %5244 = vrot.lane.b32.xlu0 %v5150, 64
      %v5245 = vpop.permute.xlu0 %5244
      %5246 = vrot.lane.b32.xlu0 %v5151, 64
      %v5247 = vpop.permute.xlu0 %5246
      %v5280 = vmul.f32 %v4513, %v5185
      %v5281 = vmul.f32 %v4515, %v5187
      %v5282 = vmul.f32 %v4517, %v5189
      %v5283 = vmul.f32 %v4519, %v5191
      %v5284 = vmul.f32 %v4521, %v5193
      %v5285 = vmul.f32 %v4523, %v5195
      %v5286 = vmul.f32 %v4525, %v5197
      %v5287 = vmul.f32 %v4527, %v5199
      %v5288 = vmul.f32 %v4529, %v5201
      %v5289 = vmul.f32 %v4531, %v5203
      %v5290 = vmul.f32 %v4533, %v5205
      %v5291 = vmul.f32 %v4535, %v5207
      %v5292 = vmul.f32 %v4537, %v5209
      %v5293 = vmul.f32 %v4539, %v5211
      %v5294 = vmul.f32 %v4541, %v5213
      %v5295 = vmul.f32 %v4543, %v5215
      %v5296 = vmul.f32 %v4545, %v5217
      %v5297 = vmul.f32 %v4547, %v5219
      %v5298 = vmul.f32 %v4549, %v5221
      %v5299 = vmul.f32 %v4551, %v5223
      %v5300 = vmul.f32 %v4553, %v5225
      %v5301 = vmul.f32 %v4555, %v5227
      %v5302 = vmul.f32 %v4557, %v5229
      %v5303 = vmul.f32 %v4559, %v5231
      %v5304 = vmul.f32 %v4561, %v5233
      %v5305 = vmul.f32 %v4563, %v5235
      %v5306 = vmul.f32 %v4565, %v5237
      %v5307 = vmul.f32 %v4567, %v5239
      %v5308 = vmul.f32 %v4569, %v5241
      %v5309 = vmul.f32 %v4571, %v5243
      %v5310 = vmul.f32 %v4573, %v5245
      %v5311 = vmul.f32 %v4575, %v5247
      %5344 = vrot.lane.b32.xlu0 %v5280, 32
      %v5345 = vpop.permute.xlu0 %5344
      %5346 = vrot.lane.b32.xlu0 %v5281, 32
      %v5347 = vpop.permute.xlu0 %5346
      %5348 = vrot.lane.b32.xlu0 %v5282, 32
      %v5349 = vpop.permute.xlu0 %5348
      %5350 = vrot.lane.b32.xlu0 %v5283, 32
      %v5351 = vpop.permute.xlu0 %5350
      %5352 = vrot.lane.b32.xlu0 %v5284, 32
      %v5353 = vpop.permute.xlu0 %5352
      %5354 = vrot.lane.b32.xlu0 %v5285, 32
      %v5355 = vpop.permute.xlu0 %5354
      %5356 = vrot.lane.b32.xlu0 %v5286, 32
      %v5357 = vpop.permute.xlu0 %5356
      %5358 = vrot.lane.b32.xlu0 %v5287, 32
      %v5359 = vpop.permute.xlu0 %5358
      %5360 = vrot.lane.b32.xlu0 %v5288, 32
      %v5361 = vpop.permute.xlu0 %5360
      %5362 = vrot.lane.b32.xlu0 %v5289, 32
      %v5363 = vpop.permute.xlu0 %5362
      %5364 = vrot.lane.b32.xlu0 %v5290, 32
      %v5365 = vpop.permute.xlu0 %5364
      %5366 = vrot.lane.b32.xlu0 %v5291, 32
      %v5367 = vpop.permute.xlu0 %5366
      %5368 = vrot.lane.b32.xlu0 %v5292, 32
      %v5369 = vpop.permute.xlu0 %5368
      %5370 = vrot.lane.b32.xlu0 %v5293, 32
      %v5371 = vpop.permute.xlu0 %5370
      %5372 = vrot.lane.b32.xlu0 %v5294, 32
      %v5373 = vpop.permute.xlu0 %5372
      %5374 = vrot.lane.b32.xlu0 %v5295, 32
      %v5375 = vpop.permute.xlu0 %5374
      %5376 = vrot.lane.b32.xlu0 %v5296, 32
      %v5377 = vpop.permute.xlu0 %5376
      %5378 = vrot.lane.b32.xlu0 %v5297, 32
      %v5379 = vpop.permute.xlu0 %5378
      %5380 = vrot.lane.b32.xlu0 %v5298, 32
      %v5381 = vpop.permute.xlu0 %5380
      %5382 = vrot.lane.b32.xlu0 %v5299, 32
      %v5383 = vpop.permute.xlu0 %5382
      %5384 = vrot.lane.b32.xlu0 %v5300, 32
      %v5385 = vpop.permute.xlu0 %5384
      %5386 = vrot.lane.b32.xlu0 %v5301, 32
      %v5387 = vpop.permute.xlu0 %5386
      %5388 = vrot.lane.b32.xlu0 %v5302, 32
      %v5389 = vpop.permute.xlu0 %5388
      %5390 = vrot.lane.b32.xlu0 %v5303, 32
      %v5391 = vpop.permute.xlu0 %5390
      %5392 = vrot.lane.b32.xlu0 %v5304, 32
      %v5393 = vpop.permute.xlu0 %5392
      %5394 = vrot.lane.b32.xlu0 %v5305, 32
      %v5395 = vpop.permute.xlu0 %5394
      %5396 = vrot.lane.b32.xlu0 %v5306, 32
      %v5397 = vpop.permute.xlu0 %5396
      %5398 = vrot.lane.b32.xlu0 %v5307, 32
      %v5399 = vpop.permute.xlu0 %5398
      %5400 = vrot.lane.b32.xlu0 %v5308, 32
      %v5401 = vpop.permute.xlu0 %5400
      %5402 = vrot.lane.b32.xlu0 %v5309, 32
      %v5403 = vpop.permute.xlu0 %5402
      %5404 = vrot.lane.b32.xlu0 %v5310, 32
      %v5405 = vpop.permute.xlu0 %5404
      %5406 = vrot.lane.b32.xlu0 %v5311, 32
      %v5407 = vpop.permute.xlu0 %5406
      %vm5440 = vcmask 261120
      %5441 = vst.msk [vmem:[%s279] sm:$0xff] %vm5440, %v5345
      %5442 = vst.msk [vmem:[%s279 + $0x8] sm:$0xff] %vm5440, %v5347
      %5443 = vst.msk [vmem:[%s279 + $0x10] sm:$0xff] %vm5440, %v5349
      %5444 = vst.msk [vmem:[%s279 + $0x18] sm:$0xff] %vm5440, %v5351
      %5445 = vst.msk [vmem:[%s279 + $0x20] sm:$0xff] %vm5440, %v5353
      %5446 = vst.msk [vmem:[%s279 + $0x28] sm:$0xff] %vm5440, %v5355
      %5447 = vst.msk [vmem:[%s279 + $0x30] sm:$0xff] %vm5440, %v5357
      %5448 = vst.msk [vmem:[%s279 + $0x38] sm:$0xff] %vm5440, %v5359
      %5449 = vst.msk [vmem:[%s279 + $0x40] sm:$0xff] %vm5440, %v5361
      %5450 = vst.msk [vmem:[%s279 + $0x48] sm:$0xff] %vm5440, %v5363
      %5451 = vst.msk [vmem:[%s279 + $0x50] sm:$0xff] %vm5440, %v5365
      %5452 = vst.msk [vmem:[%s279 + $0x58] sm:$0xff] %vm5440, %v5367
      %5453 = vst.msk [vmem:[%s279 + $0x60] sm:$0xff] %vm5440, %v5369
      %5454 = vst.msk [vmem:[%s279 + $0x68] sm:$0xff] %vm5440, %v5371
      %5455 = vst.msk [vmem:[%s279 + $0x70] sm:$0xff] %vm5440, %v5373
      %5456 = vst.msk [vmem:[%s279 + $0x78] sm:$0xff] %vm5440, %v5375
      %5457 = vst.msk [vmem:[%s279 + $0x80] sm:$0xff] %vm5440, %v5377
      %5458 = vst.msk [vmem:[%s279 + $0x88] sm:$0xff] %vm5440, %v5379
      %5459 = vst.msk [vmem:[%s279 + $0x90] sm:$0xff] %vm5440, %v5381
      %5460 = vst.msk [vmem:[%s279 + $0x98] sm:$0xff] %vm5440, %v5383
      %5461 = vst.msk [vmem:[%s279 + $0xa0] sm:$0xff] %vm5440, %v5385
      %5462 = vst.msk [vmem:[%s279 + $0xa8] sm:$0xff] %vm5440, %v5387
      %5463 = vst.msk [vmem:[%s279 + $0xb0] sm:$0xff] %vm5440, %v5389
      %5464 = vst.msk [vmem:[%s279 + $0xb8] sm:$0xff] %vm5440, %v5391
      %5465 = vst.msk [vmem:[%s279 + $0xc0] sm:$0xff] %vm5440, %v5393
      %5466 = vst.msk [vmem:[%s279 + $0xc8] sm:$0xff] %vm5440, %v5395
      %5467 = vst.msk [vmem:[%s279 + $0xd0] sm:$0xff] %vm5440, %v5397
      %5468 = vst.msk [vmem:[%s279 + $0xd8] sm:$0xff] %vm5440, %v5399
      %5469 = vst.msk [vmem:[%s279 + $0xe0] sm:$0xff] %vm5440, %v5401
      %5470 = vst.msk [vmem:[%s279 + $0xe8] sm:$0xff] %vm5440, %v5403
      %5471 = vst.msk [vmem:[%s279 + $0xf0] sm:$0xff] %vm5440, %v5405
      %5472 = vst.msk [vmem:[%s279 + $0xf8] sm:$0xff] %vm5440, %v5407
      %5505 = vrot.lane.b32.xlu0 %v5088, 96
      %v5506 = vpop.permute.xlu0 %5505
      %5507 = vrot.lane.b32.xlu0 %v5089, 96
      %v5508 = vpop.permute.xlu0 %5507
      %5509 = vrot.lane.b32.xlu0 %v5090, 96
      %v5510 = vpop.permute.xlu0 %5509
      %5511 = vrot.lane.b32.xlu0 %v5091, 96
      %v5512 = vpop.permute.xlu0 %5511
      %5513 = vrot.lane.b32.xlu0 %v5092, 96
      %v5514 = vpop.permute.xlu0 %5513
      %5515 = vrot.lane.b32.xlu0 %v5093, 96
      %v5516 = vpop.permute.xlu0 %5515
      %5517 = vrot.lane.b32.xlu0 %v5094, 96
      %v5518 = vpop.permute.xlu0 %5517
      %5519 = vrot.lane.b32.xlu0 %v5095, 96
      %v5520 = vpop.permute.xlu0 %5519
      %5521 = vrot.lane.b32.xlu0 %v5096, 96
      %v5522 = vpop.permute.xlu0 %5521
      %5523 = vrot.lane.b32.xlu0 %v5097, 96
      %v5524 = vpop.permute.xlu0 %5523
      %5525 = vrot.lane.b32.xlu0 %v5098, 96
      %v5526 = vpop.permute.xlu0 %5525
      %5527 = vrot.lane.b32.xlu0 %v5099, 96
      %v5528 = vpop.permute.xlu0 %5527
      %5529 = vrot.lane.b32.xlu0 %v5100, 96
      %v5530 = vpop.permute.xlu0 %5529
      %5531 = vrot.lane.b32.xlu0 %v5101, 96
      %v5532 = vpop.permute.xlu0 %5531
      %5533 = vrot.lane.b32.xlu0 %v5102, 96
      %v5534 = vpop.permute.xlu0 %5533
      %5535 = vrot.lane.b32.xlu0 %v5103, 96
      %v5536 = vpop.permute.xlu0 %5535
      %5537 = vrot.lane.b32.xlu0 %v5104, 96
      %v5538 = vpop.permute.xlu0 %5537
      %5539 = vrot.lane.b32.xlu0 %v5105, 96
      %v5540 = vpop.permute.xlu0 %5539
      %5541 = vrot.lane.b32.xlu0 %v5106, 96
      %v5542 = vpop.permute.xlu0 %5541
      %5543 = vrot.lane.b32.xlu0 %v5107, 96
      %v5544 = vpop.permute.xlu0 %5543
      %5545 = vrot.lane.b32.xlu0 %v5108, 96
      %v5546 = vpop.permute.xlu0 %5545
      %5547 = vrot.lane.b32.xlu0 %v5109, 96
      %v5548 = vpop.permute.xlu0 %5547
      %5549 = vrot.lane.b32.xlu0 %v5110, 96
      %v5550 = vpop.permute.xlu0 %5549
      %5551 = vrot.lane.b32.xlu0 %v5111, 96
      %v5552 = vpop.permute.xlu0 %5551
      %5553 = vrot.lane.b32.xlu0 %v5112, 96
      %v5554 = vpop.permute.xlu0 %5553
      %5555 = vrot.lane.b32.xlu0 %v5113, 96
      %v5556 = vpop.permute.xlu0 %5555
      %5557 = vrot.lane.b32.xlu0 %v5114, 96
      %v5558 = vpop.permute.xlu0 %5557
      %5559 = vrot.lane.b32.xlu0 %v5115, 96
      %v5560 = vpop.permute.xlu0 %5559
      %5561 = vrot.lane.b32.xlu0 %v5116, 96
      %v5562 = vpop.permute.xlu0 %5561
      %5563 = vrot.lane.b32.xlu0 %v5117, 96
      %v5564 = vpop.permute.xlu0 %5563
      %5565 = vrot.lane.b32.xlu0 %v5118, 96
      %v5566 = vpop.permute.xlu0 %5565
      %5567 = vrot.lane.b32.xlu0 %v5119, 96
      %v5568 = vpop.permute.xlu0 %5567
      %5601 = vst.msk [vmem:[%s284] sm:$0xff] %vm5440, %v5506
      %5602 = vst.msk [vmem:[%s284 + $0x8] sm:$0xff] %vm5440, %v5508
      %5603 = vst.msk [vmem:[%s284 + $0x10] sm:$0xff] %vm5440, %v5510
      %5604 = vst.msk [vmem:[%s284 + $0x18] sm:$0xff] %vm5440, %v5512
      %5605 = vst.msk [vmem:[%s284 + $0x20] sm:$0xff] %vm5440, %v5514
      %5606 = vst.msk [vmem:[%s284 + $0x28] sm:$0xff] %vm5440, %v5516
      %5607 = vst.msk [vmem:[%s284 + $0x30] sm:$0xff] %vm5440, %v5518
      %5608 = vst.msk [vmem:[%s284 + $0x38] sm:$0xff] %vm5440, %v5520
      %5609 = vst.msk [vmem:[%s284 + $0x40] sm:$0xff] %vm5440, %v5522
      %5610 = vst.msk [vmem:[%s284 + $0x48] sm:$0xff] %vm5440, %v5524
      %5611 = vst.msk [vmem:[%s284 + $0x50] sm:$0xff] %vm5440, %v5526
      %5612 = vst.msk [vmem:[%s284 + $0x58] sm:$0xff] %vm5440, %v5528
      %5613 = vst.msk [vmem:[%s284 + $0x60] sm:$0xff] %vm5440, %v5530
      %5614 = vst.msk [vmem:[%s284 + $0x68] sm:$0xff] %vm5440, %v5532
      %5615 = vst.msk [vmem:[%s284 + $0x70] sm:$0xff] %vm5440, %v5534
      %5616 = vst.msk [vmem:[%s284 + $0x78] sm:$0xff] %vm5440, %v5536
      %5617 = vst.msk [vmem:[%s284 + $0x80] sm:$0xff] %vm5440, %v5538
      %5618 = vst.msk [vmem:[%s284 + $0x88] sm:$0xff] %vm5440, %v5540
      %5619 = vst.msk [vmem:[%s284 + $0x90] sm:$0xff] %vm5440, %v5542
      %5620 = vst.msk [vmem:[%s284 + $0x98] sm:$0xff] %vm5440, %v5544
      %5621 = vst.msk [vmem:[%s284 + $0xa0] sm:$0xff] %vm5440, %v5546
      %5622 = vst.msk [vmem:[%s284 + $0xa8] sm:$0xff] %vm5440, %v5548
      %5623 = vst.msk [vmem:[%s284 + $0xb0] sm:$0xff] %vm5440, %v5550
      %5624 = vst.msk [vmem:[%s284 + $0xb8] sm:$0xff] %vm5440, %v5552
      %5625 = vst.msk [vmem:[%s284 + $0xc0] sm:$0xff] %vm5440, %v5554
      %5626 = vst.msk [vmem:[%s284 + $0xc8] sm:$0xff] %vm5440, %v5556
      %5627 = vst.msk [vmem:[%s284 + $0xd0] sm:$0xff] %vm5440, %v5558
      %5628 = vst.msk [vmem:[%s284 + $0xd8] sm:$0xff] %vm5440, %v5560
      %5629 = vst.msk [vmem:[%s284 + $0xe0] sm:$0xff] %vm5440, %v5562
      %5630 = vst.msk [vmem:[%s284 + $0xe8] sm:$0xff] %vm5440, %v5564
      %5631 = vst.msk [vmem:[%s284 + $0xf0] sm:$0xff] %vm5440, %v5566
      %5632 = vst.msk [vmem:[%s284 + $0xf8] sm:$0xff] %vm5440, %v5568
      %p5633 = scmp.lt.s32.totalorder %s18, 1
      %s5634 = scalar_select %p5633, %s18, 1
      %s5635 = smul.addr %s5634, 32
      %s5636 = smul.addr %s5635, 8
      %s5637 = scalar_lea.vmem %s5, %s5636
      %p5638 = scmp.lt.s32.totalorder %s18, 1
      %s5639 = scalar_select %p5638, %s18, 1
      %s5640 = smul.addr %s5639, 32
      %s5641 = smul.addr %s5640, 8
      %s5642 = scalar_lea.vmem %s6, %s5641
      // Predicated region
      $region41: #{tpu_custom_call.1} parent=39 // pred_check
        %p5643 = pneg %p151
      $region42: #{tpu_custom_call.1} parent=39 // pred_check_branch
        %5645 = sbr.rel (%p5643) target = $region44
      $region43: #{tpu_custom_call.1} parent=39 // pred_region
        _
      $region44: #{tpu_custom_call.1} parent=39 // pred_fallthru
        _
      // Predicated region
      $region45: #{tpu_custom_call.1} parent=39 // pred_check
        %p5646 = pneg %p177
      $region46: #{tpu_custom_call.1} parent=39 // pred_check_branch
        %5648 = sbr.rel (%p5646) target = $region48
      $region47: #{tpu_custom_call.1} parent=39 // pred_region
        _
      $region48: #{tpu_custom_call.1} parent=39 // pred_fallthru
        _
    $region40: #{tpu_custom_call.1} parent=5 // pred_fallthru
      _
    %p5649 = scmp.le.s32.totalorder 2, %s13
    // Predicated region
    $region49: #{tpu_custom_call.1} parent=5 // pred_check
      %p5650 = pneg %p5649
    $region50: #{tpu_custom_call.1} parent=5 // pred_check_branch
      %5652 = sbr.rel (%p5650) target = $region52
    $region51: #{tpu_custom_call.1} parent=5 // pred_region
      %s5653 = ssub.s32 %s13, 2
      // Predicated region
      $region53: #{tpu_custom_call.1} parent=51 // pred_check
        %p5654 = pneg %p157
      $region54: #{tpu_custom_call.1} parent=51 // pred_check_branch
        %5656 = sbr.rel (%p5654) target = $region56
      $region55: #{tpu_custom_call.1} parent=51 // pred_region
        %p5657 = scmp.lt.s32.totalorder %s19, 1
        %s5658 = scalar_select %p5657, %s19, 1
        %s5659 = smul.addr %s5658, 32
        %s5660 = smul.addr %s5659, 8
        %s5661 = scalar_lea.vmem %s5, %s5660
      $region56: #{tpu_custom_call.1} parent=51 // pred_fallthru
        _
      // Predicated region
      $region57: #{tpu_custom_call.1} parent=51 // pred_check
        %p5662 = pneg %p183
      $region58: #{tpu_custom_call.1} parent=51 // pred_check_branch
        %5664 = sbr.rel (%p5662) target = $region60
      $region59: #{tpu_custom_call.1} parent=51 // pred_region
        %p5665 = scmp.lt.s32.totalorder %s19, 1
        %s5666 = scalar_select %p5665, %s19, 1
        %s5667 = smul.addr %s5666, 32
        %s5668 = smul.addr %s5667, 8
        %s5669 = scalar_lea.vmem %s6, %s5668
      $region60: #{tpu_custom_call.1} parent=51 // pred_fallthru
        _
    $region52: #{tpu_custom_call.1} parent=5 // pred_fallthru
      _
  $region6: #{tpu_custom_call.1} parent=0 // loop_footer
    %s17 = sadd.s32 1, %s13
  $region7: #{tpu_custom_call.1} parent=0 // loop_footer_branch
    %12 = sbr.rel target = $region3
  $region8: #{tpu_custom_call.1} parent=0 // loop_exit
    _

</llo_original>
